<compile_context>
chip_gen: v5e
topology: v5e:2x2
jax: 0.10.0
libtpu: 0.0.40
codegen_flags: <defaults>
</compile_context>

<pallas_src>
import functools

import jax
import jax.numpy as jnp
from jax import lax
from jax.experimental import pallas as pl
from jax.experimental.pallas import tpu as pltpu

# ---- hyperparameters (match the PyTorch module) -----------------------------
EMB = 100                     # embedding_dimension (true width)
BLOCK_SIZE = 32               # block_size (max sequence length)
NUM_HEAD = 4
HEAD_SIZE = EMB // NUM_HEAD   # 25
HIDDEN = 10 * EMB             # FEEDFORWARD expansion (true width)
LN_EPS = 1e-5                 # nn.LayerNorm default

E_PAD = 128                   # padded embedding width (lane-dense)
HID_PAD = 1024                # padded FFN hidden width


def _layer_norm_padded(x, gamma, beta):
    """LayerNorm over the true EMB lanes of a zero-padded (rows, E_PAD) slab.

    Padded lanes of `x` are exactly zero, so sum(x)/EMB and sum(x*x)/EMB give the true
    mean / E[x^2]; zero-padded gamma/beta force padded output lanes back to zero.
    """
    inv_n = 1.0 / float(EMB)
    mu = jnp.sum(x, axis=-1, keepdims=True) * inv_n
    ex2 = jnp.sum(x * x, axis=-1, keepdims=True) * inv_n
    var = ex2 - mu * mu
    return (x - mu) * lax.rsqrt(var + LN_EPS) * gamma + beta


def blocks_kernel(x_ref,                 # (B*T, E_PAD) f32
                  bias_ref,              # (T, T) f32 causal additive bias
                  ln_g_ref, ln_b_ref,    # (1, E_PAD) each (module reuses one LayerNorm)
                  wqk_ref, wvp_ref,      # (E_PAD, NUM_HEAD*E_PAD) bf16 each
                  bproj_ref,             # (1, E_PAD) f32
                  w1_ref, b1_ref,        # (E_PAD, HID_PAD) bf16, (1, HID_PAD) f32
                  w2_ref, b2_ref,        # (HID_PAD, E_PAD) bf16, (1, E_PAD) f32
                  o_ref,                 # (B*T, E_PAD) f32
                  *, batch, seq):
    x = x_ref[...]                       # (B*T, E_PAD) f32
    gamma = ln_g_ref[...]
    beta = ln_b_ref[...]
    causal = bias_ref[...]               # (T, T) f32

    # ---- attention branch:  x = x + MULTIHEAD(LN(x)) ----
    xn = _layer_norm_padded(x, gamma, beta)
    xn_bf = xn.astype(jnp.bfloat16)

    # Two wide fused projections for all heads at once (MXU, bf16 in / f32 acc).
    qk_all = jnp.dot(xn_bf, wqk_ref[...],
                     preferred_element_type=jnp.float32).astype(jnp.bfloat16)
    vp_all = jnp.dot(xn_bf, wvp_ref[...],
                     preferred_element_type=jnp.float32).astype(jnp.bfloat16)

    attn_rows = []
    for b in range(batch):
        r0 = b * seq
        xn_bT = xn_bf[r0:r0 + seq, :].T                 # (E_PAD, T), one XLU transpose per seq
        acc = jnp.zeros((seq, E_PAD), jnp.float32)
        for h in range(NUM_HEAD):
            c0 = h * E_PAD
            s1 = qk_all[r0:r0 + seq, c0:c0 + E_PAD]     # (T, E_PAD) bf16, 128-aligned slice
            scores = jnp.dot(s1, xn_bT, preferred_element_type=jnp.float32)   # (T, T) f32
            scores = scores + causal
            scores = scores - jnp.max(scores, axis=-1, keepdims=True)
            p = jnp.exp(scores)
            p = p * pl.reciprocal(jnp.sum(p, axis=-1, keepdims=True), approx=True)
            vp = vp_all[r0:r0 + seq, c0:c0 + E_PAD]     # (T, E_PAD) bf16
            acc = acc + jnp.dot(p.astype(jnp.bfloat16), vp,
                                preferred_element_type=jnp.float32)
        attn_rows.append(acc)
    attn = attn_rows[0] if batch == 1 else jnp.concatenate(attn_rows, axis=0)
    x = x + attn + bproj_ref[...]        # proj bias added once (zero in padded lanes)

    # ---- feed-forward branch:  x = x + FFN(LN(x))  (same LayerNorm params) ----
    xn = _layer_norm_padded(x, gamma, beta)
    h1 = jnp.dot(xn.astype(jnp.bfloat16), w1_ref[...],
                 preferred_element_type=jnp.float32) + b1_ref[...]
    h1 = jnp.maximum(h1, 0.0)
    ff = jnp.dot(h1.astype(jnp.bfloat16), w2_ref[...],
                 preferred_element_type=jnp.float32) + b2_ref[...]
    x = x + ff

    o_ref[...] = x.astype(o_ref.dtype)


def blocks_forward(x, kp):
    """Pallas equivalent of BLOCKS.forward(x).  x: (B, T, EMB) f32."""
    B, T, E = x.shape
    assert E == EMB

    # Zero-pad features to 128 lanes and fold batch into a single (B*T, 128) slab.
    xp = jnp.pad(x, ((0, 0), (0, 0), (0, E_PAD - E))).reshape(B * T, E_PAD)

    # Causal additive bias (finite large negative so the f32 softmax path is safe).
    row = lax.broadcasted_iota(jnp.int32, (T, T), 0)
    col = lax.broadcasted_iota(jnp.int32, (T, T), 1)
    causal = jnp.where(row >= col, 0.0, -1e30).astype(jnp.float32)

    def full(shape):
        n = len(shape)
        return pl.BlockSpec(shape, lambda i, _n=n: (0,) * _n)

    in_specs = [
        full((B * T, E_PAD)),                  # x (whole folded batch, one step)
        full((T, T)),                          # causal bias
        full((1, E_PAD)), full((1, E_PAD)),    # ln gamma / beta
        full((E_PAD, NUM_HEAD * E_PAD)),       # Wqk_all (bf16, scale folded in)
        full((E_PAD, NUM_HEAD * E_PAD)),       # Wvp_all (bf16)
        full((1, E_PAD)),                      # proj bias
        full((E_PAD, HID_PAD)), full((1, HID_PAD)),   # FFN w1 (bf16), b1
        full((HID_PAD, E_PAD)), full((1, E_PAD)),     # FFN w2 (bf16), b2
    ]

    out = pl.pallas_call(
        functools.partial(blocks_kernel, batch=B, seq=T),
        out_shape=jax.ShapeDtypeStruct((B * T, E_PAD), jnp.float32),
        grid=(1,),
        in_specs=in_specs,
        out_specs=full((B * T, E_PAD)),
        compiler_params=pltpu.CompilerParams(
            dimension_semantics=("arbitrary",),
            vmem_limit_bytes=32 * 1024 * 1024),
    )(xp, causal, kp['ln_g'], kp['ln_b'], kp['wqk'], kp['wvp'], kp['bproj'],
      kp['w1'], kp['b1'], kp['w2'], kp['b2'])

    return out.reshape(B, T, E_PAD)[:, :, :EMB]


# ---- parameters (math convention: y = x @ W + b) -----------------------------
def init_params(key):
    ks = jax.random.split(key, 10)
    w = lambda k, shape: (0.02 * jax.random.normal(k, shape)).astype(jnp.float32)
    return {
        'ln_g':  (1.0 + 0.1 * jax.random.normal(ks[0], (EMB,))).astype(jnp.float32),
        'ln_b':  (0.1 * jax.random.normal(ks[1], (EMB,))).astype(jnp.float32),
        'wq':    w(ks[2], (NUM_HEAD, EMB, HEAD_SIZE)),
        'wk':    w(ks[3], (NUM_HEAD, EMB, HEAD_SIZE)),
        'wv':    w(ks[4], (NUM_HEAD, EMB, HEAD_SIZE)),
        'wproj': w(ks[5], (EMB, EMB)),
        'bproj': w(ks[6], (EMB,)),
        'w1':    w(ks[7], (EMB, HIDDEN)),
        'b1':    w(ks[8], (HIDDEN,)),
        'w2':    w(ks[9], (HIDDEN, EMB)),
        'b2':    jnp.zeros((EMB,), jnp.float32),
    }


def prepare_kernel_params(p):
    """Fuse per-head weights, zero-pad to lane-dense widths, concat heads along lanes."""
    hp = jax.lax.Precision.HIGHEST
    scale = float(EMB) ** -0.5                      # C**(-0.5), C = embedding dim (true)
    # Wqk_h = Wq_h @ Wk_h^T * scale ; Wvp_h = Wv_h @ Wproj[h*HS:(h+1)*HS]
    wqk = jnp.einsum('hed,hfd->hef', p['wq'], p['wk'], precision=hp) * scale   # (H,E,E)
    wproj_h = p['wproj'].reshape(NUM_HEAD, HEAD_SIZE, EMB)
    wvp = jnp.einsum('hed,hdf->hef', p['wv'], wproj_h, precision=hp)           # (H,E,E)

    def pad2(a, rows, cols):
        return jnp.pad(a, ((0, rows - a.shape[0]), (0, cols - a.shape[1])))

    def pad1(a, n):
        return jnp.pad(a, (0, n - a.shape[0]))

    wqk_all = jnp.concatenate([pad2(wqk[h], E_PAD, E_PAD) for h in range(NUM_HEAD)], axis=1)
    wvp_all = jnp.concatenate([pad2(wvp[h], E_PAD, E_PAD) for h in range(NUM_HEAD)], axis=1)

    return {
        'ln_g': pad1(p['ln_g'], E_PAD).reshape(1, E_PAD).astype(jnp.float32),
        'ln_b': pad1(p['ln_b'], E_PAD).reshape(1, E_PAD).astype(jnp.float32),
        'wqk': wqk_all.astype(jnp.bfloat16),
        'wvp': wvp_all.astype(jnp.bfloat16),
        'bproj': pad1(p['bproj'], E_PAD).reshape(1, E_PAD).astype(jnp.float32),
        'w1': pad2(p['w1'], E_PAD, HID_PAD).astype(jnp.bfloat16),
        'b1': pad1(p['b1'], HID_PAD).reshape(1, HID_PAD).astype(jnp.float32),
        'w2': pad2(p['w2'], HID_PAD, E_PAD).astype(jnp.bfloat16),
        'b2': pad1(p['b2'], E_PAD).reshape(1, E_PAD).astype(jnp.float32),
    }


# ---- pure-JAX reference (mirrors the PyTorch module exactly) ------------------
def blocks_reference(x, p):
    def ln(z):
        mu = z.mean(-1, keepdims=True)
        var = ((z - mu) ** 2).mean(-1, keepdims=True)
        return (z - mu) / jnp.sqrt(var + LN_EPS) * p['ln_g'] + p['ln_b']

    B, T, C = x.shape
    mask = jnp.tril(jnp.ones((T, T), bool))
    xn = ln(x)
    heads = []
    for h in range(NUM_HEAD):
        q = xn @ p['wq'][h]
        k = xn @ p['wk'][h]
        v = xn @ p['wv'][h]
        wei = jnp.einsum('btd,bsd->bts', q, k) * (C ** -0.5)
        wei = jnp.where(mask, wei, -jnp.inf)
        wei = jax.nn.softmax(wei, axis=-1)
        heads.append(jnp.einsum('bts,bsd->btd', wei, v))
    cat = jnp.concatenate(heads, axis=-1)
    x = x + cat @ p['wproj'] + p['bproj']
    xn = ln(x)
    h1 = jnp.maximum(xn @ p['w1'] + p['b1'], 0.0)
    x = x + h1 @ p['w2'] + p['b2']
    return x


if __name__ == "__main__":
    key = jax.random.PRNGKey(0)
    pkey, xkey = jax.random.split(key)
    params = init_params(pkey)
    kparams = prepare_kernel_params(params)

    B, T = 2, BLOCK_SIZE                          # (2, 32, 100) input
    x = jax.random.normal(xkey, (B, T, EMB), jnp.float32)

    out = jax.jit(blocks_forward)(x, kparams)
    out = jax.block_until_ready(out)
    assert out.shape == (B, T, EMB)

    ref = blocks_reference(x, params)
    err = float(jnp.max(jnp.abs(out - ref)))
    assert bool(jnp.all(jnp.isfinite(out))) and err < 5e-2, f"max abs err {err}"
    print("KERNEL_OK")
</pallas_src>

<mosaic_0001>
module attributes {stable_mosaic.version = 11 : i64} {
  func.func @blocks_kernel(%arg0: i32, %arg1: memref<64x128xf32, #tpu.memory_space<vmem>>, %arg2: memref<32x32xf32, #tpu.memory_space<vmem>>, %arg3: memref<1x128xf32, #tpu.memory_space<vmem>>, %arg4: memref<1x128xf32, #tpu.memory_space<vmem>>, %arg5: memref<128x512xbf16, #tpu.memory_space<vmem>>, %arg6: memref<128x512xbf16, #tpu.memory_space<vmem>>, %arg7: memref<1x128xf32, #tpu.memory_space<vmem>>, %arg8: memref<128x1024xbf16, #tpu.memory_space<vmem>>, %arg9: memref<1x1024xf32, #tpu.memory_space<vmem>>, %arg10: memref<1024x128xbf16, #tpu.memory_space<vmem>>, %arg11: memref<1x128xf32, #tpu.memory_space<vmem>>, %arg12: memref<64x128xf32, #tpu.memory_space<vmem>>) attributes {dimension_semantics = [#tpu.dimension_semantics<arbitrary>], iteration_bounds = array<i64: 1>, scalar_prefetch = 0 : i64, scratch_operands = 0 : i64, tpu.core_type = #tpu.core_type<tc>, window_params = [{pipeline_mode = #tpu.pipeline_mode<synchronous>, transform_indices = @transform_0, window_bounds = array<i64: 64, 128>}, {pipeline_mode = #tpu.pipeline_mode<synchronous>, transform_indices = @transform_1, window_bounds = array<i64: 32, 32>}, {pipeline_mode = #tpu.pipeline_mode<synchronous>, transform_indices = @transform_2, window_bounds = array<i64: 1, 128>}, {pipeline_mode = #tpu.pipeline_mode<synchronous>, transform_indices = @transform_3, window_bounds = array<i64: 1, 128>}, {pipeline_mode = #tpu.pipeline_mode<synchronous>, transform_indices = @transform_4, window_bounds = array<i64: 128, 512>}, {pipeline_mode = #tpu.pipeline_mode<synchronous>, transform_indices = @transform_5, window_bounds = array<i64: 128, 512>}, {pipeline_mode = #tpu.pipeline_mode<synchronous>, transform_indices = @transform_6, window_bounds = array<i64: 1, 128>}, {pipeline_mode = #tpu.pipeline_mode<synchronous>, transform_indices = @transform_7, window_bounds = array<i64: 128, 1024>}, {pipeline_mode = #tpu.pipeline_mode<synchronous>, transform_indices = @transform_8, window_bounds = array<i64: 1, 1024>}, {pipeline_mode = #tpu.pipeline_mode<synchronous>, transform_indices = @transform_9, window_bounds = array<i64: 1024, 128>}, {pipeline_mode = #tpu.pipeline_mode<synchronous>, transform_indices = @transform_10, window_bounds = array<i64: 1, 128>}, {pipeline_mode = #tpu.pipeline_mode<synchronous>, transform_indices = @transform_11, window_bounds = array<i64: 64, 128>}]} {
    %c0 = arith.constant 0 : index
    %c0_0 = arith.constant 0 : index
    %0 = vector.load %arg1[%c0, %c0_0] : memref<64x128xf32, #tpu.memory_space<vmem>>, vector<64x128xf32>
    %c0_1 = arith.constant 0 : index
    %c0_2 = arith.constant 0 : index
    %1 = vector.load %arg3[%c0_1, %c0_2] : memref<1x128xf32, #tpu.memory_space<vmem>>, vector<1x128xf32>
    %c0_3 = arith.constant 0 : index
    %c0_4 = arith.constant 0 : index
    %2 = vector.load %arg4[%c0_3, %c0_4] : memref<1x128xf32, #tpu.memory_space<vmem>>, vector<1x128xf32>
    %c0_5 = arith.constant 0 : index
    %c0_6 = arith.constant 0 : index
    %3 = vector.load %arg2[%c0_5, %c0_6] : memref<32x32xf32, #tpu.memory_space<vmem>>, vector<32x32xf32>
    %cst = arith.constant dense<0.000000e+00> : vector<64xf32>
    %4 = vector.multi_reduction <add>, %0, %cst [1] : vector<64x128xf32> to vector<64xf32>
    %5 = vector.shape_cast %4 : vector<64xf32> to vector<64x1xf32>
    %cst_7 = arith.constant 0.00999999977 : f32
    %6 = vector.broadcast %cst_7 : f32 to vector<64x1xf32>
    %7 = arith.mulf %5, %6 : vector<64x1xf32>
    %8 = arith.mulf %0, %0 : vector<64x128xf32>
    %cst_8 = arith.constant dense<0.000000e+00> : vector<64xf32>
    %9 = vector.multi_reduction <add>, %8, %cst_8 [1] : vector<64x128xf32> to vector<64xf32>
    %10 = vector.shape_cast %9 : vector<64xf32> to vector<64x1xf32>
    %cst_9 = arith.constant 0.00999999977 : f32
    %11 = vector.broadcast %cst_9 : f32 to vector<64x1xf32>
    %12 = arith.mulf %10, %11 : vector<64x1xf32>
    %13 = arith.mulf %7, %7 : vector<64x1xf32>
    %14 = arith.subf %12, %13 : vector<64x1xf32>
    %15 = vector.broadcast %7 : vector<64x1xf32> to vector<64x128xf32>
    %16 = arith.subf %0, %15 : vector<64x128xf32>
    %cst_10 = arith.constant 9.99999974E-6 : f32
    %17 = vector.broadcast %cst_10 : f32 to vector<64x1xf32>
    %18 = arith.addf %14, %17 : vector<64x1xf32>
    %19 = math.rsqrt %18 : vector<64x1xf32>
    %20 = vector.broadcast %19 : vector<64x1xf32> to vector<64x128xf32>
    %21 = arith.mulf %16, %20 : vector<64x128xf32>
    %22 = vector.broadcast %1 : vector<1x128xf32> to vector<64x128xf32>
    %23 = arith.mulf %21, %22 : vector<64x128xf32>
    %24 = vector.broadcast %2 : vector<1x128xf32> to vector<64x128xf32>
    %25 = arith.addf %23, %24 : vector<64x128xf32>
    %26 = arith.truncf %25 : vector<64x128xf32> to vector<64x128xbf16>
    %c0_11 = arith.constant 0 : index
    %c0_12 = arith.constant 0 : index
    %27 = vector.load %arg5[%c0_11, %c0_12] : memref<128x512xbf16, #tpu.memory_space<vmem>>, vector<128x512xbf16>
    %cst_13 = arith.constant dense<0.000000e+00> : vector<64x512xf32>
    %28 = tpu.matmul %26, %27, %cst_13 {dimension_numbers = #tpu.dot_dimension_numbers<[1], [0], [0], [1], [0, 0, 1, 1], [], []>} : vector<64x128xbf16>, vector<128x512xbf16>, vector<64x512xf32> -> vector<64x512xf32>
    %29 = arith.truncf %28 : vector<64x512xf32> to vector<64x512xbf16>
    %c0_14 = arith.constant 0 : index
    %c0_15 = arith.constant 0 : index
    %30 = vector.load %arg6[%c0_14, %c0_15] : memref<128x512xbf16, #tpu.memory_space<vmem>>, vector<128x512xbf16>
    %cst_16 = arith.constant dense<0.000000e+00> : vector<64x512xf32>
    %31 = tpu.matmul %26, %30, %cst_16 {dimension_numbers = #tpu.dot_dimension_numbers<[1], [0], [0], [1], [0, 0, 1, 1], [], []>} : vector<64x128xbf16>, vector<128x512xbf16>, vector<64x512xf32> -> vector<64x512xf32>
    %32 = arith.truncf %31 : vector<64x512xf32> to vector<64x512xbf16>
    %33 = vector.extract_strided_slice %26 {offsets = [0, 0], sizes = [32, 128], strides = [1, 1]} : vector<64x128xbf16> to vector<32x128xbf16>
    %34 = tpu.transpose %33, [1, 0] : vector<32x128xbf16> -> vector<128x32xbf16>
    %cst_17 = arith.constant 0.000000e+00 : f32
    %35 = vector.broadcast %cst_17 : f32 to vector<32x128xf32>
    %36 = vector.extract_strided_slice %29 {offsets = [0, 0], sizes = [32, 128], strides = [1, 1]} : vector<64x512xbf16> to vector<32x128xbf16>
    %cst_18 = arith.constant dense<0.000000e+00> : vector<32x32xf32>
    %37 = tpu.matmul %36, %34, %cst_18 {dimension_numbers = #tpu.dot_dimension_numbers<[1], [0], [0], [1], [0, 0, 1, 1], [], []>} : vector<32x128xbf16>, vector<128x32xbf16>, vector<32x32xf32> -> vector<32x32xf32>
    %38 = arith.addf %37, %3 : vector<32x32xf32>
    %cst_19 = arith.constant dense<0xFF800000> : vector<32xf32>
    %39 = vector.multi_reduction <maximumf>, %38, %cst_19 [1] : vector<32x32xf32> to vector<32xf32>
    %40 = vector.shape_cast %39 : vector<32xf32> to vector<32x1xf32>
    %41 = vector.broadcast %40 : vector<32x1xf32> to vector<32x32xf32>
    %42 = arith.subf %38, %41 : vector<32x32xf32>
    %43 = math.exp %42 : vector<32x32xf32>
    %cst_20 = arith.constant dense<0.000000e+00> : vector<32xf32>
    %44 = vector.multi_reduction <add>, %43, %cst_20 [1] : vector<32x32xf32> to vector<32xf32>
    %45 = vector.shape_cast %44 : vector<32xf32> to vector<32x1xf32>
    %46 = tpu.reciprocal %45 {approx = true} : vector<32x1xf32> -> vector<32x1xf32>
    %47 = vector.broadcast %46 : vector<32x1xf32> to vector<32x32xf32>
    %48 = arith.mulf %43, %47 : vector<32x32xf32>
    %49 = vector.extract_strided_slice %32 {offsets = [0, 0], sizes = [32, 128], strides = [1, 1]} : vector<64x512xbf16> to vector<32x128xbf16>
    %50 = arith.truncf %48 : vector<32x32xf32> to vector<32x32xbf16>
    %cst_21 = arith.constant dense<0.000000e+00> : vector<32x128xf32>
    %51 = tpu.matmul %50, %49, %cst_21 {dimension_numbers = #tpu.dot_dimension_numbers<[1], [0], [0], [1], [0, 0, 1, 1], [], []>} : vector<32x32xbf16>, vector<32x128xbf16>, vector<32x128xf32> -> vector<32x128xf32>
    %52 = arith.addf %35, %51 : vector<32x128xf32>
    %53 = vector.extract_strided_slice %29 {offsets = [0, 128], sizes = [32, 128], strides = [1, 1]} : vector<64x512xbf16> to vector<32x128xbf16>
    %cst_22 = arith.constant dense<0.000000e+00> : vector<32x32xf32>
    %54 = tpu.matmul %53, %34, %cst_22 {dimension_numbers = #tpu.dot_dimension_numbers<[1], [0], [0], [1], [0, 0, 1, 1], [], []>} : vector<32x128xbf16>, vector<128x32xbf16>, vector<32x32xf32> -> vector<32x32xf32>
    %55 = arith.addf %54, %3 : vector<32x32xf32>
    %cst_23 = arith.constant dense<0xFF800000> : vector<32xf32>
    %56 = vector.multi_reduction <maximumf>, %55, %cst_23 [1] : vector<32x32xf32> to vector<32xf32>
    %57 = vector.shape_cast %56 : vector<32xf32> to vector<32x1xf32>
    %58 = vector.broadcast %57 : vector<32x1xf32> to vector<32x32xf32>
    %59 = arith.subf %55, %58 : vector<32x32xf32>
    %60 = math.exp %59 : vector<32x32xf32>
    %cst_24 = arith.constant dense<0.000000e+00> : vector<32xf32>
    %61 = vector.multi_reduction <add>, %60, %cst_24 [1] : vector<32x32xf32> to vector<32xf32>
    %62 = vector.shape_cast %61 : vector<32xf32> to vector<32x1xf32>
    %63 = tpu.reciprocal %62 {approx = true} : vector<32x1xf32> -> vector<32x1xf32>
    %64 = vector.broadcast %63 : vector<32x1xf32> to vector<32x32xf32>
    %65 = arith.mulf %60, %64 : vector<32x32xf32>
    %66 = vector.extract_strided_slice %32 {offsets = [0, 128], sizes = [32, 128], strides = [1, 1]} : vector<64x512xbf16> to vector<32x128xbf16>
    %67 = arith.truncf %65 : vector<32x32xf32> to vector<32x32xbf16>
    %cst_25 = arith.constant dense<0.000000e+00> : vector<32x128xf32>
    %68 = tpu.matmul %67, %66, %cst_25 {dimension_numbers = #tpu.dot_dimension_numbers<[1], [0], [0], [1], [0, 0, 1, 1], [], []>} : vector<32x32xbf16>, vector<32x128xbf16>, vector<32x128xf32> -> vector<32x128xf32>
    %69 = arith.addf %52, %68 : vector<32x128xf32>
    %70 = vector.extract_strided_slice %29 {offsets = [0, 256], sizes = [32, 128], strides = [1, 1]} : vector<64x512xbf16> to vector<32x128xbf16>
    %cst_26 = arith.constant dense<0.000000e+00> : vector<32x32xf32>
    %71 = tpu.matmul %70, %34, %cst_26 {dimension_numbers = #tpu.dot_dimension_numbers<[1], [0], [0], [1], [0, 0, 1, 1], [], []>} : vector<32x128xbf16>, vector<128x32xbf16>, vector<32x32xf32> -> vector<32x32xf32>
    %72 = arith.addf %71, %3 : vector<32x32xf32>
    %cst_27 = arith.constant dense<0xFF800000> : vector<32xf32>
    %73 = vector.multi_reduction <maximumf>, %72, %cst_27 [1] : vector<32x32xf32> to vector<32xf32>
    %74 = vector.shape_cast %73 : vector<32xf32> to vector<32x1xf32>
    %75 = vector.broadcast %74 : vector<32x1xf32> to vector<32x32xf32>
    %76 = arith.subf %72, %75 : vector<32x32xf32>
    %77 = math.exp %76 : vector<32x32xf32>
    %cst_28 = arith.constant dense<0.000000e+00> : vector<32xf32>
    %78 = vector.multi_reduction <add>, %77, %cst_28 [1] : vector<32x32xf32> to vector<32xf32>
    %79 = vector.shape_cast %78 : vector<32xf32> to vector<32x1xf32>
    %80 = tpu.reciprocal %79 {approx = true} : vector<32x1xf32> -> vector<32x1xf32>
    %81 = vector.broadcast %80 : vector<32x1xf32> to vector<32x32xf32>
    %82 = arith.mulf %77, %81 : vector<32x32xf32>
    %83 = vector.extract_strided_slice %32 {offsets = [0, 256], sizes = [32, 128], strides = [1, 1]} : vector<64x512xbf16> to vector<32x128xbf16>
    %84 = arith.truncf %82 : vector<32x32xf32> to vector<32x32xbf16>
    %cst_29 = arith.constant dense<0.000000e+00> : vector<32x128xf32>
    %85 = tpu.matmul %84, %83, %cst_29 {dimension_numbers = #tpu.dot_dimension_numbers<[1], [0], [0], [1], [0, 0, 1, 1], [], []>} : vector<32x32xbf16>, vector<32x128xbf16>, vector<32x128xf32> -> vector<32x128xf32>
    %86 = arith.addf %69, %85 : vector<32x128xf32>
    %87 = vector.extract_strided_slice %29 {offsets = [0, 384], sizes = [32, 128], strides = [1, 1]} : vector<64x512xbf16> to vector<32x128xbf16>
    %cst_30 = arith.constant dense<0.000000e+00> : vector<32x32xf32>
    %88 = tpu.matmul %87, %34, %cst_30 {dimension_numbers = #tpu.dot_dimension_numbers<[1], [0], [0], [1], [0, 0, 1, 1], [], []>} : vector<32x128xbf16>, vector<128x32xbf16>, vector<32x32xf32> -> vector<32x32xf32>
    %89 = arith.addf %88, %3 : vector<32x32xf32>
    %cst_31 = arith.constant dense<0xFF800000> : vector<32xf32>
    %90 = vector.multi_reduction <maximumf>, %89, %cst_31 [1] : vector<32x32xf32> to vector<32xf32>
    %91 = vector.shape_cast %90 : vector<32xf32> to vector<32x1xf32>
    %92 = vector.broadcast %91 : vector<32x1xf32> to vector<32x32xf32>
    %93 = arith.subf %89, %92 : vector<32x32xf32>
    %94 = math.exp %93 : vector<32x32xf32>
    %cst_32 = arith.constant dense<0.000000e+00> : vector<32xf32>
    %95 = vector.multi_reduction <add>, %94, %cst_32 [1] : vector<32x32xf32> to vector<32xf32>
    %96 = vector.shape_cast %95 : vector<32xf32> to vector<32x1xf32>
    %97 = tpu.reciprocal %96 {approx = true} : vector<32x1xf32> -> vector<32x1xf32>
    %98 = vector.broadcast %97 : vector<32x1xf32> to vector<32x32xf32>
    %99 = arith.mulf %94, %98 : vector<32x32xf32>
    %100 = vector.extract_strided_slice %32 {offsets = [0, 384], sizes = [32, 128], strides = [1, 1]} : vector<64x512xbf16> to vector<32x128xbf16>
    %101 = arith.truncf %99 : vector<32x32xf32> to vector<32x32xbf16>
    %cst_33 = arith.constant dense<0.000000e+00> : vector<32x128xf32>
    %102 = tpu.matmul %101, %100, %cst_33 {dimension_numbers = #tpu.dot_dimension_numbers<[1], [0], [0], [1], [0, 0, 1, 1], [], []>} : vector<32x32xbf16>, vector<32x128xbf16>, vector<32x128xf32> -> vector<32x128xf32>
    %103 = arith.addf %86, %102 : vector<32x128xf32>
    %104 = vector.extract_strided_slice %26 {offsets = [32, 0], sizes = [32, 128], strides = [1, 1]} : vector<64x128xbf16> to vector<32x128xbf16>
    %105 = tpu.transpose %104, [1, 0] : vector<32x128xbf16> -> vector<128x32xbf16>
    %cst_34 = arith.constant 0.000000e+00 : f32
    %106 = vector.broadcast %cst_34 : f32 to vector<32x128xf32>
    %107 = vector.extract_strided_slice %29 {offsets = [32, 0], sizes = [32, 128], strides = [1, 1]} : vector<64x512xbf16> to vector<32x128xbf16>
    %cst_35 = arith.constant dense<0.000000e+00> : vector<32x32xf32>
    %108 = tpu.matmul %107, %105, %cst_35 {dimension_numbers = #tpu.dot_dimension_numbers<[1], [0], [0], [1], [0, 0, 1, 1], [], []>} : vector<32x128xbf16>, vector<128x32xbf16>, vector<32x32xf32> -> vector<32x32xf32>
    %109 = arith.addf %108, %3 : vector<32x32xf32>
    %cst_36 = arith.constant dense<0xFF800000> : vector<32xf32>
    %110 = vector.multi_reduction <maximumf>, %109, %cst_36 [1] : vector<32x32xf32> to vector<32xf32>
    %111 = vector.shape_cast %110 : vector<32xf32> to vector<32x1xf32>
    %112 = vector.broadcast %111 : vector<32x1xf32> to vector<32x32xf32>
    %113 = arith.subf %109, %112 : vector<32x32xf32>
    %114 = math.exp %113 : vector<32x32xf32>
    %cst_37 = arith.constant dense<0.000000e+00> : vector<32xf32>
    %115 = vector.multi_reduction <add>, %114, %cst_37 [1] : vector<32x32xf32> to vector<32xf32>
    %116 = vector.shape_cast %115 : vector<32xf32> to vector<32x1xf32>
    %117 = tpu.reciprocal %116 {approx = true} : vector<32x1xf32> -> vector<32x1xf32>
    %118 = vector.broadcast %117 : vector<32x1xf32> to vector<32x32xf32>
    %119 = arith.mulf %114, %118 : vector<32x32xf32>
    %120 = vector.extract_strided_slice %32 {offsets = [32, 0], sizes = [32, 128], strides = [1, 1]} : vector<64x512xbf16> to vector<32x128xbf16>
    %121 = arith.truncf %119 : vector<32x32xf32> to vector<32x32xbf16>
    %cst_38 = arith.constant dense<0.000000e+00> : vector<32x128xf32>
    %122 = tpu.matmul %121, %120, %cst_38 {dimension_numbers = #tpu.dot_dimension_numbers<[1], [0], [0], [1], [0, 0, 1, 1], [], []>} : vector<32x32xbf16>, vector<32x128xbf16>, vector<32x128xf32> -> vector<32x128xf32>
    %123 = arith.addf %106, %122 : vector<32x128xf32>
    %124 = vector.extract_strided_slice %29 {offsets = [32, 128], sizes = [32, 128], strides = [1, 1]} : vector<64x512xbf16> to vector<32x128xbf16>
    %cst_39 = arith.constant dense<0.000000e+00> : vector<32x32xf32>
    %125 = tpu.matmul %124, %105, %cst_39 {dimension_numbers = #tpu.dot_dimension_numbers<[1], [0], [0], [1], [0, 0, 1, 1], [], []>} : vector<32x128xbf16>, vector<128x32xbf16>, vector<32x32xf32> -> vector<32x32xf32>
    %126 = arith.addf %125, %3 : vector<32x32xf32>
    %cst_40 = arith.constant dense<0xFF800000> : vector<32xf32>
    %127 = vector.multi_reduction <maximumf>, %126, %cst_40 [1] : vector<32x32xf32> to vector<32xf32>
    %128 = vector.shape_cast %127 : vector<32xf32> to vector<32x1xf32>
    %129 = vector.broadcast %128 : vector<32x1xf32> to vector<32x32xf32>
    %130 = arith.subf %126, %129 : vector<32x32xf32>
    %131 = math.exp %130 : vector<32x32xf32>
    %cst_41 = arith.constant dense<0.000000e+00> : vector<32xf32>
    %132 = vector.multi_reduction <add>, %131, %cst_41 [1] : vector<32x32xf32> to vector<32xf32>
    %133 = vector.shape_cast %132 : vector<32xf32> to vector<32x1xf32>
    %134 = tpu.reciprocal %133 {approx = true} : vector<32x1xf32> -> vector<32x1xf32>
    %135 = vector.broadcast %134 : vector<32x1xf32> to vector<32x32xf32>
    %136 = arith.mulf %131, %135 : vector<32x32xf32>
    %137 = vector.extract_strided_slice %32 {offsets = [32, 128], sizes = [32, 128], strides = [1, 1]} : vector<64x512xbf16> to vector<32x128xbf16>
    %138 = arith.truncf %136 : vector<32x32xf32> to vector<32x32xbf16>
    %cst_42 = arith.constant dense<0.000000e+00> : vector<32x128xf32>
    %139 = tpu.matmul %138, %137, %cst_42 {dimension_numbers = #tpu.dot_dimension_numbers<[1], [0], [0], [1], [0, 0, 1, 1], [], []>} : vector<32x32xbf16>, vector<32x128xbf16>, vector<32x128xf32> -> vector<32x128xf32>
    %140 = arith.addf %123, %139 : vector<32x128xf32>
    %141 = vector.extract_strided_slice %29 {offsets = [32, 256], sizes = [32, 128], strides = [1, 1]} : vector<64x512xbf16> to vector<32x128xbf16>
    %cst_43 = arith.constant dense<0.000000e+00> : vector<32x32xf32>
    %142 = tpu.matmul %141, %105, %cst_43 {dimension_numbers = #tpu.dot_dimension_numbers<[1], [0], [0], [1], [0, 0, 1, 1], [], []>} : vector<32x128xbf16>, vector<128x32xbf16>, vector<32x32xf32> -> vector<32x32xf32>
    %143 = arith.addf %142, %3 : vector<32x32xf32>
    %cst_44 = arith.constant dense<0xFF800000> : vector<32xf32>
    %144 = vector.multi_reduction <maximumf>, %143, %cst_44 [1] : vector<32x32xf32> to vector<32xf32>
    %145 = vector.shape_cast %144 : vector<32xf32> to vector<32x1xf32>
    %146 = vector.broadcast %145 : vector<32x1xf32> to vector<32x32xf32>
    %147 = arith.subf %143, %146 : vector<32x32xf32>
    %148 = math.exp %147 : vector<32x32xf32>
    %cst_45 = arith.constant dense<0.000000e+00> : vector<32xf32>
    %149 = vector.multi_reduction <add>, %148, %cst_45 [1] : vector<32x32xf32> to vector<32xf32>
    %150 = vector.shape_cast %149 : vector<32xf32> to vector<32x1xf32>
    %151 = tpu.reciprocal %150 {approx = true} : vector<32x1xf32> -> vector<32x1xf32>
    %152 = vector.broadcast %151 : vector<32x1xf32> to vector<32x32xf32>
    %153 = arith.mulf %148, %152 : vector<32x32xf32>
    %154 = vector.extract_strided_slice %32 {offsets = [32, 256], sizes = [32, 128], strides = [1, 1]} : vector<64x512xbf16> to vector<32x128xbf16>
    %155 = arith.truncf %153 : vector<32x32xf32> to vector<32x32xbf16>
    %cst_46 = arith.constant dense<0.000000e+00> : vector<32x128xf32>
    %156 = tpu.matmul %155, %154, %cst_46 {dimension_numbers = #tpu.dot_dimension_numbers<[1], [0], [0], [1], [0, 0, 1, 1], [], []>} : vector<32x32xbf16>, vector<32x128xbf16>, vector<32x128xf32> -> vector<32x128xf32>
    %157 = arith.addf %140, %156 : vector<32x128xf32>
    %158 = vector.extract_strided_slice %29 {offsets = [32, 384], sizes = [32, 128], strides = [1, 1]} : vector<64x512xbf16> to vector<32x128xbf16>
    %cst_47 = arith.constant dense<0.000000e+00> : vector<32x32xf32>
    %159 = tpu.matmul %158, %105, %cst_47 {dimension_numbers = #tpu.dot_dimension_numbers<[1], [0], [0], [1], [0, 0, 1, 1], [], []>} : vector<32x128xbf16>, vector<128x32xbf16>, vector<32x32xf32> -> vector<32x32xf32>
    %160 = arith.addf %159, %3 : vector<32x32xf32>
    %cst_48 = arith.constant dense<0xFF800000> : vector<32xf32>
    %161 = vector.multi_reduction <maximumf>, %160, %cst_48 [1] : vector<32x32xf32> to vector<32xf32>
    %162 = vector.shape_cast %161 : vector<32xf32> to vector<32x1xf32>
    %163 = vector.broadcast %162 : vector<32x1xf32> to vector<32x32xf32>
    %164 = arith.subf %160, %163 : vector<32x32xf32>
    %165 = math.exp %164 : vector<32x32xf32>
    %cst_49 = arith.constant dense<0.000000e+00> : vector<32xf32>
    %166 = vector.multi_reduction <add>, %165, %cst_49 [1] : vector<32x32xf32> to vector<32xf32>
    %167 = vector.shape_cast %166 : vector<32xf32> to vector<32x1xf32>
    %168 = tpu.reciprocal %167 {approx = true} : vector<32x1xf32> -> vector<32x1xf32>
    %169 = vector.broadcast %168 : vector<32x1xf32> to vector<32x32xf32>
    %170 = arith.mulf %165, %169 : vector<32x32xf32>
    %171 = vector.extract_strided_slice %32 {offsets = [32, 384], sizes = [32, 128], strides = [1, 1]} : vector<64x512xbf16> to vector<32x128xbf16>
    %172 = arith.truncf %170 : vector<32x32xf32> to vector<32x32xbf16>
    %cst_50 = arith.constant dense<0.000000e+00> : vector<32x128xf32>
    %173 = tpu.matmul %172, %171, %cst_50 {dimension_numbers = #tpu.dot_dimension_numbers<[1], [0], [0], [1], [0, 0, 1, 1], [], []>} : vector<32x32xbf16>, vector<32x128xbf16>, vector<32x128xf32> -> vector<32x128xf32>
    %174 = arith.addf %157, %173 : vector<32x128xf32>
    %175 = tpu.concatenate %103, %174 in 0 : vector<32x128xf32>, vector<32x128xf32> -> vector<64x128xf32>
    %176 = arith.addf %0, %175 : vector<64x128xf32>
    %c0_51 = arith.constant 0 : index
    %c0_52 = arith.constant 0 : index
    %177 = vector.load %arg7[%c0_51, %c0_52] : memref<1x128xf32, #tpu.memory_space<vmem>>, vector<1x128xf32>
    %178 = vector.broadcast %177 : vector<1x128xf32> to vector<64x128xf32>
    %179 = arith.addf %176, %178 : vector<64x128xf32>
    %cst_53 = arith.constant dense<0.000000e+00> : vector<64xf32>
    %180 = vector.multi_reduction <add>, %179, %cst_53 [1] : vector<64x128xf32> to vector<64xf32>
    %181 = vector.shape_cast %180 : vector<64xf32> to vector<64x1xf32>
    %cst_54 = arith.constant 0.00999999977 : f32
    %182 = vector.broadcast %cst_54 : f32 to vector<64x1xf32>
    %183 = arith.mulf %181, %182 : vector<64x1xf32>
    %184 = arith.mulf %179, %179 : vector<64x128xf32>
    %cst_55 = arith.constant dense<0.000000e+00> : vector<64xf32>
    %185 = vector.multi_reduction <add>, %184, %cst_55 [1] : vector<64x128xf32> to vector<64xf32>
    %186 = vector.shape_cast %185 : vector<64xf32> to vector<64x1xf32>
    %cst_56 = arith.constant 0.00999999977 : f32
    %187 = vector.broadcast %cst_56 : f32 to vector<64x1xf32>
    %188 = arith.mulf %186, %187 : vector<64x1xf32>
    %189 = arith.mulf %183, %183 : vector<64x1xf32>
    %190 = arith.subf %188, %189 : vector<64x1xf32>
    %191 = vector.broadcast %183 : vector<64x1xf32> to vector<64x128xf32>
    %192 = arith.subf %179, %191 : vector<64x128xf32>
    %cst_57 = arith.constant 9.99999974E-6 : f32
    %193 = vector.broadcast %cst_57 : f32 to vector<64x1xf32>
    %194 = arith.addf %190, %193 : vector<64x1xf32>
    %195 = math.rsqrt %194 : vector<64x1xf32>
    %196 = vector.broadcast %195 : vector<64x1xf32> to vector<64x128xf32>
    %197 = arith.mulf %192, %196 : vector<64x128xf32>
    %198 = vector.broadcast %1 : vector<1x128xf32> to vector<64x128xf32>
    %199 = arith.mulf %197, %198 : vector<64x128xf32>
    %200 = vector.broadcast %2 : vector<1x128xf32> to vector<64x128xf32>
    %201 = arith.addf %199, %200 : vector<64x128xf32>
    %202 = arith.truncf %201 : vector<64x128xf32> to vector<64x128xbf16>
    %c0_58 = arith.constant 0 : index
    %c0_59 = arith.constant 0 : index
    %203 = vector.load %arg8[%c0_58, %c0_59] : memref<128x1024xbf16, #tpu.memory_space<vmem>>, vector<128x1024xbf16>
    %cst_60 = arith.constant dense<0.000000e+00> : vector<64x1024xf32>
    %204 = tpu.matmul %202, %203, %cst_60 {dimension_numbers = #tpu.dot_dimension_numbers<[1], [0], [0], [1], [0, 0, 1, 1], [], []>} : vector<64x128xbf16>, vector<128x1024xbf16>, vector<64x1024xf32> -> vector<64x1024xf32>
    %c0_61 = arith.constant 0 : index
    %c0_62 = arith.constant 0 : index
    %205 = vector.load %arg9[%c0_61, %c0_62] : memref<1x1024xf32, #tpu.memory_space<vmem>>, vector<1x1024xf32>
    %206 = vector.broadcast %205 : vector<1x1024xf32> to vector<64x1024xf32>
    %207 = arith.addf %204, %206 : vector<64x1024xf32>
    %cst_63 = arith.constant 0.000000e+00 : f32
    %208 = vector.broadcast %cst_63 : f32 to vector<64x1024xf32>
    %209 = arith.maximumf %207, %208 : vector<64x1024xf32>
    %210 = arith.truncf %209 : vector<64x1024xf32> to vector<64x1024xbf16>
    %c0_64 = arith.constant 0 : index
    %c0_65 = arith.constant 0 : index
    %211 = vector.load %arg10[%c0_64, %c0_65] : memref<1024x128xbf16, #tpu.memory_space<vmem>>, vector<1024x128xbf16>
    %cst_66 = arith.constant dense<0.000000e+00> : vector<64x128xf32>
    %212 = tpu.matmul %210, %211, %cst_66 {dimension_numbers = #tpu.dot_dimension_numbers<[1], [0], [0], [1], [0, 0, 1, 1], [], []>} : vector<64x1024xbf16>, vector<1024x128xbf16>, vector<64x128xf32> -> vector<64x128xf32>
    %c0_67 = arith.constant 0 : index
    %c0_68 = arith.constant 0 : index
    %213 = vector.load %arg11[%c0_67, %c0_68] : memref<1x128xf32, #tpu.memory_space<vmem>>, vector<1x128xf32>
    %214 = vector.broadcast %213 : vector<1x128xf32> to vector<64x128xf32>
    %215 = arith.addf %212, %214 : vector<64x128xf32>
    %216 = arith.addf %179, %215 : vector<64x128xf32>
    %c0_69 = arith.constant 0 : index
    %c0_70 = arith.constant 0 : index
    %217 = vector.load %arg12[%c0_69, %c0_70] : memref<64x128xf32, #tpu.memory_space<vmem>>, vector<64x128xf32>
    tpu.vector_store %arg12[%c0_69, %c0_70], %216 {strides = array<i32>} : memref<64x128xf32, #tpu.memory_space<vmem>>, vector<64x128xf32>,
    return
  }
  func.func @transform_0(%arg0: i32) -> (i32, i32) {
    %c0_i32 = arith.constant 0 : i32
    %c0_i32_0 = arith.constant 0 : i32
    %c0_i32_1 = arith.constant 0 : i32
    return %c0_i32, %c0_i32_0 : i32, i32
  }
  func.func @transform_1(%arg0: i32) -> (i32, i32) {
    %c0_i32 = arith.constant 0 : i32
    %c0_i32_0 = arith.constant 0 : i32
    %c0_i32_1 = arith.constant 0 : i32
    return %c0_i32, %c0_i32_0 : i32, i32
  }
  func.func @transform_2(%arg0: i32) -> (i32, i32) {
    %c0_i32 = arith.constant 0 : i32
    %c0_i32_0 = arith.constant 0 : i32
    %c0_i32_1 = arith.constant 0 : i32
    return %c0_i32, %c0_i32_0 : i32, i32
  }
  func.func @transform_3(%arg0: i32) -> (i32, i32) {
    %c0_i32 = arith.constant 0 : i32
    %c0_i32_0 = arith.constant 0 : i32
    %c0_i32_1 = arith.constant 0 : i32
    return %c0_i32, %c0_i32_0 : i32, i32
  }
  func.func @transform_4(%arg0: i32) -> (i32, i32) {
    %c0_i32 = arith.constant 0 : i32
    %c0_i32_0 = arith.constant 0 : i32
    %c0_i32_1 = arith.constant 0 : i32
    return %c0_i32, %c0_i32_0 : i32, i32
  }
  func.func @transform_5(%arg0: i32) -> (i32, i32) {
    %c0_i32 = arith.constant 0 : i32
    %c0_i32_0 = arith.constant 0 : i32
    %c0_i32_1 = arith.constant 0 : i32
    return %c0_i32, %c0_i32_0 : i32, i32
  }
  func.func @transform_6(%arg0: i32) -> (i32, i32) {
    %c0_i32 = arith.constant 0 : i32
    %c0_i32_0 = arith.constant 0 : i32
    %c0_i32_1 = arith.constant 0 : i32
    return %c0_i32, %c0_i32_0 : i32, i32
  }
  func.func @transform_7(%arg0: i32) -> (i32, i32) {
    %c0_i32 = arith.constant 0 : i32
    %c0_i32_0 = arith.constant 0 : i32
    %c0_i32_1 = arith.constant 0 : i32
    return %c0_i32, %c0_i32_0 : i32, i32
  }
  func.func @transform_8(%arg0: i32) -> (i32, i32) {
    %c0_i32 = arith.constant 0 : i32
    %c0_i32_0 = arith.constant 0 : i32
    %c0_i32_1 = arith.constant 0 : i32
    return %c0_i32, %c0_i32_0 : i32, i32
  }
  func.func @transform_9(%arg0: i32) -> (i32, i32) {
    %c0_i32 = arith.constant 0 : i32
    %c0_i32_0 = arith.constant 0 : i32
    %c0_i32_1 = arith.constant 0 : i32
    return %c0_i32, %c0_i32_0 : i32, i32
  }
  func.func @transform_10(%arg0: i32) -> (i32, i32) {
    %c0_i32 = arith.constant 0 : i32
    %c0_i32_0 = arith.constant 0 : i32
    %c0_i32_1 = arith.constant 0 : i32
    return %c0_i32, %c0_i32_0 : i32, i32
  }
  func.func @transform_11(%arg0: i32) -> (i32, i32) {
    %c0_i32 = arith.constant 0 : i32
    %c0_i32_0 = arith.constant 0 : i32
    %c0_i32_1 = arith.constant 0 : i32
    return %c0_i32, %c0_i32_0 : i32, i32
  }
}

</mosaic_0001>

<llo_original>
// kernel: blocks_forward.1
$region0: #{blocks_forward.1}
  #allocation0 [shape = 'u32[]', space=smem, size = 0x4, offset = 0x4, fixed_abs, tag = 'smem constant byte address 0x4 - core index']
  #allocation1 [shape = 'u32[72,128]{1,0:T(1,128)}', space=vmem, size = 0x9000, scoped, tag = 'internal scratch']
  %s0 = inlined_call_operand.vmem [shape: f32[64,128], index: 0, kind: input, shape index: {}]
  %s1 = inlined_call_operand.vmem [shape: f32[32,32], index: 1, kind: input, shape index: {}]
  %s2 = inlined_call_operand.vmem [shape: f32[1,128], index: 2, kind: input, shape index: {}]
  %s3 = inlined_call_operand.vmem [shape: f32[1,128], index: 3, kind: input, shape index: {}]
  %s4 = inlined_call_operand.hbm [shape: bf16[128,512], index: 4, kind: input, shape index: {}]
  %s5 = inlined_call_operand.hbm [shape: bf16[128,512], index: 5, kind: input, shape index: {}]
  %s6 = inlined_call_operand.vmem [shape: f32[1,128], index: 6, kind: input, shape index: {}]
  %s7 = inlined_call_operand.hbm [shape: bf16[128,1024], index: 7, kind: input, shape index: {}]
  %s8 = inlined_call_operand.vmem [shape: f32[1,1024], index: 8, kind: input, shape index: {}]
  %s9 = inlined_call_operand.hbm [shape: bf16[1024,128], index: 9, kind: input, shape index: {}]
  %s10 = inlined_call_operand.vmem [shape: f32[1,128], index: 10, kind: input, shape index: {}]
  %s11 = inlined_call_operand.hbm [shape: f32[64,128], index: 11, kind: output, shape index: {}]
  %s12 = sld [smem:[#allocation0]]
  $region70: #{blocks_forward.1} parent=0
    _
  %s14 = ssub.s32 1, %s12
  %s15 = scalar_select 0, %s14, %s12
  $region1: #{blocks_forward.1} parent=0
    #allocation2 [shape = 'u8[131072]{0}', space=vmem, size = 0x20000, scoped, tag = 'input window, operand 4, single buffered']
    #allocation3 [shape = 's32[1]{0}', space=sflag, size = 0x4, scoped, tag = 'scoped memory for blocks_forward.1']
    #allocation4 [shape = 's32[1]{0}', space=sflag, size = 0x4, scoped, tag = 'scoped memory for blocks_forward.1']
    #allocation5 [shape = 'u8[131072]{0}', space=vmem, size = 0x20000, scoped, tag = 'input window, operand 5, single buffered']
    #allocation6 [shape = 's32[1]{0}', space=sflag, size = 0x4, scoped, tag = 'scoped memory for blocks_forward.1']
    #allocation7 [shape = 'u8[262144]{0}', space=vmem, size = 0x40000, scoped, tag = 'input window, operand 7, single buffered']
    #allocation8 [shape = 'u8[262144]{0}', space=vmem, size = 0x40000, scoped, tag = 'input window, operand 9, single buffered']
    #allocation9 [shape = 's32[1]{0}', space=sflag, size = 0x4, scoped, tag = 'scoped memory for blocks_forward.1']
    #allocation10 [shape = 'u8[32768]{0}', space=vmem, size = 0x8000, scoped, tag = 'output window, operand 0, single buffered']
    %16 = vsyncpa [#allocation3], 0
    %17 = vsyncpa [#allocation6], 0
    %18 = vsyncpa [#allocation9], 0
    %19 = vsyncpa [#allocation4], 0
    // Predicated region
    $region2: #{blocks_forward.1} parent=1 // pred_check
      _
    $region3: #{blocks_forward.1} parent=1 // pred_check_branch
      %21 = sbr.rel (0) target = $region5
    $region4: #{blocks_forward.1} parent=1 // pred_region
      _
    $region5: #{blocks_forward.1} parent=1 // pred_fallthru
      _
    // Predicated region
    $region6: #{blocks_forward.1} parent=1 // pred_check
      _
    $region7: #{blocks_forward.1} parent=1 // pred_check_branch
      %23 = sbr.rel (0) target = $region9
    $region8: #{blocks_forward.1} parent=1 // pred_region
      _
    $region9: #{blocks_forward.1} parent=1 // pred_fallthru
      _
    // Predicated region
    $region10: #{blocks_forward.1} parent=1 // pred_check
      _
    $region11: #{blocks_forward.1} parent=1 // pred_check_branch
      %25 = sbr.rel (0) target = $region13
    $region12: #{blocks_forward.1} parent=1 // pred_region
      _
    $region13: #{blocks_forward.1} parent=1 // pred_fallthru
      _
    // Predicated region
    $region14: #{blocks_forward.1} parent=1 // pred_check
      _
    $region15: #{blocks_forward.1} parent=1 // pred_check_branch
      %27 = sbr.rel (0) target = $region17
    $region16: #{blocks_forward.1} parent=1 // pred_region
      _
    $region17: #{blocks_forward.1} parent=1 // pred_fallthru
      _
    // Predicated region
    $region18: #{blocks_forward.1} parent=1 // pred_check
      _
    $region19: #{blocks_forward.1} parent=1 // pred_check_branch
      %29 = sbr.rel (0) target = $region21
    $region20: #{blocks_forward.1} parent=1 // pred_region
      %31 = vsyncadd [#allocation3], 0
      %s32 = sshll.u32 %s4, 4
      %s33 = int_to_ptr.hbm [resolvable:$true] %s32
      %s34 = sshll.u32 [#allocation2], 4
      %s35 = int_to_ptr.vmem [resolvable:$true] %s34
      %40 = dma.hbm_to_vmem [thread:$0]  %s33, 4096, %s35, [#allocation3], 256, 256, 16
    $region21: #{blocks_forward.1} parent=1 // pred_fallthru
      _
    // Predicated region
    $region22: #{blocks_forward.1} parent=1 // pred_check
      _
    $region23: #{blocks_forward.1} parent=1 // pred_check_branch
      %42 = sbr.rel (0) target = $region25
    $region24: #{blocks_forward.1} parent=1 // pred_region
      %44 = vsyncadd [#allocation6], 0
      %s45 = sshll.u32 %s5, 4
      %s46 = int_to_ptr.hbm [resolvable:$true] %s45
      %s47 = sshll.u32 [#allocation5], 4
      %s48 = int_to_ptr.vmem [resolvable:$true] %s47
      %53 = dma.hbm_to_vmem [thread:$0]  %s46, 4096, %s48, [#allocation6], 256, 256, 16
    $region25: #{blocks_forward.1} parent=1 // pred_fallthru
      _
    // Predicated region
    $region26: #{blocks_forward.1} parent=1 // pred_check
      _
    $region27: #{blocks_forward.1} parent=1 // pred_check_branch
      %55 = sbr.rel (0) target = $region29
    $region28: #{blocks_forward.1} parent=1 // pred_region
      _
    $region29: #{blocks_forward.1} parent=1 // pred_fallthru
      _
    // Predicated region
    $region30: #{blocks_forward.1} parent=1 // pred_check
      _
    $region31: #{blocks_forward.1} parent=1 // pred_check_branch
      %57 = sbr.rel (0) target = $region33
    $region32: #{blocks_forward.1} parent=1 // pred_region
      %59 = vsyncadd [#allocation6], 0
      %s60 = sshll.u32 %s7, 4
      %s61 = int_to_ptr.hbm [resolvable:$true] %s60
      %s62 = sshll.u32 [#allocation7], 4
      %s63 = int_to_ptr.vmem [resolvable:$true] %s62
      %68 = dma.hbm_to_vmem [thread:$0]  %s61, 8192, %s63, [#allocation6], 512, 512, 32
    $region33: #{blocks_forward.1} parent=1 // pred_fallthru
      _
    // Predicated region
    $region34: #{blocks_forward.1} parent=1 // pred_check
      _
    $region35: #{blocks_forward.1} parent=1 // pred_check_branch
      %70 = sbr.rel (0) target = $region37
    $region36: #{blocks_forward.1} parent=1 // pred_region
      _
    $region37: #{blocks_forward.1} parent=1 // pred_fallthru
      _
    // Predicated region
    $region38: #{blocks_forward.1} parent=1 // pred_check
      _
    $region39: #{blocks_forward.1} parent=1 // pred_check_branch
      %72 = sbr.rel (0) target = $region41
    $region40: #{blocks_forward.1} parent=1 // pred_region
      %74 = vsyncadd [#allocation9], 0
      %s75 = sshll.u32 %s9, 4
      %s76 = int_to_ptr.hbm [resolvable:$true] %s75
      %s77 = sshll.u32 [#allocation8], 4
      %s78 = int_to_ptr.vmem [resolvable:$true] %s77
      %83 = dma.hbm_to_vmem [thread:$0]  %s76, 8192, %s78, [#allocation9], 64, 64, 4
    $region41: #{blocks_forward.1} parent=1 // pred_fallthru
      _
    // Predicated region
    $region42: #{blocks_forward.1} parent=1 // pred_check
      _
    $region43: #{blocks_forward.1} parent=1 // pred_check_branch
      %85 = sbr.rel (0) target = $region45
    $region44: #{blocks_forward.1} parent=1 // pred_region
      _
    $region45: #{blocks_forward.1} parent=1 // pred_fallthru
      _
    // Predicated region
    $region46: #{blocks_forward.1} parent=1 // pred_check
      _
    $region47: #{blocks_forward.1} parent=1 // pred_check_branch
      %87 = sbr.rel (0) target = $region49
    $region48: #{blocks_forward.1} parent=1 // pred_region
      %89 = dma.done [#allocation3], 4096
    $region49: #{blocks_forward.1} parent=1 // pred_fallthru
      _
    // Predicated region
    $region50: #{blocks_forward.1} parent=1 // pred_check
      _
    $region51: #{blocks_forward.1} parent=1 // pred_check_branch
      %91 = sbr.rel (0) target = $region53
    $region52: #{blocks_forward.1} parent=1 // pred_region
      %93 = dma.done [#allocation6], 4096
    $region53: #{blocks_forward.1} parent=1 // pred_fallthru
      _
    // Predicated region
    $region54: #{blocks_forward.1} parent=1 // pred_check
      _
    $region55: #{blocks_forward.1} parent=1 // pred_check_branch
      %95 = sbr.rel (0) target = $region57
    $region56: #{blocks_forward.1} parent=1 // pred_region
      %97 = dma.done [#allocation6], 8192
    $region57: #{blocks_forward.1} parent=1 // pred_fallthru
      _
    // Predicated region
    $region58: #{blocks_forward.1} parent=1 // pred_check
      _
    $region59: #{blocks_forward.1} parent=1 // pred_check_branch
      %99 = sbr.rel (0) target = $region61
    $region60: #{blocks_forward.1} parent=1 // pred_region
      %101 = dma.done [#allocation9], 8192
    $region61: #{blocks_forward.1} parent=1 // pred_fallthru
      _
    %v103 = vld [vmem:[%s0] sm:$0xff]
    %v104 = vld [vmem:[%s0 + $0x8] sm:$0xff]
    %v105 = vld [vmem:[%s0 + $0x10] sm:$0xff]
    %v106 = vld [vmem:[%s0 + $0x18] sm:$0xff]
    %v107 = vld [vmem:[%s0 + $0x20] sm:$0xff]
    %v108 = vld [vmem:[%s0 + $0x28] sm:$0xff]
    %v109 = vld [vmem:[%s0 + $0x30] sm:$0xff]
    %v110 = vld [vmem:[%s0 + $0x38] sm:$0xff]
    %v111 = vld [vmem:[%s2] sm:$0x1]
    %v112 = vld [vmem:[%s3] sm:$0x1]
    %v113 = vld [vmem:[%s1] sm:$0xff]
    %v114 = vld [vmem:[%s1 + $0x8] sm:$0xff]
    %v115 = vld [vmem:[%s1 + $0x10] sm:$0xff]
    %v116 = vld [vmem:[%s1 + $0x18] sm:$0xff]
    %117 = vadd.xlane.f32.xlu0 %v103
    %v118 = vpop.xlane.xlu0 %117
    %119 = vadd.xlane.f32.xlu0 %v104
    %v120 = vpop.xlane.xlu0 %119
    %121 = vadd.xlane.f32.xlu0 %v105
    %v122 = vpop.xlane.xlu0 %121
    %123 = vadd.xlane.f32.xlu0 %v106
    %v124 = vpop.xlane.xlu0 %123
    %125 = vadd.xlane.f32.xlu0 %v107
    %v126 = vpop.xlane.xlu0 %125
    %127 = vadd.xlane.f32.xlu0 %v108
    %v128 = vpop.xlane.xlu0 %127
    %129 = vadd.xlane.f32.xlu0 %v109
    %v130 = vpop.xlane.xlu0 %129
    %131 = vadd.xlane.f32.xlu0 %v110
    %v132 = vpop.xlane.xlu0 %131
    %v133 = vmul.f32 %v118, 0.01
    %v134 = vmul.f32 %v120, 0.01
    %v135 = vmul.f32 %v122, 0.01
    %v136 = vmul.f32 %v124, 0.01
    %v137 = vmul.f32 %v126, 0.01
    %v138 = vmul.f32 %v128, 0.01
    %v139 = vmul.f32 %v130, 0.01
    %v140 = vmul.f32 %v132, 0.01
    %v141 = vmul.f32 %v103, %v103
    %v142 = vmul.f32 %v104, %v104
    %v143 = vmul.f32 %v105, %v105
    %v144 = vmul.f32 %v106, %v106
    %v145 = vmul.f32 %v107, %v107
    %v146 = vmul.f32 %v108, %v108
    %v147 = vmul.f32 %v109, %v109
    %v148 = vmul.f32 %v110, %v110
    %149 = vadd.xlane.f32.xlu0 %v141
    %v150 = vpop.xlane.xlu0 %149
    %151 = vadd.xlane.f32.xlu0 %v142
    %v152 = vpop.xlane.xlu0 %151
    %153 = vadd.xlane.f32.xlu0 %v143
    %v154 = vpop.xlane.xlu0 %153
    %155 = vadd.xlane.f32.xlu0 %v144
    %v156 = vpop.xlane.xlu0 %155
    %157 = vadd.xlane.f32.xlu0 %v145
    %v158 = vpop.xlane.xlu0 %157
    %159 = vadd.xlane.f32.xlu0 %v146
    %v160 = vpop.xlane.xlu0 %159
    %161 = vadd.xlane.f32.xlu0 %v147
    %v162 = vpop.xlane.xlu0 %161
    %163 = vadd.xlane.f32.xlu0 %v148
    %v164 = vpop.xlane.xlu0 %163
    %v165 = vmul.f32 %v150, 0.01
    %v166 = vmul.f32 %v152, 0.01
    %v167 = vmul.f32 %v154, 0.01
    %v168 = vmul.f32 %v156, 0.01
    %v169 = vmul.f32 %v158, 0.01
    %v170 = vmul.f32 %v160, 0.01
    %v171 = vmul.f32 %v162, 0.01
    %v172 = vmul.f32 %v164, 0.01
    %v173 = vmul.f32 %v133, %v133
    %v174 = vmul.f32 %v134, %v134
    %v175 = vmul.f32 %v135, %v135
    %v176 = vmul.f32 %v136, %v136
    %v177 = vmul.f32 %v137, %v137
    %v178 = vmul.f32 %v138, %v138
    %v179 = vmul.f32 %v139, %v139
    %v180 = vmul.f32 %v140, %v140
    %v181 = vsub.f32 %v165, %v173
    %v182 = vsub.f32 %v166, %v174
    %v183 = vsub.f32 %v167, %v175
    %v184 = vsub.f32 %v168, %v176
    %v185 = vsub.f32 %v169, %v177
    %v186 = vsub.f32 %v170, %v178
    %v187 = vsub.f32 %v171, %v179
    %v188 = vsub.f32 %v172, %v180
    %v189 = vsub.f32 %v103, %v133
    %v190 = vsub.f32 %v104, %v134
    %v191 = vsub.f32 %v105, %v135
    %v192 = vsub.f32 %v106, %v136
    %v193 = vsub.f32 %v107, %v137
    %v194 = vsub.f32 %v108, %v138
    %v195 = vsub.f32 %v109, %v139
    %v196 = vsub.f32 %v110, %v140
    %v197 = vadd.f32 %v181, 1e-05
    %v198 = vadd.f32 %v182, 1e-05
    %v199 = vadd.f32 %v183, 1e-05
    %v200 = vadd.f32 %v184, 1e-05
    %v201 = vadd.f32 %v185, 1e-05
    %v202 = vadd.f32 %v186, 1e-05
    %v203 = vadd.f32 %v187, 1e-05
    %v204 = vadd.f32 %v188, 1e-05
    %v205 = vrsqrt.pop %v197
    %v206 = vmul.f32 %v205, %v197
    %v207 = vmul.f32 %v206, %v205
    %v208 = vmul.f32 0.5, %v207
    %v209 = vsub.f32 1.5, %v208
    %v210 = vmul.f32 %v205, %v209
    %vm211 = vweird.f32 %v197
    %vm212 = vweird.f32 %v205
    %vm213 = vmor %vm211, %vm212
    %v214 = vsel %vm213, %v205, %v210
    %v215 = vrsqrt.pop %v198
    %v216 = vmul.f32 %v215, %v198
    %v217 = vmul.f32 %v216, %v215
    %v218 = vmul.f32 0.5, %v217
    %v219 = vsub.f32 1.5, %v218
    %v220 = vmul.f32 %v215, %v219
    %vm221 = vweird.f32 %v198
    %vm222 = vweird.f32 %v215
    %vm223 = vmor %vm221, %vm222
    %v224 = vsel %vm223, %v215, %v220
    %v225 = vrsqrt.pop %v199
    %v226 = vmul.f32 %v225, %v199
    %v227 = vmul.f32 %v226, %v225
    %v228 = vmul.f32 0.5, %v227
    %v229 = vsub.f32 1.5, %v228
    %v230 = vmul.f32 %v225, %v229
    %vm231 = vweird.f32 %v199
    %vm232 = vweird.f32 %v225
    %vm233 = vmor %vm231, %vm232
    %v234 = vsel %vm233, %v225, %v230
    %v235 = vrsqrt.pop %v200
    %v236 = vmul.f32 %v235, %v200
    %v237 = vmul.f32 %v236, %v235
    %v238 = vmul.f32 0.5, %v237
    %v239 = vsub.f32 1.5, %v238
    %v240 = vmul.f32 %v235, %v239
    %vm241 = vweird.f32 %v200
    %vm242 = vweird.f32 %v235
    %vm243 = vmor %vm241, %vm242
    %v244 = vsel %vm243, %v235, %v240
    %v245 = vrsqrt.pop %v201
    %v246 = vmul.f32 %v245, %v201
    %v247 = vmul.f32 %v246, %v245
    %v248 = vmul.f32 0.5, %v247
    %v249 = vsub.f32 1.5, %v248
    %v250 = vmul.f32 %v245, %v249
    %vm251 = vweird.f32 %v201
    %vm252 = vweird.f32 %v245
    %vm253 = vmor %vm251, %vm252
    %v254 = vsel %vm253, %v245, %v250
    %v255 = vrsqrt.pop %v202
    %v256 = vmul.f32 %v255, %v202
    %v257 = vmul.f32 %v256, %v255
    %v258 = vmul.f32 0.5, %v257
    %v259 = vsub.f32 1.5, %v258
    %v260 = vmul.f32 %v255, %v259
    %vm261 = vweird.f32 %v202
    %vm262 = vweird.f32 %v255
    %vm263 = vmor %vm261, %vm262
    %v264 = vsel %vm263, %v255, %v260
    %v265 = vrsqrt.pop %v203
    %v266 = vmul.f32 %v265, %v203
    %v267 = vmul.f32 %v266, %v265
    %v268 = vmul.f32 0.5, %v267
    %v269 = vsub.f32 1.5, %v268
    %v270 = vmul.f32 %v265, %v269
    %vm271 = vweird.f32 %v203
    %vm272 = vweird.f32 %v265
    %vm273 = vmor %vm271, %vm272
    %v274 = vsel %vm273, %v265, %v270
    %v275 = vrsqrt.pop %v204
    %v276 = vmul.f32 %v275, %v204
    %v277 = vmul.f32 %v276, %v275
    %v278 = vmul.f32 0.5, %v277
    %v279 = vsub.f32 1.5, %v278
    %v280 = vmul.f32 %v275, %v279
    %vm281 = vweird.f32 %v204
    %vm282 = vweird.f32 %v275
    %vm283 = vmor %vm281, %vm282
    %v284 = vsel %vm283, %v275, %v280
    %v285 = vmul.f32 %v189, %v214
    %v286 = vmul.f32 %v190, %v224
    %v287 = vmul.f32 %v191, %v234
    %v288 = vmul.f32 %v192, %v244
    %v289 = vmul.f32 %v193, %v254
    %v290 = vmul.f32 %v194, %v264
    %v291 = vmul.f32 %v195, %v274
    %v292 = vmul.f32 %v196, %v284
    %v294 = vperm.slane %v111, 0
    %v296 = vmul.f32 %v285, %v294
    %v297 = vmul.f32 %v286, %v294
    %v298 = vmul.f32 %v287, %v294
    %v299 = vmul.f32 %v288, %v294
    %v300 = vmul.f32 %v289, %v294
    %v301 = vmul.f32 %v290, %v294
    %v302 = vmul.f32 %v291, %v294
    %v303 = vmul.f32 %v292, %v294
    %v305 = vperm.slane %v112, 0
    %v307 = vadd.f32 %v296, %v305
    %v308 = vadd.f32 %v297, %v305
    %v309 = vadd.f32 %v298, %v305
    %v310 = vadd.f32 %v299, %v305
    %v311 = vadd.f32 %v300, %v305
    %v312 = vadd.f32 %v301, %v305
    %v313 = vadd.f32 %v302, %v305
    %v314 = vadd.f32 %v303, %v305
    %v315 = vpack.c.bf16 %v307, %v307
    %v316 = vpack.c.bf16 %v308, %v308
    %v317 = vpack.c.bf16 %v309, %v309
    %v318 = vpack.c.bf16 %v310, %v310
    %v319 = vpack.c.bf16 %v311, %v311
    %v320 = vpack.c.bf16 %v312, %v312
    %v321 = vpack.c.bf16 %v313, %v313
    %v322 = vpack.c.bf16 %v314, %v314
    %v323 = vld [vmem:[#allocation2] sm:$0xff]
    %v324 = vld [vmem:[#allocation2 + $0x8] sm:$0xff]
    %v325 = vld [vmem:[#allocation2 + $0x10] sm:$0xff]
    %v326 = vld [vmem:[#allocation2 + $0x18] sm:$0xff]
    %v327 = vld [vmem:[#allocation2 + $0x20] sm:$0xff]
    %v328 = vld [vmem:[#allocation2 + $0x28] sm:$0xff]
    %v329 = vld [vmem:[#allocation2 + $0x30] sm:$0xff]
    %v330 = vld [vmem:[#allocation2 + $0x38] sm:$0xff]
    %v331 = vld [vmem:[#allocation2 + $0x40] sm:$0xff]
    %v332 = vld [vmem:[#allocation2 + $0x48] sm:$0xff]
    %v333 = vld [vmem:[#allocation2 + $0x50] sm:$0xff]
    %v334 = vld [vmem:[#allocation2 + $0x58] sm:$0xff]
    %v335 = vld [vmem:[#allocation2 + $0x60] sm:$0xff]
    %v336 = vld [vmem:[#allocation2 + $0x68] sm:$0xff]
    %v337 = vld [vmem:[#allocation2 + $0x70] sm:$0xff]
    %v338 = vld [vmem:[#allocation2 + $0x78] sm:$0xff]
    %v339 = vld [vmem:[#allocation2 + $0x80] sm:$0xff]
    %v340 = vld [vmem:[#allocation2 + $0x88] sm:$0xff]
    %v341 = vld [vmem:[#allocation2 + $0x90] sm:$0xff]
    %v342 = vld [vmem:[#allocation2 + $0x98] sm:$0xff]
    %v343 = vld [vmem:[#allocation2 + $0xa0] sm:$0xff]
    %v344 = vld [vmem:[#allocation2 + $0xa8] sm:$0xff]
    %v345 = vld [vmem:[#allocation2 + $0xb0] sm:$0xff]
    %v346 = vld [vmem:[#allocation2 + $0xb8] sm:$0xff]
    %v347 = vld [vmem:[#allocation2 + $0xc0] sm:$0xff]
    %v348 = vld [vmem:[#allocation2 + $0xc8] sm:$0xff]
    %v349 = vld [vmem:[#allocation2 + $0xd0] sm:$0xff]
    %v350 = vld [vmem:[#allocation2 + $0xd8] sm:$0xff]
    %v351 = vld [vmem:[#allocation2 + $0xe0] sm:$0xff]
    %v352 = vld [vmem:[#allocation2 + $0xe8] sm:$0xff]
    %v353 = vld [vmem:[#allocation2 + $0xf0] sm:$0xff]
    %v354 = vld [vmem:[#allocation2 + $0xf8] sm:$0xff]
    %v363 = vunpack.c.l.b16 %v315
    %v364 = vunpack.c.l.b16 %v316
    %v365 = vunpack.c.l.b16 %v317
    %v366 = vunpack.c.l.b16 %v318
    %v367 = vunpack.c.l.b16 %v319
    %v368 = vunpack.c.l.b16 %v320
    %v369 = vunpack.c.l.b16 %v321
    %v370 = vunpack.c.l.b16 %v322
    %v371 = vpack.c.b16 %v364, %v363
    %v372 = vpack.c.b16 %v366, %v365
    %v373 = vpack.c.b16 %v368, %v367
    %v374 = vpack.c.b16 %v370, %v369
    %v411 = vunpack.c.l.b16 %v323
    %v412 = vunpack.c.h.b16 %v323
    %v413 = vunpack.c.l.b16 %v324
    %v414 = vunpack.c.h.b16 %v324
    %v415 = vunpack.c.l.b16 %v325
    %v416 = vunpack.c.h.b16 %v325
    %v417 = vunpack.c.l.b16 %v326
    %v418 = vunpack.c.h.b16 %v326
    %v419 = vunpack.c.l.b16 %v327
    %v420 = vunpack.c.h.b16 %v327
    %v421 = vunpack.c.l.b16 %v328
    %v422 = vunpack.c.h.b16 %v328
    %v423 = vunpack.c.l.b16 %v329
    %v424 = vunpack.c.h.b16 %v329
    %v425 = vunpack.c.l.b16 %v330
    %v426 = vunpack.c.h.b16 %v330
    %v427 = vunpack.c.l.b16 %v331
    %v428 = vunpack.c.h.b16 %v331
    %v429 = vunpack.c.l.b16 %v332
    %v430 = vunpack.c.h.b16 %v332
    %v431 = vunpack.c.l.b16 %v333
    %v432 = vunpack.c.h.b16 %v333
    %v433 = vunpack.c.l.b16 %v334
    %v434 = vunpack.c.h.b16 %v334
    %v435 = vunpack.c.l.b16 %v335
    %v436 = vunpack.c.h.b16 %v335
    %v437 = vunpack.c.l.b16 %v336
    %v438 = vunpack.c.h.b16 %v336
    %v439 = vunpack.c.l.b16 %v337
    %v440 = vunpack.c.h.b16 %v337
    %v441 = vunpack.c.l.b16 %v338
    %v442 = vunpack.c.h.b16 %v338
    %v443 = vunpack.c.l.b16 %v339
    %v444 = vunpack.c.h.b16 %v339
    %v445 = vunpack.c.l.b16 %v340
    %v446 = vunpack.c.h.b16 %v340
    %v447 = vunpack.c.l.b16 %v341
    %v448 = vunpack.c.h.b16 %v341
    %v449 = vunpack.c.l.b16 %v342
    %v450 = vunpack.c.h.b16 %v342
    %v451 = vunpack.c.l.b16 %v343
    %v452 = vunpack.c.h.b16 %v343
    %v453 = vunpack.c.l.b16 %v344
    %v454 = vunpack.c.h.b16 %v344
    %v455 = vunpack.c.l.b16 %v345
    %v456 = vunpack.c.h.b16 %v345
    %v457 = vunpack.c.l.b16 %v346
    %v458 = vunpack.c.h.b16 %v346
    %v459 = vunpack.c.l.b16 %v347
    %v460 = vunpack.c.h.b16 %v347
    %v461 = vunpack.c.l.b16 %v348
    %v462 = vunpack.c.h.b16 %v348
    %v463 = vunpack.c.l.b16 %v349
    %v464 = vunpack.c.h.b16 %v349
    %v465 = vunpack.c.l.b16 %v350
    %v466 = vunpack.c.h.b16 %v350
    %v467 = vunpack.c.l.b16 %v351
    %v468 = vunpack.c.h.b16 %v351
    %v469 = vunpack.c.l.b16 %v352
    %v470 = vunpack.c.h.b16 %v352
    %v471 = vunpack.c.l.b16 %v353
    %v472 = vunpack.c.h.b16 %v353
    %v473 = vunpack.c.l.b16 %v354
    %v474 = vunpack.c.h.b16 %v354
    %v475 = vpack.c.b16 %v415, %v411
    %v476 = vpack.c.b16 %v416, %v412
    %v477 = vpack.c.b16 %v417, %v413
    %v478 = vpack.c.b16 %v418, %v414
    %v479 = vpack.c.b16 %v423, %v419
    %v480 = vpack.c.b16 %v424, %v420
    %v481 = vpack.c.b16 %v425, %v421
    %v482 = vpack.c.b16 %v426, %v422
    %v483 = vpack.c.b16 %v431, %v427
    %v484 = vpack.c.b16 %v432, %v428
    %v485 = vpack.c.b16 %v433, %v429
    %v486 = vpack.c.b16 %v434, %v430
    %v487 = vpack.c.b16 %v439, %v435
    %v488 = vpack.c.b16 %v440, %v436
    %v489 = vpack.c.b16 %v441, %v437
    %v490 = vpack.c.b16 %v442, %v438
    %v491 = vpack.c.b16 %v447, %v443
    %v492 = vpack.c.b16 %v448, %v444
    %v493 = vpack.c.b16 %v449, %v445
    %v494 = vpack.c.b16 %v450, %v446
    %v495 = vpack.c.b16 %v455, %v451
    %v496 = vpack.c.b16 %v456, %v452
    %v497 = vpack.c.b16 %v457, %v453
    %v498 = vpack.c.b16 %v458, %v454
    %v499 = vpack.c.b16 %v463, %v459
    %v500 = vpack.c.b16 %v464, %v460
    %v501 = vpack.c.b16 %v465, %v461
    %v502 = vpack.c.b16 %v466, %v462
    %v503 = vpack.c.b16 %v471, %v467
    %v504 = vpack.c.b16 %v472, %v468
    %v505 = vpack.c.b16 %v473, %v469
    %v506 = vpack.c.b16 %v474, %v470
    %539 = vmatpush.bf16.msra.mxu0 %v503
    %540 = vmatpush.bf16.msra.mxu0 %v499
    %541 = vmatpush.bf16.msra.mxu0 %v495
    %542 = vmatpush.bf16.msra.mxu0 %v491
    %543 = vmatpush.bf16.msra.mxu0 %v487
    %544 = vmatpush.bf16.msra.mxu0 %v483
    %545 = vmatpush.bf16.msra.mxu0 %v479
    %546 = vmatpush.bf16.msra.mxu0 %v475
    %547 = vmatmul.bf16.gmra.mxu0 %v371
    %v548 = vpop.f32.mrf.mxu0
    %v549 = vadd.f32 0.0, %v548
    %v550 = vpop.f32.mrf.mxu0
    %v551 = vadd.f32 0.0, %v550
    %552 = vmatmul.bf16.gmra.mxu0 %v372
    %v553 = vpop.f32.mrf.mxu0
    %v554 = vadd.f32 0.0, %v553
    %v555 = vpop.f32.mrf.mxu0
    %v556 = vadd.f32 0.0, %v555
    %557 = vmatmul.bf16.gmra.mxu0 %v373
    %v558 = vpop.f32.mrf.mxu0
    %v559 = vadd.f32 0.0, %v558
    %v560 = vpop.f32.mrf.mxu0
    %v561 = vadd.f32 0.0, %v560
    %562 = vmatmul.bf16.gmra.mxu0 %v374
    %v563 = vpop.f32.mrf.mxu0
    %v564 = vadd.f32 0.0, %v563
    %v565 = vpop.f32.mrf.mxu0
    %v566 = vadd.f32 0.0, %v565
    %567 = vdwg.mxu0
    %568 = vmatpush.bf16.msra.mxu0 %v504
    %569 = vmatpush.bf16.msra.mxu0 %v500
    %570 = vmatpush.bf16.msra.mxu0 %v496
    %571 = vmatpush.bf16.msra.mxu0 %v492
    %572 = vmatpush.bf16.msra.mxu0 %v488
    %573 = vmatpush.bf16.msra.mxu0 %v484
    %574 = vmatpush.bf16.msra.mxu0 %v480
    %575 = vmatpush.bf16.msra.mxu0 %v476
    %576 = vmatmul.bf16.gmra.mxu0 %v371
    %v577 = vpop.f32.mrf.mxu0
    %v578 = vadd.f32 0.0, %v577
    %v579 = vpop.f32.mrf.mxu0
    %v580 = vadd.f32 0.0, %v579
    %581 = vmatmul.bf16.gmra.mxu0 %v372
    %v582 = vpop.f32.mrf.mxu0
    %v583 = vadd.f32 0.0, %v582
    %v584 = vpop.f32.mrf.mxu0
    %v585 = vadd.f32 0.0, %v584
    %586 = vmatmul.bf16.gmra.mxu0 %v373
    %v587 = vpop.f32.mrf.mxu0
    %v588 = vadd.f32 0.0, %v587
    %v589 = vpop.f32.mrf.mxu0
    %v590 = vadd.f32 0.0, %v589
    %591 = vmatmul.bf16.gmra.mxu0 %v374
    %v592 = vpop.f32.mrf.mxu0
    %v593 = vadd.f32 0.0, %v592
    %v594 = vpop.f32.mrf.mxu0
    %v595 = vadd.f32 0.0, %v594
    %596 = vdwg.mxu0
    %597 = vmatpush.bf16.msra.mxu0 %v505
    %598 = vmatpush.bf16.msra.mxu0 %v501
    %599 = vmatpush.bf16.msra.mxu0 %v497
    %600 = vmatpush.bf16.msra.mxu0 %v493
    %601 = vmatpush.bf16.msra.mxu0 %v489
    %602 = vmatpush.bf16.msra.mxu0 %v485
    %603 = vmatpush.bf16.msra.mxu0 %v481
    %604 = vmatpush.bf16.msra.mxu0 %v477
    %605 = vmatmul.bf16.gmra.mxu0 %v371
    %v606 = vpop.f32.mrf.mxu0
    %v607 = vadd.f32 0.0, %v606
    %v608 = vpop.f32.mrf.mxu0
    %v609 = vadd.f32 0.0, %v608
    %610 = vmatmul.bf16.gmra.mxu0 %v372
    %v611 = vpop.f32.mrf.mxu0
    %v612 = vadd.f32 0.0, %v611
    %v613 = vpop.f32.mrf.mxu0
    %v614 = vadd.f32 0.0, %v613
    %615 = vmatmul.bf16.gmra.mxu0 %v373
    %v616 = vpop.f32.mrf.mxu0
    %v617 = vadd.f32 0.0, %v616
    %v618 = vpop.f32.mrf.mxu0
    %v619 = vadd.f32 0.0, %v618
    %620 = vmatmul.bf16.gmra.mxu0 %v374
    %v621 = vpop.f32.mrf.mxu0
    %v622 = vadd.f32 0.0, %v621
    %v623 = vpop.f32.mrf.mxu0
    %v624 = vadd.f32 0.0, %v623
    %625 = vdwg.mxu0
    %626 = vmatpush.bf16.msra.mxu0 %v506
    %627 = vmatpush.bf16.msra.mxu0 %v502
    %628 = vmatpush.bf16.msra.mxu0 %v498
    %629 = vmatpush.bf16.msra.mxu0 %v494
    %630 = vmatpush.bf16.msra.mxu0 %v490
    %631 = vmatpush.bf16.msra.mxu0 %v486
    %632 = vmatpush.bf16.msra.mxu0 %v482
    %633 = vmatpush.bf16.msra.mxu0 %v478
    %634 = vmatmul.bf16.gmra.mxu0 %v371
    %v635 = vpop.f32.mrf.mxu0
    %v636 = vadd.f32 0.0, %v635
    %v637 = vpop.f32.mrf.mxu0
    %v638 = vadd.f32 0.0, %v637
    %639 = vmatmul.bf16.gmra.mxu0 %v372
    %v640 = vpop.f32.mrf.mxu0
    %v641 = vadd.f32 0.0, %v640
    %v642 = vpop.f32.mrf.mxu0
    %v643 = vadd.f32 0.0, %v642
    %644 = vmatmul.bf16.gmra.mxu0 %v373
    %v645 = vpop.f32.mrf.mxu0
    %v646 = vadd.f32 0.0, %v645
    %v647 = vpop.f32.mrf.mxu0
    %v648 = vadd.f32 0.0, %v647
    %649 = vmatmul.bf16.gmra.mxu0 %v374
    %v650 = vpop.f32.mrf.mxu0
    %v651 = vadd.f32 0.0, %v650
    %v652 = vpop.f32.mrf.mxu0
    %v653 = vadd.f32 0.0, %v652
    %654 = vdwg.mxu0
    %v655 = vpack.c.bf16 %v578, %v549
    %v656 = vpack.c.bf16 %v636, %v607
    %v657 = vpack.c.bf16 %v580, %v551
    %v658 = vpack.c.bf16 %v638, %v609
    %v659 = vpack.c.bf16 %v583, %v554
    %v660 = vpack.c.bf16 %v641, %v612
    %v661 = vpack.c.bf16 %v585, %v556
    %v662 = vpack.c.bf16 %v643, %v614
    %v663 = vpack.c.bf16 %v588, %v559
    %v664 = vpack.c.bf16 %v646, %v617
    %v665 = vpack.c.bf16 %v590, %v561
    %v666 = vpack.c.bf16 %v648, %v619
    %v667 = vpack.c.bf16 %v593, %v564
    %v668 = vpack.c.bf16 %v651, %v622
    %v669 = vpack.c.bf16 %v595, %v566
    %v670 = vpack.c.bf16 %v653, %v624
    %v671 = vld [vmem:[#allocation5] sm:$0xff]
    %v672 = vld [vmem:[#allocation5 + $0x8] sm:$0xff]
    %v673 = vld [vmem:[#allocation5 + $0x10] sm:$0xff]
    %v674 = vld [vmem:[#allocation5 + $0x18] sm:$0xff]
    %v675 = vld [vmem:[#allocation5 + $0x20] sm:$0xff]
    %v676 = vld [vmem:[#allocation5 + $0x28] sm:$0xff]
    %v677 = vld [vmem:[#allocation5 + $0x30] sm:$0xff]
    %v678 = vld [vmem:[#allocation5 + $0x38] sm:$0xff]
    %v679 = vld [vmem:[#allocation5 + $0x40] sm:$0xff]
    %v680 = vld [vmem:[#allocation5 + $0x48] sm:$0xff]
    %v681 = vld [vmem:[#allocation5 + $0x50] sm:$0xff]
    %v682 = vld [vmem:[#allocation5 + $0x58] sm:$0xff]
    %v683 = vld [vmem:[#allocation5 + $0x60] sm:$0xff]
    %v684 = vld [vmem:[#allocation5 + $0x68] sm:$0xff]
    %v685 = vld [vmem:[#allocation5 + $0x70] sm:$0xff]
    %v686 = vld [vmem:[#allocation5 + $0x78] sm:$0xff]
    %v687 = vld [vmem:[#allocation5 + $0x80] sm:$0xff]
    %v688 = vld [vmem:[#allocation5 + $0x88] sm:$0xff]
    %v689 = vld [vmem:[#allocation5 + $0x90] sm:$0xff]
    %v690 = vld [vmem:[#allocation5 + $0x98] sm:$0xff]
    %v691 = vld [vmem:[#allocation5 + $0xa0] sm:$0xff]
    %v692 = vld [vmem:[#allocation5 + $0xa8] sm:$0xff]
    %v693 = vld [vmem:[#allocation5 + $0xb0] sm:$0xff]
    %v694 = vld [vmem:[#allocation5 + $0xb8] sm:$0xff]
    %v695 = vld [vmem:[#allocation5 + $0xc0] sm:$0xff]
    %v696 = vld [vmem:[#allocation5 + $0xc8] sm:$0xff]
    %v697 = vld [vmem:[#allocation5 + $0xd0] sm:$0xff]
    %v698 = vld [vmem:[#allocation5 + $0xd8] sm:$0xff]
    %v699 = vld [vmem:[#allocation5 + $0xe0] sm:$0xff]
    %v700 = vld [vmem:[#allocation5 + $0xe8] sm:$0xff]
    %v701 = vld [vmem:[#allocation5 + $0xf0] sm:$0xff]
    %v702 = vld [vmem:[#allocation5 + $0xf8] sm:$0xff]
    %v735 = vunpack.c.l.b16 %v671
    %v736 = vunpack.c.h.b16 %v671
    %v737 = vunpack.c.l.b16 %v672
    %v738 = vunpack.c.h.b16 %v672
    %v739 = vunpack.c.l.b16 %v673
    %v740 = vunpack.c.h.b16 %v673
    %v741 = vunpack.c.l.b16 %v674
    %v742 = vunpack.c.h.b16 %v674
    %v743 = vunpack.c.l.b16 %v675
    %v744 = vunpack.c.h.b16 %v675
    %v745 = vunpack.c.l.b16 %v676
    %v746 = vunpack.c.h.b16 %v676
    %v747 = vunpack.c.l.b16 %v677
    %v748 = vunpack.c.h.b16 %v677
    %v749 = vunpack.c.l.b16 %v678
    %v750 = vunpack.c.h.b16 %v678
    %v751 = vunpack.c.l.b16 %v679
    %v752 = vunpack.c.h.b16 %v679
    %v753 = vunpack.c.l.b16 %v680
    %v754 = vunpack.c.h.b16 %v680
    %v755 = vunpack.c.l.b16 %v681
    %v756 = vunpack.c.h.b16 %v681
    %v757 = vunpack.c.l.b16 %v682
    %v758 = vunpack.c.h.b16 %v682
    %v759 = vunpack.c.l.b16 %v683
    %v760 = vunpack.c.h.b16 %v683
    %v761 = vunpack.c.l.b16 %v684
    %v762 = vunpack.c.h.b16 %v684
    %v763 = vunpack.c.l.b16 %v685
    %v764 = vunpack.c.h.b16 %v685
    %v765 = vunpack.c.l.b16 %v686
    %v766 = vunpack.c.h.b16 %v686
    %v767 = vunpack.c.l.b16 %v687
    %v768 = vunpack.c.h.b16 %v687
    %v769 = vunpack.c.l.b16 %v688
    %v770 = vunpack.c.h.b16 %v688
    %v771 = vunpack.c.l.b16 %v689
    %v772 = vunpack.c.h.b16 %v689
    %v773 = vunpack.c.l.b16 %v690
    %v774 = vunpack.c.h.b16 %v690
    %v775 = vunpack.c.l.b16 %v691
    %v776 = vunpack.c.h.b16 %v691
    %v777 = vunpack.c.l.b16 %v692
    %v778 = vunpack.c.h.b16 %v692
    %v779 = vunpack.c.l.b16 %v693
    %v780 = vunpack.c.h.b16 %v693
    %v781 = vunpack.c.l.b16 %v694
    %v782 = vunpack.c.h.b16 %v694
    %v783 = vunpack.c.l.b16 %v695
    %v784 = vunpack.c.h.b16 %v695
    %v785 = vunpack.c.l.b16 %v696
    %v786 = vunpack.c.h.b16 %v696
    %v787 = vunpack.c.l.b16 %v697
    %v788 = vunpack.c.h.b16 %v697
    %v789 = vunpack.c.l.b16 %v698
    %v790 = vunpack.c.h.b16 %v698
    %v791 = vunpack.c.l.b16 %v699
    %v792 = vunpack.c.h.b16 %v699
    %v793 = vunpack.c.l.b16 %v700
    %v794 = vunpack.c.h.b16 %v700
    %v795 = vunpack.c.l.b16 %v701
    %v796 = vunpack.c.h.b16 %v701
    %v797 = vunpack.c.l.b16 %v702
    %v798 = vunpack.c.h.b16 %v702
    %v799 = vpack.c.b16 %v739, %v735
    %v800 = vpack.c.b16 %v740, %v736
    %v801 = vpack.c.b16 %v741, %v737
    %v802 = vpack.c.b16 %v742, %v738
    %v803 = vpack.c.b16 %v747, %v743
    %v804 = vpack.c.b16 %v748, %v744
    %v805 = vpack.c.b16 %v749, %v745
    %v806 = vpack.c.b16 %v750, %v746
    %v807 = vpack.c.b16 %v755, %v751
    %v808 = vpack.c.b16 %v756, %v752
    %v809 = vpack.c.b16 %v757, %v753
    %v810 = vpack.c.b16 %v758, %v754
    %v811 = vpack.c.b16 %v763, %v759
    %v812 = vpack.c.b16 %v764, %v760
    %v813 = vpack.c.b16 %v765, %v761
    %v814 = vpack.c.b16 %v766, %v762
    %v815 = vpack.c.b16 %v771, %v767
    %v816 = vpack.c.b16 %v772, %v768
    %v817 = vpack.c.b16 %v773, %v769
    %v818 = vpack.c.b16 %v774, %v770
    %v819 = vpack.c.b16 %v779, %v775
    %v820 = vpack.c.b16 %v780, %v776
    %v821 = vpack.c.b16 %v781, %v777
    %v822 = vpack.c.b16 %v782, %v778
    %v823 = vpack.c.b16 %v787, %v783
    %v824 = vpack.c.b16 %v788, %v784
    %v825 = vpack.c.b16 %v789, %v785
    %v826 = vpack.c.b16 %v790, %v786
    %v827 = vpack.c.b16 %v795, %v791
    %v828 = vpack.c.b16 %v796, %v792
    %v829 = vpack.c.b16 %v797, %v793
    %v830 = vpack.c.b16 %v798, %v794
    %863 = vmatpush.bf16.msra.mxu0 %v827
    %864 = vmatpush.bf16.msra.mxu0 %v823
    %865 = vmatpush.bf16.msra.mxu0 %v819
    %866 = vmatpush.bf16.msra.mxu0 %v815
    %867 = vmatpush.bf16.msra.mxu0 %v811
    %868 = vmatpush.bf16.msra.mxu0 %v807
    %869 = vmatpush.bf16.msra.mxu0 %v803
    %870 = vmatpush.bf16.msra.mxu0 %v799
    %871 = vmatmul.bf16.gmra.mxu0 %v371
    %v872 = vpop.f32.mrf.mxu0
    %v873 = vadd.f32 0.0, %v872
    %v874 = vpop.f32.mrf.mxu0
    %v875 = vadd.f32 0.0, %v874
    %876 = vmatmul.bf16.gmra.mxu0 %v372
    %v877 = vpop.f32.mrf.mxu0
    %v878 = vadd.f32 0.0, %v877
    %v879 = vpop.f32.mrf.mxu0
    %v880 = vadd.f32 0.0, %v879
    %881 = vmatmul.bf16.gmra.mxu0 %v373
    %v882 = vpop.f32.mrf.mxu0
    %v883 = vadd.f32 0.0, %v882
    %v884 = vpop.f32.mrf.mxu0
    %v885 = vadd.f32 0.0, %v884
    %886 = vmatmul.bf16.gmra.mxu0 %v374
    %v887 = vpop.f32.mrf.mxu0
    %v888 = vadd.f32 0.0, %v887
    %v889 = vpop.f32.mrf.mxu0
    %v890 = vadd.f32 0.0, %v889
    %891 = vdwg.mxu0
    %892 = vmatpush.bf16.msra.mxu0 %v828
    %893 = vmatpush.bf16.msra.mxu0 %v824
    %894 = vmatpush.bf16.msra.mxu0 %v820
    %895 = vmatpush.bf16.msra.mxu0 %v816
    %896 = vmatpush.bf16.msra.mxu0 %v812
    %897 = vmatpush.bf16.msra.mxu0 %v808
    %898 = vmatpush.bf16.msra.mxu0 %v804
    %899 = vmatpush.bf16.msra.mxu0 %v800
    %900 = vmatmul.bf16.gmra.mxu0 %v371
    %v901 = vpop.f32.mrf.mxu0
    %v902 = vadd.f32 0.0, %v901
    %v903 = vpop.f32.mrf.mxu0
    %v904 = vadd.f32 0.0, %v903
    %905 = vmatmul.bf16.gmra.mxu0 %v372
    %v906 = vpop.f32.mrf.mxu0
    %v907 = vadd.f32 0.0, %v906
    %v908 = vpop.f32.mrf.mxu0
    %v909 = vadd.f32 0.0, %v908
    %910 = vmatmul.bf16.gmra.mxu0 %v373
    %v911 = vpop.f32.mrf.mxu0
    %v912 = vadd.f32 0.0, %v911
    %v913 = vpop.f32.mrf.mxu0
    %v914 = vadd.f32 0.0, %v913
    %915 = vmatmul.bf16.gmra.mxu0 %v374
    %v916 = vpop.f32.mrf.mxu0
    %v917 = vadd.f32 0.0, %v916
    %v918 = vpop.f32.mrf.mxu0
    %v919 = vadd.f32 0.0, %v918
    %920 = vdwg.mxu0
    %921 = vmatpush.bf16.msra.mxu0 %v829
    %922 = vmatpush.bf16.msra.mxu0 %v825
    %923 = vmatpush.bf16.msra.mxu0 %v821
    %924 = vmatpush.bf16.msra.mxu0 %v817
    %925 = vmatpush.bf16.msra.mxu0 %v813
    %926 = vmatpush.bf16.msra.mxu0 %v809
    %927 = vmatpush.bf16.msra.mxu0 %v805
    %928 = vmatpush.bf16.msra.mxu0 %v801
    %929 = vmatmul.bf16.gmra.mxu0 %v371
    %v930 = vpop.f32.mrf.mxu0
    %v931 = vadd.f32 0.0, %v930
    %v932 = vpop.f32.mrf.mxu0
    %v933 = vadd.f32 0.0, %v932
    %934 = vmatmul.bf16.gmra.mxu0 %v372
    %v935 = vpop.f32.mrf.mxu0
    %v936 = vadd.f32 0.0, %v935
    %v937 = vpop.f32.mrf.mxu0
    %v938 = vadd.f32 0.0, %v937
    %939 = vmatmul.bf16.gmra.mxu0 %v373
    %v940 = vpop.f32.mrf.mxu0
    %v941 = vadd.f32 0.0, %v940
    %v942 = vpop.f32.mrf.mxu0
    %v943 = vadd.f32 0.0, %v942
    %944 = vmatmul.bf16.gmra.mxu0 %v374
    %v945 = vpop.f32.mrf.mxu0
    %v946 = vadd.f32 0.0, %v945
    %v947 = vpop.f32.mrf.mxu0
    %v948 = vadd.f32 0.0, %v947
    %949 = vdwg.mxu0
    %950 = vmatpush.bf16.msra.mxu0 %v830
    %951 = vmatpush.bf16.msra.mxu0 %v826
    %952 = vmatpush.bf16.msra.mxu0 %v822
    %953 = vmatpush.bf16.msra.mxu0 %v818
    %954 = vmatpush.bf16.msra.mxu0 %v814
    %955 = vmatpush.bf16.msra.mxu0 %v810
    %956 = vmatpush.bf16.msra.mxu0 %v806
    %957 = vmatpush.bf16.msra.mxu0 %v802
    %958 = vmatmul.bf16.gmra.mxu0 %v371
    %v959 = vpop.f32.mrf.mxu0
    %v960 = vadd.f32 0.0, %v959
    %v961 = vpop.f32.mrf.mxu0
    %v962 = vadd.f32 0.0, %v961
    %963 = vmatmul.bf16.gmra.mxu0 %v372
    %v964 = vpop.f32.mrf.mxu0
    %v965 = vadd.f32 0.0, %v964
    %v966 = vpop.f32.mrf.mxu0
    %v967 = vadd.f32 0.0, %v966
    %968 = vmatmul.bf16.gmra.mxu0 %v373
    %v969 = vpop.f32.mrf.mxu0
    %v970 = vadd.f32 0.0, %v969
    %v971 = vpop.f32.mrf.mxu0
    %v972 = vadd.f32 0.0, %v971
    %973 = vmatmul.bf16.gmra.mxu0 %v374
    %v974 = vpop.f32.mrf.mxu0
    %v975 = vadd.f32 0.0, %v974
    %v976 = vpop.f32.mrf.mxu0
    %v977 = vadd.f32 0.0, %v976
    %978 = vdwg.mxu0
    %v979 = vpack.c.bf16 %v902, %v873
    %v980 = vpack.c.bf16 %v960, %v931
    %v981 = vpack.c.bf16 %v904, %v875
    %v982 = vpack.c.bf16 %v962, %v933
    %v983 = vpack.c.bf16 %v907, %v878
    %v984 = vpack.c.bf16 %v965, %v936
    %v985 = vpack.c.bf16 %v909, %v880
    %v986 = vpack.c.bf16 %v967, %v938
    %v987 = vpack.c.bf16 %v912, %v883
    %v988 = vpack.c.bf16 %v970, %v941
    %v989 = vpack.c.bf16 %v914, %v885
    %v990 = vpack.c.bf16 %v972, %v943
    %v991 = vpack.c.bf16 %v917, %v888
    %v992 = vpack.c.bf16 %v975, %v946
    %v993 = vpack.c.bf16 %v919, %v890
    %v994 = vpack.c.bf16 %v977, %v948
    %v999 = vunpack.c.l.b16 %v655
    %v1000 = vunpack.c.l.b16 %v657
    %v1001 = vunpack.c.l.b16 %v659
    %v1002 = vunpack.c.l.b16 %v661
    %v1003 = vpack.c.b16 %v1000, %v999
    %v1004 = vpack.c.b16 %v1002, %v1001
    %1007 = vmatpush.bf16.xpose.msra.mxu0 0
    %1008 = vmatpush.bf16.xpose.msra.mxu0 0
    %1009 = vmatpush.bf16.xpose.msra.mxu0 0
    %1010 = vmatpush.bf16.xpose.msra.mxu0 0
    %1011 = vmatpush.bf16.xpose.msra.mxu0 0
    %1012 = vmatpush.bf16.xpose.msra.mxu0 0
    %1013 = vmatpush.bf16.xpose.msra.mxu0 %v372
    %1014 = vmatpush.bf16.xpose.msra.mxu0 %v371
    %1015 = vmatmul.bf16.gmra.mxu0 %v1003
    %v1016 = vpop.f32.mrf.mxu0
    %v1017 = vadd.f32 %v113, %v1016
    %v1018 = vpop.f32.mrf.mxu0
    %v1019 = vadd.f32 %v114, %v1018
    %1020 = vmatmul.bf16.gmra.mxu0 %v1004
    %v1021 = vpop.f32.mrf.mxu0
    %v1022 = vadd.f32 %v115, %v1021
    %v1023 = vpop.f32.mrf.mxu0
    %v1024 = vadd.f32 %v116, %v1023
    %1025 = vdwg.mxu0
    %vm1026 = vcmask 261120
    %v1027 = vsel %vm1026, %v1017, -inf
    %1028 = vmax.xlane.f32.xlu0 %v1027
    %v1029 = vpop.xlane.xlu0 %1028
    %v1030 = vsel %vm1026, %v1019, -inf
    %1031 = vmax.xlane.f32.xlu0 %v1030
    %v1032 = vpop.xlane.xlu0 %1031
    %v1033 = vsel %vm1026, %v1022, -inf
    %1034 = vmax.xlane.f32.xlu0 %v1033
    %v1035 = vpop.xlane.xlu0 %1034
    %v1036 = vsel %vm1026, %v1024, -inf
    %1037 = vmax.xlane.f32.xlu0 %v1036
    %v1038 = vpop.xlane.xlu0 %1037
    %v1039 = vsub.f32 %v1017, %v1029
    %v1040 = vsub.f32 %v1019, %v1032
    %v1041 = vsub.f32 %v1022, %v1035
    %v1042 = vsub.f32 %v1024, %v1038
    %v1043 = vmul.f32 %v1039, 1.442695
    %v1044 = vpow.pop %v1043
    %v1045 = vmul.f32 %v1040, 1.442695
    %v1046 = vpow.pop %v1045
    %v1047 = vmul.f32 %v1041, 1.442695
    %v1048 = vpow.pop %v1047
    %v1049 = vmul.f32 %v1042, 1.442695
    %v1050 = vpow.pop %v1049
    %v1051 = vsel %vm1026, %v1044, 0.0
    %1052 = vadd.xlane.f32.xlu0 %v1051
    %v1053 = vpop.xlane.xlu0 %1052
    %v1054 = vsel %vm1026, %v1046, 0.0
    %1055 = vadd.xlane.f32.xlu0 %v1054
    %v1056 = vpop.xlane.xlu0 %1055
    %v1057 = vsel %vm1026, %v1048, 0.0
    %1058 = vadd.xlane.f32.xlu0 %v1057
    %v1059 = vpop.xlane.xlu0 %1058
    %v1060 = vsel %vm1026, %v1050, 0.0
    %1061 = vadd.xlane.f32.xlu0 %v1060
    %v1062 = vpop.xlane.xlu0 %1061
    %v1063 = vrcp.pop %v1053
    %v1064 = vrcp.pop %v1056
    %v1065 = vrcp.pop %v1059
    %v1066 = vrcp.pop %v1062
    %v1067 = vmul.f32 %v1044, %v1063
    %v1068 = vmul.f32 %v1046, %v1064
    %v1069 = vmul.f32 %v1048, %v1065
    %v1070 = vmul.f32 %v1050, %v1066
    %v1071 = vpack.c.bf16 %v1068, %v1067
    %v1072 = vpack.c.bf16 %v1070, %v1069
    %v1073 = vunpack.c.h.b16 %v655
    %v1074 = vunpack.c.h.b16 %v657
    %v1075 = vunpack.c.h.b16 %v659
    %v1076 = vunpack.c.h.b16 %v661
    %v1077 = vpack.c.b16 %v1074, %v1073
    %v1078 = vpack.c.b16 %v1076, %v1075
    %1081 = vmatpush.bf16.xpose.msra.mxu0 0
    %1082 = vmatpush.bf16.xpose.msra.mxu0 0
    %1083 = vmatpush.bf16.xpose.msra.mxu0 0
    %1084 = vmatpush.bf16.xpose.msra.mxu0 0
    %1085 = vmatpush.bf16.xpose.msra.mxu0 0
    %1086 = vmatpush.bf16.xpose.msra.mxu0 0
    %1087 = vmatpush.bf16.xpose.msra.mxu0 %v372
    %1088 = vmatpush.bf16.xpose.msra.mxu0 %v371
    %1089 = vmatmul.bf16.gmra.mxu0 %v1077
    %v1090 = vpop.f32.mrf.mxu0
    %v1091 = vadd.f32 %v113, %v1090
    %v1092 = vpop.f32.mrf.mxu0
    %v1093 = vadd.f32 %v114, %v1092
    %1094 = vmatmul.bf16.gmra.mxu0 %v1078
    %v1095 = vpop.f32.mrf.mxu0
    %v1096 = vadd.f32 %v115, %v1095
    %v1097 = vpop.f32.mrf.mxu0
    %v1098 = vadd.f32 %v116, %v1097
    %1099 = vdwg.mxu0
    %v1100 = vsel %vm1026, %v1091, -inf
    %1101 = vmax.xlane.f32.xlu0 %v1100
    %v1102 = vpop.xlane.xlu0 %1101
    %v1103 = vsel %vm1026, %v1093, -inf
    %1104 = vmax.xlane.f32.xlu0 %v1103
    %v1105 = vpop.xlane.xlu0 %1104
    %v1106 = vsel %vm1026, %v1096, -inf
    %1107 = vmax.xlane.f32.xlu0 %v1106
    %v1108 = vpop.xlane.xlu0 %1107
    %v1109 = vsel %vm1026, %v1098, -inf
    %1110 = vmax.xlane.f32.xlu0 %v1109
    %v1111 = vpop.xlane.xlu0 %1110
    %v1112 = vsub.f32 %v1091, %v1102
    %v1113 = vsub.f32 %v1093, %v1105
    %v1114 = vsub.f32 %v1096, %v1108
    %v1115 = vsub.f32 %v1098, %v1111
    %v1116 = vmul.f32 %v1112, 1.442695
    %v1117 = vpow.pop %v1116
    %v1118 = vmul.f32 %v1113, 1.442695
    %v1119 = vpow.pop %v1118
    %v1120 = vmul.f32 %v1114, 1.442695
    %v1121 = vpow.pop %v1120
    %v1122 = vmul.f32 %v1115, 1.442695
    %v1123 = vpow.pop %v1122
    %v1124 = vsel %vm1026, %v1117, 0.0
    %1125 = vadd.xlane.f32.xlu0 %v1124
    %v1126 = vpop.xlane.xlu0 %1125
    %v1127 = vsel %vm1026, %v1119, 0.0
    %1128 = vadd.xlane.f32.xlu0 %v1127
    %v1129 = vpop.xlane.xlu0 %1128
    %v1130 = vsel %vm1026, %v1121, 0.0
    %1131 = vadd.xlane.f32.xlu0 %v1130
    %v1132 = vpop.xlane.xlu0 %1131
    %v1133 = vsel %vm1026, %v1123, 0.0
    %1134 = vadd.xlane.f32.xlu0 %v1133
    %v1135 = vpop.xlane.xlu0 %1134
    %v1136 = vrcp.pop %v1126
    %v1137 = vrcp.pop %v1129
    %v1138 = vrcp.pop %v1132
    %v1139 = vrcp.pop %v1135
    %v1140 = vmul.f32 %v1117, %v1136
    %v1141 = vmul.f32 %v1119, %v1137
    %v1142 = vmul.f32 %v1121, %v1138
    %v1143 = vmul.f32 %v1123, %v1139
    %v1144 = vpack.c.bf16 %v1141, %v1140
    %v1145 = vpack.c.bf16 %v1143, %v1142
    %v1150 = vunpack.c.h.b16 %v979
    %v1151 = vunpack.c.h.b16 %v981
    %v1152 = vunpack.c.h.b16 %v983
    %v1153 = vunpack.c.h.b16 %v985
    %v1154 = vpack.c.b16 %v1151, %v1150
    %v1155 = vpack.c.b16 %v1153, %v1152
    %v1159 = vsel %vm1026, %v1144, 0
    %v1162 = vsel %vm1026, %v1145, 0
    %1164 = vmatpush.bf16.msra.mxu0 0
    %1165 = vmatpush.bf16.msra.mxu0 0
    %1166 = vmatpush.bf16.msra.mxu0 0
    %1167 = vmatpush.bf16.msra.mxu0 0
    %1168 = vmatpush.bf16.msra.mxu0 0
    %1169 = vmatpush.bf16.msra.mxu0 0
    %1170 = vmatpush.bf16.msra.mxu0 %v1155
    %1171 = vmatpush.bf16.msra.mxu0 %v1154
    %1172 = vmatmul.bf16.gmra.mxu0 %v1159
    %v1173 = vpop.f32.mrf.mxu0
    %v1174 = vadd.f32 0.0, %v1173
    %v1175 = vpop.f32.mrf.mxu0
    %v1176 = vadd.f32 0.0, %v1175
    %1177 = vmatmul.bf16.gmra.mxu0 %v1162
    %v1178 = vpop.f32.mrf.mxu0
    %v1179 = vadd.f32 0.0, %v1178
    %v1180 = vpop.f32.mrf.mxu0
    %v1181 = vadd.f32 0.0, %v1180
    %1182 = vdwg.mxu0
    %v1183 = vunpack.c.l.b16 %v979
    %v1184 = vunpack.c.l.b16 %v981
    %v1185 = vunpack.c.l.b16 %v983
    %v1186 = vunpack.c.l.b16 %v985
    %v1187 = vpack.c.b16 %v1184, %v1183
    %v1188 = vpack.c.b16 %v1186, %v1185
    %v1192 = vsel %vm1026, %v1071, 0
    %v1195 = vsel %vm1026, %v1072, 0
    %1197 = vmatpush.bf16.msra.mxu0 0
    %1198 = vmatpush.bf16.msra.mxu0 0
    %1199 = vmatpush.bf16.msra.mxu0 0
    %1200 = vmatpush.bf16.msra.mxu0 0
    %1201 = vmatpush.bf16.msra.mxu0 0
    %1202 = vmatpush.bf16.msra.mxu0 0
    %1203 = vmatpush.bf16.msra.mxu0 %v1188
    %1204 = vmatpush.bf16.msra.mxu0 %v1187
    %1205 = vmatmul.bf16.gmra.mxu0 %v1192
    %v1206 = vpop.f32.mrf.mxu0
    %v1207 = vadd.f32 %v1174, %v1206
    %v1208 = vpop.f32.mrf.mxu0
    %v1209 = vadd.f32 %v1176, %v1208
    %1210 = vmatmul.bf16.gmra.mxu0 %v1195
    %v1211 = vpop.f32.mrf.mxu0
    %v1212 = vadd.f32 %v1179, %v1211
    %v1213 = vpop.f32.mrf.mxu0
    %v1214 = vadd.f32 %v1181, %v1213
    %1215 = vdwg.mxu0
    %v1220 = vunpack.c.l.b16 %v656
    %v1221 = vunpack.c.l.b16 %v658
    %v1222 = vunpack.c.l.b16 %v660
    %v1223 = vunpack.c.l.b16 %v662
    %v1224 = vpack.c.b16 %v1221, %v1220
    %v1225 = vpack.c.b16 %v1223, %v1222
    %1228 = vmatpush.bf16.xpose.msra.mxu0 0
    %1229 = vmatpush.bf16.xpose.msra.mxu0 0
    %1230 = vmatpush.bf16.xpose.msra.mxu0 0
    %1231 = vmatpush.bf16.xpose.msra.mxu0 0
    %1232 = vmatpush.bf16.xpose.msra.mxu0 0
    %1233 = vmatpush.bf16.xpose.msra.mxu0 0
    %1234 = vmatpush.bf16.xpose.msra.mxu0 %v372
    %1235 = vmatpush.bf16.xpose.msra.mxu0 %v371
    %1236 = vmatmul.bf16.gmra.mxu0 %v1224
    %v1237 = vpop.f32.mrf.mxu0
    %v1238 = vadd.f32 %v113, %v1237
    %v1239 = vpop.f32.mrf.mxu0
    %v1240 = vadd.f32 %v114, %v1239
    %1241 = vmatmul.bf16.gmra.mxu0 %v1225
    %v1242 = vpop.f32.mrf.mxu0
    %v1243 = vadd.f32 %v115, %v1242
    %v1244 = vpop.f32.mrf.mxu0
    %v1245 = vadd.f32 %v116, %v1244
    %1246 = vdwg.mxu0
    %v1247 = vsel %vm1026, %v1238, -inf
    %1248 = vmax.xlane.f32.xlu0 %v1247
    %v1249 = vpop.xlane.xlu0 %1248
    %v1250 = vsel %vm1026, %v1240, -inf
    %1251 = vmax.xlane.f32.xlu0 %v1250
    %v1252 = vpop.xlane.xlu0 %1251
    %v1253 = vsel %vm1026, %v1243, -inf
    %1254 = vmax.xlane.f32.xlu0 %v1253
    %v1255 = vpop.xlane.xlu0 %1254
    %v1256 = vsel %vm1026, %v1245, -inf
    %1257 = vmax.xlane.f32.xlu0 %v1256
    %v1258 = vpop.xlane.xlu0 %1257
    %v1259 = vsub.f32 %v1238, %v1249
    %v1260 = vsub.f32 %v1240, %v1252
    %v1261 = vsub.f32 %v1243, %v1255
    %v1262 = vsub.f32 %v1245, %v1258
    %v1263 = vmul.f32 %v1259, 1.442695
    %v1264 = vpow.pop %v1263
    %v1265 = vmul.f32 %v1260, 1.442695
    %v1266 = vpow.pop %v1265
    %v1267 = vmul.f32 %v1261, 1.442695
    %v1268 = vpow.pop %v1267
    %v1269 = vmul.f32 %v1262, 1.442695
    %v1270 = vpow.pop %v1269
    %v1271 = vsel %vm1026, %v1264, 0.0
    %1272 = vadd.xlane.f32.xlu0 %v1271
    %v1273 = vpop.xlane.xlu0 %1272
    %v1274 = vsel %vm1026, %v1266, 0.0
    %1275 = vadd.xlane.f32.xlu0 %v1274
    %v1276 = vpop.xlane.xlu0 %1275
    %v1277 = vsel %vm1026, %v1268, 0.0
    %1278 = vadd.xlane.f32.xlu0 %v1277
    %v1279 = vpop.xlane.xlu0 %1278
    %v1280 = vsel %vm1026, %v1270, 0.0
    %1281 = vadd.xlane.f32.xlu0 %v1280
    %v1282 = vpop.xlane.xlu0 %1281
    %v1283 = vrcp.pop %v1273
    %v1284 = vrcp.pop %v1276
    %v1285 = vrcp.pop %v1279
    %v1286 = vrcp.pop %v1282
    %v1287 = vmul.f32 %v1264, %v1283
    %v1288 = vmul.f32 %v1266, %v1284
    %v1289 = vmul.f32 %v1268, %v1285
    %v1290 = vmul.f32 %v1270, %v1286
    %v1291 = vpack.c.bf16 %v1288, %v1287
    %v1292 = vpack.c.bf16 %v1290, %v1289
    %v1297 = vunpack.c.l.b16 %v980
    %v1298 = vunpack.c.l.b16 %v982
    %v1299 = vunpack.c.l.b16 %v984
    %v1300 = vunpack.c.l.b16 %v986
    %v1301 = vpack.c.b16 %v1298, %v1297
    %v1302 = vpack.c.b16 %v1300, %v1299
    %v1306 = vsel %vm1026, %v1291, 0
    %v1309 = vsel %vm1026, %v1292, 0
    %1311 = vmatpush.bf16.msra.mxu0 0
    %1312 = vmatpush.bf16.msra.mxu0 0
    %1313 = vmatpush.bf16.msra.mxu0 0
    %1314 = vmatpush.bf16.msra.mxu0 0
    %1315 = vmatpush.bf16.msra.mxu0 0
    %1316 = vmatpush.bf16.msra.mxu0 0
    %1317 = vmatpush.bf16.msra.mxu0 %v1302
    %1318 = vmatpush.bf16.msra.mxu0 %v1301
    %1319 = vmatmul.bf16.gmra.mxu0 %v1306
    %v1320 = vpop.f32.mrf.mxu0
    %v1321 = vadd.f32 0.0, %v1320
    %v1322 = vpop.f32.mrf.mxu0
    %v1323 = vadd.f32 0.0, %v1322
    %1324 = vmatmul.bf16.gmra.mxu0 %v1309
    %v1325 = vpop.f32.mrf.mxu0
    %v1326 = vadd.f32 0.0, %v1325
    %v1327 = vpop.f32.mrf.mxu0
    %v1328 = vadd.f32 0.0, %v1327
    %1329 = vdwg.mxu0
    %v1330 = vadd.f32 %v1207, %v1321
    %v1331 = vadd.f32 %v1209, %v1323
    %v1332 = vadd.f32 %v1212, %v1326
    %v1333 = vadd.f32 %v1214, %v1328
    %v1334 = vunpack.c.h.b16 %v656
    %v1335 = vunpack.c.h.b16 %v658
    %v1336 = vunpack.c.h.b16 %v660
    %v1337 = vunpack.c.h.b16 %v662
    %v1338 = vpack.c.b16 %v1335, %v1334
    %v1339 = vpack.c.b16 %v1337, %v1336
    %1342 = vmatpush.bf16.xpose.msra.mxu0 0
    %1343 = vmatpush.bf16.xpose.msra.mxu0 0
    %1344 = vmatpush.bf16.xpose.msra.mxu0 0
    %1345 = vmatpush.bf16.xpose.msra.mxu0 0
    %1346 = vmatpush.bf16.xpose.msra.mxu0 0
    %1347 = vmatpush.bf16.xpose.msra.mxu0 0
    %1348 = vmatpush.bf16.xpose.msra.mxu0 %v372
    %1349 = vmatpush.bf16.xpose.msra.mxu0 %v371
    %1350 = vmatmul.bf16.gmra.mxu0 %v1338
    %v1351 = vpop.f32.mrf.mxu0
    %v1352 = vadd.f32 %v113, %v1351
    %v1353 = vpop.f32.mrf.mxu0
    %v1354 = vadd.f32 %v114, %v1353
    %1355 = vmatmul.bf16.gmra.mxu0 %v1339
    %v1356 = vpop.f32.mrf.mxu0
    %v1357 = vadd.f32 %v115, %v1356
    %v1358 = vpop.f32.mrf.mxu0
    %v1359 = vadd.f32 %v116, %v1358
    %1360 = vdwg.mxu0
    %v1361 = vsel %vm1026, %v1352, -inf
    %1362 = vmax.xlane.f32.xlu0 %v1361
    %v1363 = vpop.xlane.xlu0 %1362
    %v1364 = vsel %vm1026, %v1354, -inf
    %1365 = vmax.xlane.f32.xlu0 %v1364
    %v1366 = vpop.xlane.xlu0 %1365
    %v1367 = vsel %vm1026, %v1357, -inf
    %1368 = vmax.xlane.f32.xlu0 %v1367
    %v1369 = vpop.xlane.xlu0 %1368
    %v1370 = vsel %vm1026, %v1359, -inf
    %1371 = vmax.xlane.f32.xlu0 %v1370
    %v1372 = vpop.xlane.xlu0 %1371
    %v1373 = vsub.f32 %v1352, %v1363
    %v1374 = vsub.f32 %v1354, %v1366
    %v1375 = vsub.f32 %v1357, %v1369
    %v1376 = vsub.f32 %v1359, %v1372
    %v1377 = vmul.f32 %v1373, 1.442695
    %v1378 = vpow.pop %v1377
    %v1379 = vmul.f32 %v1374, 1.442695
    %v1380 = vpow.pop %v1379
    %v1381 = vmul.f32 %v1375, 1.442695
    %v1382 = vpow.pop %v1381
    %v1383 = vmul.f32 %v1376, 1.442695
    %v1384 = vpow.pop %v1383
    %v1385 = vsel %vm1026, %v1378, 0.0
    %1386 = vadd.xlane.f32.xlu0 %v1385
    %v1387 = vpop.xlane.xlu0 %1386
    %v1388 = vsel %vm1026, %v1380, 0.0
    %1389 = vadd.xlane.f32.xlu0 %v1388
    %v1390 = vpop.xlane.xlu0 %1389
    %v1391 = vsel %vm1026, %v1382, 0.0
    %1392 = vadd.xlane.f32.xlu0 %v1391
    %v1393 = vpop.xlane.xlu0 %1392
    %v1394 = vsel %vm1026, %v1384, 0.0
    %1395 = vadd.xlane.f32.xlu0 %v1394
    %v1396 = vpop.xlane.xlu0 %1395
    %v1397 = vrcp.pop %v1387
    %v1398 = vrcp.pop %v1390
    %v1399 = vrcp.pop %v1393
    %v1400 = vrcp.pop %v1396
    %v1401 = vmul.f32 %v1378, %v1397
    %v1402 = vmul.f32 %v1380, %v1398
    %v1403 = vmul.f32 %v1382, %v1399
    %v1404 = vmul.f32 %v1384, %v1400
    %v1405 = vpack.c.bf16 %v1402, %v1401
    %v1406 = vpack.c.bf16 %v1404, %v1403
    %v1407 = vunpack.c.h.b16 %v980
    %v1408 = vunpack.c.h.b16 %v982
    %v1409 = vunpack.c.h.b16 %v984
    %v1410 = vunpack.c.h.b16 %v986
    %v1411 = vpack.c.b16 %v1408, %v1407
    %v1412 = vpack.c.b16 %v1410, %v1409
    %v1416 = vsel %vm1026, %v1405, 0
    %v1419 = vsel %vm1026, %v1406, 0
    %1421 = vmatpush.bf16.msra.mxu0 0
    %1422 = vmatpush.bf16.msra.mxu0 0
    %1423 = vmatpush.bf16.msra.mxu0 0
    %1424 = vmatpush.bf16.msra.mxu0 0
    %1425 = vmatpush.bf16.msra.mxu0 0
    %1426 = vmatpush.bf16.msra.mxu0 0
    %1427 = vmatpush.bf16.msra.mxu0 %v1412
    %1428 = vmatpush.bf16.msra.mxu0 %v1411
    %1429 = vmatmul.bf16.gmra.mxu0 %v1416
    %v1430 = vpop.f32.mrf.mxu0
    %v1431 = vadd.f32 0.0, %v1430
    %v1432 = vpop.f32.mrf.mxu0
    %v1433 = vadd.f32 0.0, %v1432
    %1434 = vmatmul.bf16.gmra.mxu0 %v1419
    %v1435 = vpop.f32.mrf.mxu0
    %v1436 = vadd.f32 0.0, %v1435
    %v1437 = vpop.f32.mrf.mxu0
    %v1438 = vadd.f32 0.0, %v1437
    %1439 = vdwg.mxu0
    %v1440 = vadd.f32 %v1330, %v1431
    %v1441 = vadd.f32 %v1331, %v1433
    %v1442 = vadd.f32 %v1332, %v1436
    %v1443 = vadd.f32 %v1333, %v1438
    %v1448 = vunpack.c.l.b16 %v663
    %v1449 = vunpack.c.l.b16 %v665
    %v1450 = vunpack.c.l.b16 %v667
    %v1451 = vunpack.c.l.b16 %v669
    %v1452 = vpack.c.b16 %v1449, %v1448
    %v1453 = vpack.c.b16 %v1451, %v1450
    %1456 = vmatpush.bf16.xpose.msra.mxu0 0
    %1457 = vmatpush.bf16.xpose.msra.mxu0 0
    %1458 = vmatpush.bf16.xpose.msra.mxu0 0
    %1459 = vmatpush.bf16.xpose.msra.mxu0 0
    %1460 = vmatpush.bf16.xpose.msra.mxu0 0
    %1461 = vmatpush.bf16.xpose.msra.mxu0 0
    %1462 = vmatpush.bf16.xpose.msra.mxu0 %v374
    %1463 = vmatpush.bf16.xpose.msra.mxu0 %v373
    %1464 = vmatmul.bf16.gmra.mxu0 %v1452
    %v1465 = vpop.f32.mrf.mxu0
    %v1466 = vadd.f32 %v113, %v1465
    %v1467 = vpop.f32.mrf.mxu0
    %v1468 = vadd.f32 %v114, %v1467
    %1469 = vmatmul.bf16.gmra.mxu0 %v1453
    %v1470 = vpop.f32.mrf.mxu0
    %v1471 = vadd.f32 %v115, %v1470
    %v1472 = vpop.f32.mrf.mxu0
    %v1473 = vadd.f32 %v116, %v1472
    %1474 = vdwg.mxu0
    %v1475 = vsel %vm1026, %v1466, -inf
    %1476 = vmax.xlane.f32.xlu0 %v1475
    %v1477 = vpop.xlane.xlu0 %1476
    %v1478 = vsel %vm1026, %v1468, -inf
    %1479 = vmax.xlane.f32.xlu0 %v1478
    %v1480 = vpop.xlane.xlu0 %1479
    %v1481 = vsel %vm1026, %v1471, -inf
    %1482 = vmax.xlane.f32.xlu0 %v1481
    %v1483 = vpop.xlane.xlu0 %1482
    %v1484 = vsel %vm1026, %v1473, -inf
    %1485 = vmax.xlane.f32.xlu0 %v1484
    %v1486 = vpop.xlane.xlu0 %1485
    %v1487 = vsub.f32 %v1466, %v1477
    %v1488 = vsub.f32 %v1468, %v1480
    %v1489 = vsub.f32 %v1471, %v1483
    %v1490 = vsub.f32 %v1473, %v1486
    %v1491 = vmul.f32 %v1487, 1.442695
    %v1492 = vpow.pop %v1491
    %v1493 = vmul.f32 %v1488, 1.442695
    %v1494 = vpow.pop %v1493
    %v1495 = vmul.f32 %v1489, 1.442695
    %v1496 = vpow.pop %v1495
    %v1497 = vmul.f32 %v1490, 1.442695
    %v1498 = vpow.pop %v1497
    %v1499 = vsel %vm1026, %v1492, 0.0
    %1500 = vadd.xlane.f32.xlu0 %v1499
    %v1501 = vpop.xlane.xlu0 %1500
    %v1502 = vsel %vm1026, %v1494, 0.0
    %1503 = vadd.xlane.f32.xlu0 %v1502
    %v1504 = vpop.xlane.xlu0 %1503
    %v1505 = vsel %vm1026, %v1496, 0.0
    %1506 = vadd.xlane.f32.xlu0 %v1505
    %v1507 = vpop.xlane.xlu0 %1506
    %v1508 = vsel %vm1026, %v1498, 0.0
    %1509 = vadd.xlane.f32.xlu0 %v1508
    %v1510 = vpop.xlane.xlu0 %1509
    %v1511 = vrcp.pop %v1501
    %v1512 = vrcp.pop %v1504
    %v1513 = vrcp.pop %v1507
    %v1514 = vrcp.pop %v1510
    %v1515 = vmul.f32 %v1492, %v1511
    %v1516 = vmul.f32 %v1494, %v1512
    %v1517 = vmul.f32 %v1496, %v1513
    %v1518 = vmul.f32 %v1498, %v1514
    %v1519 = vpack.c.bf16 %v1516, %v1515
    %v1520 = vpack.c.bf16 %v1518, %v1517
    %v1521 = vunpack.c.h.b16 %v663
    %v1522 = vunpack.c.h.b16 %v665
    %v1523 = vunpack.c.h.b16 %v667
    %v1524 = vunpack.c.h.b16 %v669
    %v1525 = vpack.c.b16 %v1522, %v1521
    %v1526 = vpack.c.b16 %v1524, %v1523
    %1529 = vmatpush.bf16.xpose.msra.mxu0 0
    %1530 = vmatpush.bf16.xpose.msra.mxu0 0
    %1531 = vmatpush.bf16.xpose.msra.mxu0 0
    %1532 = vmatpush.bf16.xpose.msra.mxu0 0
    %1533 = vmatpush.bf16.xpose.msra.mxu0 0
    %1534 = vmatpush.bf16.xpose.msra.mxu0 0
    %1535 = vmatpush.bf16.xpose.msra.mxu0 %v374
    %1536 = vmatpush.bf16.xpose.msra.mxu0 %v373
    %1537 = vmatmul.bf16.gmra.mxu0 %v1525
    %v1538 = vpop.f32.mrf.mxu0
    %v1539 = vadd.f32 %v113, %v1538
    %v1540 = vpop.f32.mrf.mxu0
    %v1541 = vadd.f32 %v114, %v1540
    %1542 = vmatmul.bf16.gmra.mxu0 %v1526
    %v1543 = vpop.f32.mrf.mxu0
    %v1544 = vadd.f32 %v115, %v1543
    %v1545 = vpop.f32.mrf.mxu0
    %v1546 = vadd.f32 %v116, %v1545
    %1547 = vdwg.mxu0
    %v1548 = vsel %vm1026, %v1539, -inf
    %1549 = vmax.xlane.f32.xlu0 %v1548
    %v1550 = vpop.xlane.xlu0 %1549
    %v1551 = vsel %vm1026, %v1541, -inf
    %1552 = vmax.xlane.f32.xlu0 %v1551
    %v1553 = vpop.xlane.xlu0 %1552
    %v1554 = vsel %vm1026, %v1544, -inf
    %1555 = vmax.xlane.f32.xlu0 %v1554
    %v1556 = vpop.xlane.xlu0 %1555
    %v1557 = vsel %vm1026, %v1546, -inf
    %1558 = vmax.xlane.f32.xlu0 %v1557
    %v1559 = vpop.xlane.xlu0 %1558
    %v1560 = vsub.f32 %v1539, %v1550
    %v1561 = vsub.f32 %v1541, %v1553
    %v1562 = vsub.f32 %v1544, %v1556
    %v1563 = vsub.f32 %v1546, %v1559
    %v1564 = vmul.f32 %v1560, 1.442695
    %v1565 = vpow.pop %v1564
    %v1566 = vmul.f32 %v1561, 1.442695
    %v1567 = vpow.pop %v1566
    %v1568 = vmul.f32 %v1562, 1.442695
    %v1569 = vpow.pop %v1568
    %v1570 = vmul.f32 %v1563, 1.442695
    %v1571 = vpow.pop %v1570
    %v1572 = vsel %vm1026, %v1565, 0.0
    %1573 = vadd.xlane.f32.xlu0 %v1572
    %v1574 = vpop.xlane.xlu0 %1573
    %v1575 = vsel %vm1026, %v1567, 0.0
    %1576 = vadd.xlane.f32.xlu0 %v1575
    %v1577 = vpop.xlane.xlu0 %1576
    %v1578 = vsel %vm1026, %v1569, 0.0
    %1579 = vadd.xlane.f32.xlu0 %v1578
    %v1580 = vpop.xlane.xlu0 %1579
    %v1581 = vsel %vm1026, %v1571, 0.0
    %1582 = vadd.xlane.f32.xlu0 %v1581
    %v1583 = vpop.xlane.xlu0 %1582
    %v1584 = vrcp.pop %v1574
    %v1585 = vrcp.pop %v1577
    %v1586 = vrcp.pop %v1580
    %v1587 = vrcp.pop %v1583
    %v1588 = vmul.f32 %v1565, %v1584
    %v1589 = vmul.f32 %v1567, %v1585
    %v1590 = vmul.f32 %v1569, %v1586
    %v1591 = vmul.f32 %v1571, %v1587
    %v1592 = vpack.c.bf16 %v1589, %v1588
    %v1593 = vpack.c.bf16 %v1591, %v1590
    %v1598 = vunpack.c.h.b16 %v987
    %v1599 = vunpack.c.h.b16 %v989
    %v1600 = vunpack.c.h.b16 %v991
    %v1601 = vunpack.c.h.b16 %v993
    %v1602 = vpack.c.b16 %v1599, %v1598
    %v1603 = vpack.c.b16 %v1601, %v1600
    %v1607 = vsel %vm1026, %v1592, 0
    %v1610 = vsel %vm1026, %v1593, 0
    %1612 = vmatpush.bf16.msra.mxu0 0
    %1613 = vmatpush.bf16.msra.mxu0 0
    %1614 = vmatpush.bf16.msra.mxu0 0
    %1615 = vmatpush.bf16.msra.mxu0 0
    %1616 = vmatpush.bf16.msra.mxu0 0
    %1617 = vmatpush.bf16.msra.mxu0 0
    %1618 = vmatpush.bf16.msra.mxu0 %v1603
    %1619 = vmatpush.bf16.msra.mxu0 %v1602
    %1620 = vmatmul.bf16.gmra.mxu0 %v1607
    %v1621 = vpop.f32.mrf.mxu0
    %v1622 = vadd.f32 0.0, %v1621
    %v1623 = vpop.f32.mrf.mxu0
    %v1624 = vadd.f32 0.0, %v1623
    %1625 = vmatmul.bf16.gmra.mxu0 %v1610
    %v1626 = vpop.f32.mrf.mxu0
    %v1627 = vadd.f32 0.0, %v1626
    %v1628 = vpop.f32.mrf.mxu0
    %v1629 = vadd.f32 0.0, %v1628
    %1630 = vdwg.mxu0
    %v1631 = vunpack.c.l.b16 %v987
    %v1632 = vunpack.c.l.b16 %v989
    %v1633 = vunpack.c.l.b16 %v991
    %v1634 = vunpack.c.l.b16 %v993
    %v1635 = vpack.c.b16 %v1632, %v1631
    %v1636 = vpack.c.b16 %v1634, %v1633
    %v1640 = vsel %vm1026, %v1519, 0
    %v1643 = vsel %vm1026, %v1520, 0
    %1645 = vmatpush.bf16.msra.mxu0 0
    %1646 = vmatpush.bf16.msra.mxu0 0
    %1647 = vmatpush.bf16.msra.mxu0 0
    %1648 = vmatpush.bf16.msra.mxu0 0
    %1649 = vmatpush.bf16.msra.mxu0 0
    %1650 = vmatpush.bf16.msra.mxu0 0
    %1651 = vmatpush.bf16.msra.mxu0 %v1636
    %1652 = vmatpush.bf16.msra.mxu0 %v1635
    %1653 = vmatmul.bf16.gmra.mxu0 %v1640
    %v1654 = vpop.f32.mrf.mxu0
    %v1655 = vadd.f32 %v1622, %v1654
    %v1656 = vpop.f32.mrf.mxu0
    %v1657 = vadd.f32 %v1624, %v1656
    %1658 = vmatmul.bf16.gmra.mxu0 %v1643
    %v1659 = vpop.f32.mrf.mxu0
    %v1660 = vadd.f32 %v1627, %v1659
    %v1661 = vpop.f32.mrf.mxu0
    %v1662 = vadd.f32 %v1629, %v1661
    %1663 = vdwg.mxu0
    %v1668 = vunpack.c.l.b16 %v664
    %v1669 = vunpack.c.l.b16 %v666
    %v1670 = vunpack.c.l.b16 %v668
    %v1671 = vunpack.c.l.b16 %v670
    %v1672 = vpack.c.b16 %v1669, %v1668
    %v1673 = vpack.c.b16 %v1671, %v1670
    %1676 = vmatpush.bf16.xpose.msra.mxu0 0
    %1677 = vmatpush.bf16.xpose.msra.mxu0 0
    %1678 = vmatpush.bf16.xpose.msra.mxu0 0
    %1679 = vmatpush.bf16.xpose.msra.mxu0 0
    %1680 = vmatpush.bf16.xpose.msra.mxu0 0
    %1681 = vmatpush.bf16.xpose.msra.mxu0 0
    %1682 = vmatpush.bf16.xpose.msra.mxu0 %v374
    %1683 = vmatpush.bf16.xpose.msra.mxu0 %v373
    %1684 = vmatmul.bf16.gmra.mxu0 %v1672
    %v1685 = vpop.f32.mrf.mxu0
    %v1686 = vadd.f32 %v113, %v1685
    %v1687 = vpop.f32.mrf.mxu0
    %v1688 = vadd.f32 %v114, %v1687
    %1689 = vmatmul.bf16.gmra.mxu0 %v1673
    %v1690 = vpop.f32.mrf.mxu0
    %v1691 = vadd.f32 %v115, %v1690
    %v1692 = vpop.f32.mrf.mxu0
    %v1693 = vadd.f32 %v116, %v1692
    %1694 = vdwg.mxu0
    %v1695 = vsel %vm1026, %v1686, -inf
    %1696 = vmax.xlane.f32.xlu0 %v1695
    %v1697 = vpop.xlane.xlu0 %1696
    %v1698 = vsel %vm1026, %v1688, -inf
    %1699 = vmax.xlane.f32.xlu0 %v1698
    %v1700 = vpop.xlane.xlu0 %1699
    %v1701 = vsel %vm1026, %v1691, -inf
    %1702 = vmax.xlane.f32.xlu0 %v1701
    %v1703 = vpop.xlane.xlu0 %1702
    %v1704 = vsel %vm1026, %v1693, -inf
    %1705 = vmax.xlane.f32.xlu0 %v1704
    %v1706 = vpop.xlane.xlu0 %1705
    %v1707 = vsub.f32 %v1686, %v1697
    %v1708 = vsub.f32 %v1688, %v1700
    %v1709 = vsub.f32 %v1691, %v1703
    %v1710 = vsub.f32 %v1693, %v1706
    %v1711 = vmul.f32 %v1707, 1.442695
    %v1712 = vpow.pop %v1711
    %v1713 = vmul.f32 %v1708, 1.442695
    %v1714 = vpow.pop %v1713
    %v1715 = vmul.f32 %v1709, 1.442695
    %v1716 = vpow.pop %v1715
    %v1717 = vmul.f32 %v1710, 1.442695
    %v1718 = vpow.pop %v1717
    %v1719 = vsel %vm1026, %v1712, 0.0
    %1720 = vadd.xlane.f32.xlu0 %v1719
    %v1721 = vpop.xlane.xlu0 %1720
    %v1722 = vsel %vm1026, %v1714, 0.0
    %1723 = vadd.xlane.f32.xlu0 %v1722
    %v1724 = vpop.xlane.xlu0 %1723
    %v1725 = vsel %vm1026, %v1716, 0.0
    %1726 = vadd.xlane.f32.xlu0 %v1725
    %v1727 = vpop.xlane.xlu0 %1726
    %v1728 = vsel %vm1026, %v1718, 0.0
    %1729 = vadd.xlane.f32.xlu0 %v1728
    %v1730 = vpop.xlane.xlu0 %1729
    %v1731 = vrcp.pop %v1721
    %v1732 = vrcp.pop %v1724
    %v1733 = vrcp.pop %v1727
    %v1734 = vrcp.pop %v1730
    %v1735 = vmul.f32 %v1712, %v1731
    %v1736 = vmul.f32 %v1714, %v1732
    %v1737 = vmul.f32 %v1716, %v1733
    %v1738 = vmul.f32 %v1718, %v1734
    %v1739 = vpack.c.bf16 %v1736, %v1735
    %v1740 = vpack.c.bf16 %v1738, %v1737
    %v1745 = vunpack.c.l.b16 %v988
    %v1746 = vunpack.c.l.b16 %v990
    %v1747 = vunpack.c.l.b16 %v992
    %v1748 = vunpack.c.l.b16 %v994
    %v1749 = vpack.c.b16 %v1746, %v1745
    %v1750 = vpack.c.b16 %v1748, %v1747
    %v1754 = vsel %vm1026, %v1739, 0
    %v1757 = vsel %vm1026, %v1740, 0
    %1759 = vmatpush.bf16.msra.mxu0 0
    %1760 = vmatpush.bf16.msra.mxu0 0
    %1761 = vmatpush.bf16.msra.mxu0 0
    %1762 = vmatpush.bf16.msra.mxu0 0
    %1763 = vmatpush.bf16.msra.mxu0 0
    %1764 = vmatpush.bf16.msra.mxu0 0
    %1765 = vmatpush.bf16.msra.mxu0 %v1750
    %1766 = vmatpush.bf16.msra.mxu0 %v1749
    %1767 = vmatmul.bf16.gmra.mxu0 %v1754
    %v1768 = vpop.f32.mrf.mxu0
    %v1769 = vadd.f32 0.0, %v1768
    %v1770 = vpop.f32.mrf.mxu0
    %v1771 = vadd.f32 0.0, %v1770
    %1772 = vmatmul.bf16.gmra.mxu0 %v1757
    %v1773 = vpop.f32.mrf.mxu0
    %v1774 = vadd.f32 0.0, %v1773
    %v1775 = vpop.f32.mrf.mxu0
    %v1776 = vadd.f32 0.0, %v1775
    %1777 = vdwg.mxu0
    %v1778 = vadd.f32 %v1655, %v1769
    %v1779 = vadd.f32 %v1657, %v1771
    %v1780 = vadd.f32 %v1660, %v1774
    %v1781 = vadd.f32 %v1662, %v1776
    %v1782 = vunpack.c.h.b16 %v664
    %v1783 = vunpack.c.h.b16 %v666
    %v1784 = vunpack.c.h.b16 %v668
    %v1785 = vunpack.c.h.b16 %v670
    %v1786 = vpack.c.b16 %v1783, %v1782
    %v1787 = vpack.c.b16 %v1785, %v1784
    %1790 = vmatpush.bf16.xpose.msra.mxu0 0
    %1791 = vmatpush.bf16.xpose.msra.mxu0 0
    %1792 = vmatpush.bf16.xpose.msra.mxu0 0
    %1793 = vmatpush.bf16.xpose.msra.mxu0 0
    %1794 = vmatpush.bf16.xpose.msra.mxu0 0
    %1795 = vmatpush.bf16.xpose.msra.mxu0 0
    %1796 = vmatpush.bf16.xpose.msra.mxu0 %v374
    %1797 = vmatpush.bf16.xpose.msra.mxu0 %v373
    %1798 = vmatmul.bf16.gmra.mxu0 %v1786
    %v1799 = vpop.f32.mrf.mxu0
    %v1800 = vadd.f32 %v113, %v1799
    %v1801 = vpop.f32.mrf.mxu0
    %v1802 = vadd.f32 %v114, %v1801
    %1803 = vmatmul.bf16.gmra.mxu0 %v1787
    %v1804 = vpop.f32.mrf.mxu0
    %v1805 = vadd.f32 %v115, %v1804
    %v1806 = vpop.f32.mrf.mxu0
    %v1807 = vadd.f32 %v116, %v1806
    %1808 = vdwg.mxu0
    %v1809 = vsel %vm1026, %v1800, -inf
    %1810 = vmax.xlane.f32.xlu0 %v1809
    %v1811 = vpop.xlane.xlu0 %1810
    %v1812 = vsel %vm1026, %v1802, -inf
    %1813 = vmax.xlane.f32.xlu0 %v1812
    %v1814 = vpop.xlane.xlu0 %1813
    %v1815 = vsel %vm1026, %v1805, -inf
    %1816 = vmax.xlane.f32.xlu0 %v1815
    %v1817 = vpop.xlane.xlu0 %1816
    %v1818 = vsel %vm1026, %v1807, -inf
    %1819 = vmax.xlane.f32.xlu0 %v1818
    %v1820 = vpop.xlane.xlu0 %1819
    %v1821 = vsub.f32 %v1800, %v1811
    %v1822 = vsub.f32 %v1802, %v1814
    %v1823 = vsub.f32 %v1805, %v1817
    %v1824 = vsub.f32 %v1807, %v1820
    %v1825 = vmul.f32 %v1821, 1.442695
    %v1826 = vpow.pop %v1825
    %v1827 = vmul.f32 %v1822, 1.442695
    %v1828 = vpow.pop %v1827
    %v1829 = vmul.f32 %v1823, 1.442695
    %v1830 = vpow.pop %v1829
    %v1831 = vmul.f32 %v1824, 1.442695
    %v1832 = vpow.pop %v1831
    %v1833 = vsel %vm1026, %v1826, 0.0
    %1834 = vadd.xlane.f32.xlu0 %v1833
    %v1835 = vpop.xlane.xlu0 %1834
    %v1836 = vsel %vm1026, %v1828, 0.0
    %1837 = vadd.xlane.f32.xlu0 %v1836
    %v1838 = vpop.xlane.xlu0 %1837
    %v1839 = vsel %vm1026, %v1830, 0.0
    %1840 = vadd.xlane.f32.xlu0 %v1839
    %v1841 = vpop.xlane.xlu0 %1840
    %v1842 = vsel %vm1026, %v1832, 0.0
    %1843 = vadd.xlane.f32.xlu0 %v1842
    %v1844 = vpop.xlane.xlu0 %1843
    %v1845 = vrcp.pop %v1835
    %v1846 = vrcp.pop %v1838
    %v1847 = vrcp.pop %v1841
    %v1848 = vrcp.pop %v1844
    %v1849 = vmul.f32 %v1826, %v1845
    %v1850 = vmul.f32 %v1828, %v1846
    %v1851 = vmul.f32 %v1830, %v1847
    %v1852 = vmul.f32 %v1832, %v1848
    %v1853 = vpack.c.bf16 %v1850, %v1849
    %v1854 = vpack.c.bf16 %v1852, %v1851
    %v1855 = vunpack.c.h.b16 %v988
    %v1856 = vunpack.c.h.b16 %v990
    %v1857 = vunpack.c.h.b16 %v992
    %v1858 = vunpack.c.h.b16 %v994
    %v1859 = vpack.c.b16 %v1856, %v1855
    %v1860 = vpack.c.b16 %v1858, %v1857
    %v1864 = vsel %vm1026, %v1853, 0
    %v1867 = vsel %vm1026, %v1854, 0
    %1869 = vmatpush.bf16.msra.mxu0 0
    %1870 = vmatpush.bf16.msra.mxu0 0
    %1871 = vmatpush.bf16.msra.mxu0 0
    %1872 = vmatpush.bf16.msra.mxu0 0
    %1873 = vmatpush.bf16.msra.mxu0 0
    %1874 = vmatpush.bf16.msra.mxu0 0
    %1875 = vmatpush.bf16.msra.mxu0 %v1860
    %1876 = vmatpush.bf16.msra.mxu0 %v1859
    %1877 = vmatmul.bf16.gmra.mxu0 %v1864
    %v1878 = vpop.f32.mrf.mxu0
    %v1879 = vadd.f32 0.0, %v1878
    %v1880 = vpop.f32.mrf.mxu0
    %v1881 = vadd.f32 0.0, %v1880
    %1882 = vmatmul.bf16.gmra.mxu0 %v1867
    %v1883 = vpop.f32.mrf.mxu0
    %v1884 = vadd.f32 0.0, %v1883
    %v1885 = vpop.f32.mrf.mxu0
    %v1886 = vadd.f32 0.0, %v1885
    %1887 = vdwg.mxu0
    %v1888 = vadd.f32 %v1778, %v1879
    %v1889 = vadd.f32 %v1779, %v1881
    %v1890 = vadd.f32 %v1780, %v1884
    %v1891 = vadd.f32 %v1781, %v1886
    %v1892 = vadd.f32 %v103, %v1440
    %v1893 = vadd.f32 %v104, %v1441
    %v1894 = vadd.f32 %v105, %v1442
    %v1895 = vadd.f32 %v106, %v1443
    %v1896 = vadd.f32 %v107, %v1888
    %v1897 = vadd.f32 %v108, %v1889
    %v1898 = vadd.f32 %v109, %v1890
    %v1899 = vadd.f32 %v110, %v1891
    %v1900 = vld [vmem:[%s6] sm:$0x1]
    %v1902 = vperm.slane %v1900, 0
    %v1904 = vadd.f32 %v1892, %v1902
    %v1905 = vadd.f32 %v1893, %v1902
    %v1906 = vadd.f32 %v1894, %v1902
    %v1907 = vadd.f32 %v1895, %v1902
    %v1908 = vadd.f32 %v1896, %v1902
    %v1909 = vadd.f32 %v1897, %v1902
    %v1910 = vadd.f32 %v1898, %v1902
    %v1911 = vadd.f32 %v1899, %v1902
    %1912 = vadd.xlane.f32.xlu0 %v1904
    %v1913 = vpop.xlane.xlu0 %1912
    %1914 = vadd.xlane.f32.xlu0 %v1905
    %v1915 = vpop.xlane.xlu0 %1914
    %1916 = vadd.xlane.f32.xlu0 %v1906
    %v1917 = vpop.xlane.xlu0 %1916
    %1918 = vadd.xlane.f32.xlu0 %v1907
    %v1919 = vpop.xlane.xlu0 %1918
    %1920 = vadd.xlane.f32.xlu0 %v1908
    %v1921 = vpop.xlane.xlu0 %1920
    %1922 = vadd.xlane.f32.xlu0 %v1909
    %v1923 = vpop.xlane.xlu0 %1922
    %1924 = vadd.xlane.f32.xlu0 %v1910
    %v1925 = vpop.xlane.xlu0 %1924
    %1926 = vadd.xlane.f32.xlu0 %v1911
    %v1927 = vpop.xlane.xlu0 %1926
    %v1928 = vmul.f32 %v1913, 0.01
    %v1929 = vmul.f32 %v1915, 0.01
    %v1930 = vmul.f32 %v1917, 0.01
    %v1931 = vmul.f32 %v1919, 0.01
    %v1932 = vmul.f32 %v1921, 0.01
    %v1933 = vmul.f32 %v1923, 0.01
    %v1934 = vmul.f32 %v1925, 0.01
    %v1935 = vmul.f32 %v1927, 0.01
    %v1936 = vmul.f32 %v1904, %v1904
    %v1937 = vmul.f32 %v1905, %v1905
    %v1938 = vmul.f32 %v1906, %v1906
    %v1939 = vmul.f32 %v1907, %v1907
    %v1940 = vmul.f32 %v1908, %v1908
    %v1941 = vmul.f32 %v1909, %v1909
    %v1942 = vmul.f32 %v1910, %v1910
    %v1943 = vmul.f32 %v1911, %v1911
    %1944 = vadd.xlane.f32.xlu0 %v1936
    %v1945 = vpop.xlane.xlu0 %1944
    %1946 = vadd.xlane.f32.xlu0 %v1937
    %v1947 = vpop.xlane.xlu0 %1946
    %1948 = vadd.xlane.f32.xlu0 %v1938
    %v1949 = vpop.xlane.xlu0 %1948
    %1950 = vadd.xlane.f32.xlu0 %v1939
    %v1951 = vpop.xlane.xlu0 %1950
    %1952 = vadd.xlane.f32.xlu0 %v1940
    %v1953 = vpop.xlane.xlu0 %1952
    %1954 = vadd.xlane.f32.xlu0 %v1941
    %v1955 = vpop.xlane.xlu0 %1954
    %1956 = vadd.xlane.f32.xlu0 %v1942
    %v1957 = vpop.xlane.xlu0 %1956
    %1958 = vadd.xlane.f32.xlu0 %v1943
    %v1959 = vpop.xlane.xlu0 %1958
    %v1960 = vmul.f32 %v1945, 0.01
    %v1961 = vmul.f32 %v1947, 0.01
    %v1962 = vmul.f32 %v1949, 0.01
    %v1963 = vmul.f32 %v1951, 0.01
    %v1964 = vmul.f32 %v1953, 0.01
    %v1965 = vmul.f32 %v1955, 0.01
    %v1966 = vmul.f32 %v1957, 0.01
    %v1967 = vmul.f32 %v1959, 0.01
    %v1968 = vmul.f32 %v1928, %v1928
    %v1969 = vmul.f32 %v1929, %v1929
    %v1970 = vmul.f32 %v1930, %v1930
    %v1971 = vmul.f32 %v1931, %v1931
    %v1972 = vmul.f32 %v1932, %v1932
    %v1973 = vmul.f32 %v1933, %v1933
    %v1974 = vmul.f32 %v1934, %v1934
    %v1975 = vmul.f32 %v1935, %v1935
    %v1976 = vsub.f32 %v1960, %v1968
    %v1977 = vsub.f32 %v1961, %v1969
    %v1978 = vsub.f32 %v1962, %v1970
    %v1979 = vsub.f32 %v1963, %v1971
    %v1980 = vsub.f32 %v1964, %v1972
    %v1981 = vsub.f32 %v1965, %v1973
    %v1982 = vsub.f32 %v1966, %v1974
    %v1983 = vsub.f32 %v1967, %v1975
    %v1984 = vsub.f32 %v1904, %v1928
    %v1985 = vsub.f32 %v1905, %v1929
    %v1986 = vsub.f32 %v1906, %v1930
    %v1987 = vsub.f32 %v1907, %v1931
    %v1988 = vsub.f32 %v1908, %v1932
    %v1989 = vsub.f32 %v1909, %v1933
    %v1990 = vsub.f32 %v1910, %v1934
    %v1991 = vsub.f32 %v1911, %v1935
    %v1992 = vadd.f32 %v1976, 1e-05
    %v1993 = vadd.f32 %v1977, 1e-05
    %v1994 = vadd.f32 %v1978, 1e-05
    %v1995 = vadd.f32 %v1979, 1e-05
    %v1996 = vadd.f32 %v1980, 1e-05
    %v1997 = vadd.f32 %v1981, 1e-05
    %v1998 = vadd.f32 %v1982, 1e-05
    %v1999 = vadd.f32 %v1983, 1e-05
    %v2000 = vrsqrt.pop %v1992
    %v2001 = vmul.f32 %v2000, %v1992
    %v2002 = vmul.f32 %v2001, %v2000
    %v2003 = vmul.f32 0.5, %v2002
    %v2004 = vsub.f32 1.5, %v2003
    %v2005 = vmul.f32 %v2000, %v2004
    %vm2006 = vweird.f32 %v1992
    %vm2007 = vweird.f32 %v2000
    %vm2008 = vmor %vm2006, %vm2007
    %v2009 = vsel %vm2008, %v2000, %v2005
    %v2010 = vrsqrt.pop %v1993
    %v2011 = vmul.f32 %v2010, %v1993
    %v2012 = vmul.f32 %v2011, %v2010
    %v2013 = vmul.f32 0.5, %v2012
    %v2014 = vsub.f32 1.5, %v2013
    %v2015 = vmul.f32 %v2010, %v2014
    %vm2016 = vweird.f32 %v1993
    %vm2017 = vweird.f32 %v2010
    %vm2018 = vmor %vm2016, %vm2017
    %v2019 = vsel %vm2018, %v2010, %v2015
    %v2020 = vrsqrt.pop %v1994
    %v2021 = vmul.f32 %v2020, %v1994
    %v2022 = vmul.f32 %v2021, %v2020
    %v2023 = vmul.f32 0.5, %v2022
    %v2024 = vsub.f32 1.5, %v2023
    %v2025 = vmul.f32 %v2020, %v2024
    %vm2026 = vweird.f32 %v1994
    %vm2027 = vweird.f32 %v2020
    %vm2028 = vmor %vm2026, %vm2027
    %v2029 = vsel %vm2028, %v2020, %v2025
    %v2030 = vrsqrt.pop %v1995
    %v2031 = vmul.f32 %v2030, %v1995
    %v2032 = vmul.f32 %v2031, %v2030
    %v2033 = vmul.f32 0.5, %v2032
    %v2034 = vsub.f32 1.5, %v2033
    %v2035 = vmul.f32 %v2030, %v2034
    %vm2036 = vweird.f32 %v1995
    %vm2037 = vweird.f32 %v2030
    %vm2038 = vmor %vm2036, %vm2037
    %v2039 = vsel %vm2038, %v2030, %v2035
    %v2040 = vrsqrt.pop %v1996
    %v2041 = vmul.f32 %v2040, %v1996
    %v2042 = vmul.f32 %v2041, %v2040
    %v2043 = vmul.f32 0.5, %v2042
    %v2044 = vsub.f32 1.5, %v2043
    %v2045 = vmul.f32 %v2040, %v2044
    %vm2046 = vweird.f32 %v1996
    %vm2047 = vweird.f32 %v2040
    %vm2048 = vmor %vm2046, %vm2047
    %v2049 = vsel %vm2048, %v2040, %v2045
    %v2050 = vrsqrt.pop %v1997
    %v2051 = vmul.f32 %v2050, %v1997
    %v2052 = vmul.f32 %v2051, %v2050
    %v2053 = vmul.f32 0.5, %v2052
    %v2054 = vsub.f32 1.5, %v2053
    %v2055 = vmul.f32 %v2050, %v2054
    %vm2056 = vweird.f32 %v1997
    %vm2057 = vweird.f32 %v2050
    %vm2058 = vmor %vm2056, %vm2057
    %v2059 = vsel %vm2058, %v2050, %v2055
    %v2060 = vrsqrt.pop %v1998
    %v2061 = vmul.f32 %v2060, %v1998
    %v2062 = vmul.f32 %v2061, %v2060
    %v2063 = vmul.f32 0.5, %v2062
    %v2064 = vsub.f32 1.5, %v2063
    %v2065 = vmul.f32 %v2060, %v2064
    %vm2066 = vweird.f32 %v1998
    %vm2067 = vweird.f32 %v2060
    %vm2068 = vmor %vm2066, %vm2067
    %v2069 = vsel %vm2068, %v2060, %v2065
    %v2070 = vrsqrt.pop %v1999
    %v2071 = vmul.f32 %v2070, %v1999
    %v2072 = vmul.f32 %v2071, %v2070
    %v2073 = vmul.f32 0.5, %v2072
    %v2074 = vsub.f32 1.5, %v2073
    %v2075 = vmul.f32 %v2070, %v2074
    %vm2076 = vweird.f32 %v1999
    %vm2077 = vweird.f32 %v2070
    %vm2078 = vmor %vm2076, %vm2077
    %v2079 = vsel %vm2078, %v2070, %v2075
    %v2080 = vmul.f32 %v1984, %v2009
    %v2081 = vmul.f32 %v1985, %v2019
    %v2082 = vmul.f32 %v1986, %v2029
    %v2083 = vmul.f32 %v1987, %v2039
    %v2084 = vmul.f32 %v1988, %v2049
    %v2085 = vmul.f32 %v1989, %v2059
    %v2086 = vmul.f32 %v1990, %v2069
    %v2087 = vmul.f32 %v1991, %v2079
    %v2088 = vmul.f32 %v2080, %v294
    %v2089 = vmul.f32 %v2081, %v294
    %v2090 = vmul.f32 %v2082, %v294
    %v2091 = vmul.f32 %v2083, %v294
    %v2092 = vmul.f32 %v2084, %v294
    %v2093 = vmul.f32 %v2085, %v294
    %v2094 = vmul.f32 %v2086, %v294
    %v2095 = vmul.f32 %v2087, %v294
    %v2096 = vadd.f32 %v2088, %v305
    %v2097 = vadd.f32 %v2089, %v305
    %v2098 = vadd.f32 %v2090, %v305
    %v2099 = vadd.f32 %v2091, %v305
    %v2100 = vadd.f32 %v2092, %v305
    %v2101 = vadd.f32 %v2093, %v305
    %v2102 = vadd.f32 %v2094, %v305
    %v2103 = vadd.f32 %v2095, %v305
    %v2104 = vpack.c.bf16 %v2097, %v2096
    %v2105 = vpack.c.bf16 %v2099, %v2098
    %v2106 = vpack.c.bf16 %v2101, %v2100
    %v2107 = vpack.c.bf16 %v2103, %v2102
    %v2108 = vld [vmem:[#allocation7] sm:$0xff]
    %v2109 = vld [vmem:[#allocation7 + $0x8] sm:$0xff]
    %v2110 = vld [vmem:[#allocation7 + $0x10] sm:$0xff]
    %v2111 = vld [vmem:[#allocation7 + $0x18] sm:$0xff]
    %v2112 = vld [vmem:[#allocation7 + $0x20] sm:$0xff]
    %v2113 = vld [vmem:[#allocation7 + $0x28] sm:$0xff]
    %v2114 = vld [vmem:[#allocation7 + $0x30] sm:$0xff]
    %v2115 = vld [vmem:[#allocation7 + $0x38] sm:$0xff]
    %v2116 = vld [vmem:[#allocation7 + $0x40] sm:$0xff]
    %v2117 = vld [vmem:[#allocation7 + $0x48] sm:$0xff]
    %v2118 = vld [vmem:[#allocation7 + $0x50] sm:$0xff]
    %v2119 = vld [vmem:[#allocation7 + $0x58] sm:$0xff]
    %v2120 = vld [vmem:[#allocation7 + $0x60] sm:$0xff]
    %v2121 = vld [vmem:[#allocation7 + $0x68] sm:$0xff]
    %v2122 = vld [vmem:[#allocation7 + $0x70] sm:$0xff]
    %v2123 = vld [vmem:[#allocation7 + $0x78] sm:$0xff]
    %v2124 = vld [vmem:[#allocation7 + $0x80] sm:$0xff]
    %v2125 = vld [vmem:[#allocation7 + $0x88] sm:$0xff]
    %v2126 = vld [vmem:[#allocation7 + $0x90] sm:$0xff]
    %v2127 = vld [vmem:[#allocation7 + $0x98] sm:$0xff]
    %v2128 = vld [vmem:[#allocation7 + $0xa0] sm:$0xff]
    %v2129 = vld [vmem:[#allocation7 + $0xa8] sm:$0xff]
    %v2130 = vld [vmem:[#allocation7 + $0xb0] sm:$0xff]
    %v2131 = vld [vmem:[#allocation7 + $0xb8] sm:$0xff]
    %v2132 = vld [vmem:[#allocation7 + $0xc0] sm:$0xff]
    %v2133 = vld [vmem:[#allocation7 + $0xc8] sm:$0xff]
    %v2134 = vld [vmem:[#allocation7 + $0xd0] sm:$0xff]
    %v2135 = vld [vmem:[#allocation7 + $0xd8] sm:$0xff]
    %v2136 = vld [vmem:[#allocation7 + $0xe0] sm:$0xff]
    %v2137 = vld [vmem:[#allocation7 + $0xe8] sm:$0xff]
    %v2138 = vld [vmem:[#allocation7 + $0xf0] sm:$0xff]
    %v2139 = vld [vmem:[#allocation7 + $0xf8] sm:$0xff]
    %v2140 = vld [vmem:[#allocation7 + $0x100] sm:$0xff]
    %v2141 = vld [vmem:[#allocation7 + $0x108] sm:$0xff]
    %v2142 = vld [vmem:[#allocation7 + $0x110] sm:$0xff]
    %v2143 = vld [vmem:[#allocation7 + $0x118] sm:$0xff]
    %v2144 = vld [vmem:[#allocation7 + $0x120] sm:$0xff]
    %v2145 = vld [vmem:[#allocation7 + $0x128] sm:$0xff]
    %v2146 = vld [vmem:[#allocation7 + $0x130] sm:$0xff]
    %v2147 = vld [vmem:[#allocation7 + $0x138] sm:$0xff]
    %v2148 = vld [vmem:[#allocation7 + $0x140] sm:$0xff]
    %v2149 = vld [vmem:[#allocation7 + $0x148] sm:$0xff]
    %v2150 = vld [vmem:[#allocation7 + $0x150] sm:$0xff]
    %v2151 = vld [vmem:[#allocation7 + $0x158] sm:$0xff]
    %v2152 = vld [vmem:[#allocation7 + $0x160] sm:$0xff]
    %v2153 = vld [vmem:[#allocation7 + $0x168] sm:$0xff]
    %v2154 = vld [vmem:[#allocation7 + $0x170] sm:$0xff]
    %v2155 = vld [vmem:[#allocation7 + $0x178] sm:$0xff]
    %v2156 = vld [vmem:[#allocation7 + $0x180] sm:$0xff]
    %v2157 = vld [vmem:[#allocation7 + $0x188] sm:$0xff]
    %v2158 = vld [vmem:[#allocation7 + $0x190] sm:$0xff]
    %v2159 = vld [vmem:[#allocation7 + $0x198] sm:$0xff]
    %v2160 = vld [vmem:[#allocation7 + $0x1a0] sm:$0xff]
    %v2161 = vld [vmem:[#allocation7 + $0x1a8] sm:$0xff]
    %v2162 = vld [vmem:[#allocation7 + $0x1b0] sm:$0xff]
    %v2163 = vld [vmem:[#allocation7 + $0x1b8] sm:$0xff]
    %v2164 = vld [vmem:[#allocation7 + $0x1c0] sm:$0xff]
    %v2165 = vld [vmem:[#allocation7 + $0x1c8] sm:$0xff]
    %v2166 = vld [vmem:[#allocation7 + $0x1d0] sm:$0xff]
    %v2167 = vld [vmem:[#allocation7 + $0x1d8] sm:$0xff]
    %v2168 = vld [vmem:[#allocation7 + $0x1e0] sm:$0xff]
    %v2169 = vld [vmem:[#allocation7 + $0x1e8] sm:$0xff]
    %v2170 = vld [vmem:[#allocation7 + $0x1f0] sm:$0xff]
    %v2171 = vld [vmem:[#allocation7 + $0x1f8] sm:$0xff]
    %v2172 = vld [vmem:[%s8] sm:$0xff]
    %v2174 = vperm.slane %v2172, 0
    %v2175 = vperm.slane %v2172, 1
    %v2176 = vperm.slane %v2172, 2
    %v2177 = vperm.slane %v2172, 3
    %v2178 = vperm.slane %v2172, 4
    %v2179 = vperm.slane %v2172, 5
    %v2180 = vperm.slane %v2172, 6
    %v2181 = vperm.slane %v2172, 7
    %v2254 = vunpack.c.l.b16 %v2108
    %v2255 = vunpack.c.h.b16 %v2108
    %v2256 = vunpack.c.l.b16 %v2109
    %v2257 = vunpack.c.h.b16 %v2109
    %v2258 = vunpack.c.l.b16 %v2110
    %v2259 = vunpack.c.h.b16 %v2110
    %v2260 = vunpack.c.l.b16 %v2111
    %v2261 = vunpack.c.h.b16 %v2111
    %v2262 = vunpack.c.l.b16 %v2112
    %v2263 = vunpack.c.h.b16 %v2112
    %v2264 = vunpack.c.l.b16 %v2113
    %v2265 = vunpack.c.h.b16 %v2113
    %v2266 = vunpack.c.l.b16 %v2114
    %v2267 = vunpack.c.h.b16 %v2114
    %v2268 = vunpack.c.l.b16 %v2115
    %v2269 = vunpack.c.h.b16 %v2115
    %v2270 = vunpack.c.l.b16 %v2116
    %v2271 = vunpack.c.h.b16 %v2116
    %v2272 = vunpack.c.l.b16 %v2117
    %v2273 = vunpack.c.h.b16 %v2117
    %v2274 = vunpack.c.l.b16 %v2118
    %v2275 = vunpack.c.h.b16 %v2118
    %v2276 = vunpack.c.l.b16 %v2119
    %v2277 = vunpack.c.h.b16 %v2119
    %v2278 = vunpack.c.l.b16 %v2120
    %v2279 = vunpack.c.h.b16 %v2120
    %v2280 = vunpack.c.l.b16 %v2121
    %v2281 = vunpack.c.h.b16 %v2121
    %v2282 = vunpack.c.l.b16 %v2122
    %v2283 = vunpack.c.h.b16 %v2122
    %v2284 = vunpack.c.l.b16 %v2123
    %v2285 = vunpack.c.h.b16 %v2123
    %v2286 = vunpack.c.l.b16 %v2124
    %v2287 = vunpack.c.h.b16 %v2124
    %v2288 = vunpack.c.l.b16 %v2125
    %v2289 = vunpack.c.h.b16 %v2125
    %v2290 = vunpack.c.l.b16 %v2126
    %v2291 = vunpack.c.h.b16 %v2126
    %v2292 = vunpack.c.l.b16 %v2127
    %v2293 = vunpack.c.h.b16 %v2127
    %v2294 = vunpack.c.l.b16 %v2128
    %v2295 = vunpack.c.h.b16 %v2128
    %v2296 = vunpack.c.l.b16 %v2129
    %v2297 = vunpack.c.h.b16 %v2129
    %v2298 = vunpack.c.l.b16 %v2130
    %v2299 = vunpack.c.h.b16 %v2130
    %v2300 = vunpack.c.l.b16 %v2131
    %v2301 = vunpack.c.h.b16 %v2131
    %v2302 = vunpack.c.l.b16 %v2132
    %v2303 = vunpack.c.h.b16 %v2132
    %v2304 = vunpack.c.l.b16 %v2133
    %v2305 = vunpack.c.h.b16 %v2133
    %v2306 = vunpack.c.l.b16 %v2134
    %v2307 = vunpack.c.h.b16 %v2134
    %v2308 = vunpack.c.l.b16 %v2135
    %v2309 = vunpack.c.h.b16 %v2135
    %v2310 = vunpack.c.l.b16 %v2136
    %v2311 = vunpack.c.h.b16 %v2136
    %v2312 = vunpack.c.l.b16 %v2137
    %v2313 = vunpack.c.h.b16 %v2137
    %v2314 = vunpack.c.l.b16 %v2138
    %v2315 = vunpack.c.h.b16 %v2138
    %v2316 = vunpack.c.l.b16 %v2139
    %v2317 = vunpack.c.h.b16 %v2139
    %v2318 = vunpack.c.l.b16 %v2140
    %v2319 = vunpack.c.h.b16 %v2140
    %v2320 = vunpack.c.l.b16 %v2141
    %v2321 = vunpack.c.h.b16 %v2141
    %v2322 = vunpack.c.l.b16 %v2142
    %v2323 = vunpack.c.h.b16 %v2142
    %v2324 = vunpack.c.l.b16 %v2143
    %v2325 = vunpack.c.h.b16 %v2143
    %v2326 = vunpack.c.l.b16 %v2144
    %v2327 = vunpack.c.h.b16 %v2144
    %v2328 = vunpack.c.l.b16 %v2145
    %v2329 = vunpack.c.h.b16 %v2145
    %v2330 = vunpack.c.l.b16 %v2146
    %v2331 = vunpack.c.h.b16 %v2146
    %v2332 = vunpack.c.l.b16 %v2147
    %v2333 = vunpack.c.h.b16 %v2147
    %v2334 = vunpack.c.l.b16 %v2148
    %v2335 = vunpack.c.h.b16 %v2148
    %v2336 = vunpack.c.l.b16 %v2149
    %v2337 = vunpack.c.h.b16 %v2149
    %v2338 = vunpack.c.l.b16 %v2150
    %v2339 = vunpack.c.h.b16 %v2150
    %v2340 = vunpack.c.l.b16 %v2151
    %v2341 = vunpack.c.h.b16 %v2151
    %v2342 = vunpack.c.l.b16 %v2152
    %v2343 = vunpack.c.h.b16 %v2152
    %v2344 = vunpack.c.l.b16 %v2153
    %v2345 = vunpack.c.h.b16 %v2153
    %v2346 = vunpack.c.l.b16 %v2154
    %v2347 = vunpack.c.h.b16 %v2154
    %v2348 = vunpack.c.l.b16 %v2155
    %v2349 = vunpack.c.h.b16 %v2155
    %v2350 = vunpack.c.l.b16 %v2156
    %v2351 = vunpack.c.h.b16 %v2156
    %v2352 = vunpack.c.l.b16 %v2157
    %v2353 = vunpack.c.h.b16 %v2157
    %v2354 = vunpack.c.l.b16 %v2158
    %v2355 = vunpack.c.h.b16 %v2158
    %v2356 = vunpack.c.l.b16 %v2159
    %v2357 = vunpack.c.h.b16 %v2159
    %v2358 = vunpack.c.l.b16 %v2160
    %v2359 = vunpack.c.h.b16 %v2160
    %v2360 = vunpack.c.l.b16 %v2161
    %v2361 = vunpack.c.h.b16 %v2161
    %v2362 = vunpack.c.l.b16 %v2162
    %v2363 = vunpack.c.h.b16 %v2162
    %v2364 = vunpack.c.l.b16 %v2163
    %v2365 = vunpack.c.h.b16 %v2163
    %v2366 = vunpack.c.l.b16 %v2164
    %v2367 = vunpack.c.h.b16 %v2164
    %v2368 = vunpack.c.l.b16 %v2165
    %v2369 = vunpack.c.h.b16 %v2165
    %v2370 = vunpack.c.l.b16 %v2166
    %v2371 = vunpack.c.h.b16 %v2166
    %v2372 = vunpack.c.l.b16 %v2167
    %v2373 = vunpack.c.h.b16 %v2167
    %v2374 = vunpack.c.l.b16 %v2168
    %v2375 = vunpack.c.h.b16 %v2168
    %v2376 = vunpack.c.l.b16 %v2169
    %v2377 = vunpack.c.h.b16 %v2169
    %v2378 = vunpack.c.l.b16 %v2170
    %v2379 = vunpack.c.h.b16 %v2170
    %v2380 = vunpack.c.l.b16 %v2171
    %v2381 = vunpack.c.h.b16 %v2171
    %v2382 = vpack.c.b16 %v2262, %v2254
    %v2383 = vpack.c.b16 %v2263, %v2255
    %v2384 = vpack.c.b16 %v2264, %v2256
    %v2385 = vpack.c.b16 %v2265, %v2257
    %v2386 = vpack.c.b16 %v2266, %v2258
    %v2387 = vpack.c.b16 %v2267, %v2259
    %v2388 = vpack.c.b16 %v2268, %v2260
    %v2389 = vpack.c.b16 %v2269, %v2261
    %v2390 = vpack.c.b16 %v2278, %v2270
    %v2391 = vpack.c.b16 %v2279, %v2271
    %v2392 = vpack.c.b16 %v2280, %v2272
    %v2393 = vpack.c.b16 %v2281, %v2273
    %v2394 = vpack.c.b16 %v2282, %v2274
    %v2395 = vpack.c.b16 %v2283, %v2275
    %v2396 = vpack.c.b16 %v2284, %v2276
    %v2397 = vpack.c.b16 %v2285, %v2277
    %v2398 = vpack.c.b16 %v2294, %v2286
    %v2399 = vpack.c.b16 %v2295, %v2287
    %v2400 = vpack.c.b16 %v2296, %v2288
    %v2401 = vpack.c.b16 %v2297, %v2289
    %v2402 = vpack.c.b16 %v2298, %v2290
    %v2403 = vpack.c.b16 %v2299, %v2291
    %v2404 = vpack.c.b16 %v2300, %v2292
    %v2405 = vpack.c.b16 %v2301, %v2293
    %v2406 = vpack.c.b16 %v2310, %v2302
    %v2407 = vpack.c.b16 %v2311, %v2303
    %v2408 = vpack.c.b16 %v2312, %v2304
    %v2409 = vpack.c.b16 %v2313, %v2305
    %v2410 = vpack.c.b16 %v2314, %v2306
    %v2411 = vpack.c.b16 %v2315, %v2307
    %v2412 = vpack.c.b16 %v2316, %v2308
    %v2413 = vpack.c.b16 %v2317, %v2309
    %v2414 = vpack.c.b16 %v2326, %v2318
    %v2415 = vpack.c.b16 %v2327, %v2319
    %v2416 = vpack.c.b16 %v2328, %v2320
    %v2417 = vpack.c.b16 %v2329, %v2321
    %v2418 = vpack.c.b16 %v2330, %v2322
    %v2419 = vpack.c.b16 %v2331, %v2323
    %v2420 = vpack.c.b16 %v2332, %v2324
    %v2421 = vpack.c.b16 %v2333, %v2325
    %v2422 = vpack.c.b16 %v2342, %v2334
    %v2423 = vpack.c.b16 %v2343, %v2335
    %v2424 = vpack.c.b16 %v2344, %v2336
    %v2425 = vpack.c.b16 %v2345, %v2337
    %v2426 = vpack.c.b16 %v2346, %v2338
    %v2427 = vpack.c.b16 %v2347, %v2339
    %v2428 = vpack.c.b16 %v2348, %v2340
    %v2429 = vpack.c.b16 %v2349, %v2341
    %v2430 = vpack.c.b16 %v2358, %v2350
    %v2431 = vpack.c.b16 %v2359, %v2351
    %v2432 = vpack.c.b16 %v2360, %v2352
    %v2433 = vpack.c.b16 %v2361, %v2353
    %v2434 = vpack.c.b16 %v2362, %v2354
    %v2435 = vpack.c.b16 %v2363, %v2355
    %v2436 = vpack.c.b16 %v2364, %v2356
    %v2437 = vpack.c.b16 %v2365, %v2357
    %v2438 = vpack.c.b16 %v2374, %v2366
    %v2439 = vpack.c.b16 %v2375, %v2367
    %v2440 = vpack.c.b16 %v2376, %v2368
    %v2441 = vpack.c.b16 %v2377, %v2369
    %v2442 = vpack.c.b16 %v2378, %v2370
    %v2443 = vpack.c.b16 %v2379, %v2371
    %v2444 = vpack.c.b16 %v2380, %v2372
    %v2445 = vpack.c.b16 %v2381, %v2373
    %2510 = vmatpush.bf16.msra.mxu0 %v2438
    %2511 = vmatpush.bf16.msra.mxu0 %v2430
    %2512 = vmatpush.bf16.msra.mxu0 %v2422
    %2513 = vmatpush.bf16.msra.mxu0 %v2414
    %2514 = vmatpush.bf16.msra.mxu0 %v2406
    %2515 = vmatpush.bf16.msra.mxu0 %v2398
    %2516 = vmatpush.bf16.msra.mxu0 %v2390
    %2517 = vmatpush.bf16.msra.mxu0 %v2382
    %2518 = vmatmul.bf16.gmra.mxu0 %v2104
    %v2519 = vpop.f32.mrf.mxu0
    %v2520 = vadd.f32 %v2174, %v2519
    %v2521 = vpop.f32.mrf.mxu0
    %v2522 = vadd.f32 %v2174, %v2521
    %2523 = vmatmul.bf16.gmra.mxu0 %v2105
    %v2524 = vpop.f32.mrf.mxu0
    %v2525 = vadd.f32 %v2174, %v2524
    %v2526 = vpop.f32.mrf.mxu0
    %v2527 = vadd.f32 %v2174, %v2526
    %2528 = vmatmul.bf16.gmra.mxu0 %v2106
    %v2529 = vpop.f32.mrf.mxu0
    %v2530 = vadd.f32 %v2174, %v2529
    %v2531 = vpop.f32.mrf.mxu0
    %v2532 = vadd.f32 %v2174, %v2531
    %2533 = vmatmul.bf16.gmra.mxu0 %v2107
    %v2534 = vpop.f32.mrf.mxu0
    %v2535 = vadd.f32 %v2174, %v2534
    %v2536 = vpop.f32.mrf.mxu0
    %v2537 = vadd.f32 %v2174, %v2536
    %2538 = vdwg.mxu0
    %2539 = vmatpush.bf16.msra.mxu0 %v2439
    %2540 = vmatpush.bf16.msra.mxu0 %v2431
    %2541 = vmatpush.bf16.msra.mxu0 %v2423
    %2542 = vmatpush.bf16.msra.mxu0 %v2415
    %2543 = vmatpush.bf16.msra.mxu0 %v2407
    %2544 = vmatpush.bf16.msra.mxu0 %v2399
    %2545 = vmatpush.bf16.msra.mxu0 %v2391
    %2546 = vmatpush.bf16.msra.mxu0 %v2383
    %2547 = vmatmul.bf16.gmra.mxu0 %v2104
    %v2548 = vpop.f32.mrf.mxu0
    %v2549 = vadd.f32 %v2175, %v2548
    %v2550 = vpop.f32.mrf.mxu0
    %v2551 = vadd.f32 %v2175, %v2550
    %2552 = vmatmul.bf16.gmra.mxu0 %v2105
    %v2553 = vpop.f32.mrf.mxu0
    %v2554 = vadd.f32 %v2175, %v2553
    %v2555 = vpop.f32.mrf.mxu0
    %v2556 = vadd.f32 %v2175, %v2555
    %2557 = vmatmul.bf16.gmra.mxu0 %v2106
    %v2558 = vpop.f32.mrf.mxu0
    %v2559 = vadd.f32 %v2175, %v2558
    %v2560 = vpop.f32.mrf.mxu0
    %v2561 = vadd.f32 %v2175, %v2560
    %2562 = vmatmul.bf16.gmra.mxu0 %v2107
    %v2563 = vpop.f32.mrf.mxu0
    %v2564 = vadd.f32 %v2175, %v2563
    %v2565 = vpop.f32.mrf.mxu0
    %v2566 = vadd.f32 %v2175, %v2565
    %2567 = vdwg.mxu0
    %2568 = vmatpush.bf16.msra.mxu0 %v2440
    %2569 = vmatpush.bf16.msra.mxu0 %v2432
    %2570 = vmatpush.bf16.msra.mxu0 %v2424
    %2571 = vmatpush.bf16.msra.mxu0 %v2416
    %2572 = vmatpush.bf16.msra.mxu0 %v2408
    %2573 = vmatpush.bf16.msra.mxu0 %v2400
    %2574 = vmatpush.bf16.msra.mxu0 %v2392
    %2575 = vmatpush.bf16.msra.mxu0 %v2384
    %2576 = vmatmul.bf16.gmra.mxu0 %v2104
    %v2577 = vpop.f32.mrf.mxu0
    %v2578 = vadd.f32 %v2176, %v2577
    %v2579 = vpop.f32.mrf.mxu0
    %v2580 = vadd.f32 %v2176, %v2579
    %2581 = vmatmul.bf16.gmra.mxu0 %v2105
    %v2582 = vpop.f32.mrf.mxu0
    %v2583 = vadd.f32 %v2176, %v2582
    %v2584 = vpop.f32.mrf.mxu0
    %v2585 = vadd.f32 %v2176, %v2584
    %2586 = vmatmul.bf16.gmra.mxu0 %v2106
    %v2587 = vpop.f32.mrf.mxu0
    %v2588 = vadd.f32 %v2176, %v2587
    %v2589 = vpop.f32.mrf.mxu0
    %v2590 = vadd.f32 %v2176, %v2589
    %2591 = vmatmul.bf16.gmra.mxu0 %v2107
    %v2592 = vpop.f32.mrf.mxu0
    %v2593 = vadd.f32 %v2176, %v2592
    %v2594 = vpop.f32.mrf.mxu0
    %v2595 = vadd.f32 %v2176, %v2594
    %2596 = vdwg.mxu0
    %2597 = vmatpush.bf16.msra.mxu0 %v2441
    %2598 = vmatpush.bf16.msra.mxu0 %v2433
    %2599 = vmatpush.bf16.msra.mxu0 %v2425
    %2600 = vmatpush.bf16.msra.mxu0 %v2417
    %2601 = vmatpush.bf16.msra.mxu0 %v2409
    %2602 = vmatpush.bf16.msra.mxu0 %v2401
    %2603 = vmatpush.bf16.msra.mxu0 %v2393
    %2604 = vmatpush.bf16.msra.mxu0 %v2385
    %2605 = vmatmul.bf16.gmra.mxu0 %v2104
    %v2606 = vpop.f32.mrf.mxu0
    %v2607 = vadd.f32 %v2177, %v2606
    %v2608 = vpop.f32.mrf.mxu0
    %v2609 = vadd.f32 %v2177, %v2608
    %2610 = vmatmul.bf16.gmra.mxu0 %v2105
    %v2611 = vpop.f32.mrf.mxu0
    %v2612 = vadd.f32 %v2177, %v2611
    %v2613 = vpop.f32.mrf.mxu0
    %v2614 = vadd.f32 %v2177, %v2613
    %2615 = vmatmul.bf16.gmra.mxu0 %v2106
    %v2616 = vpop.f32.mrf.mxu0
    %v2617 = vadd.f32 %v2177, %v2616
    %v2618 = vpop.f32.mrf.mxu0
    %v2619 = vadd.f32 %v2177, %v2618
    %2620 = vmatmul.bf16.gmra.mxu0 %v2107
    %v2621 = vpop.f32.mrf.mxu0
    %v2622 = vadd.f32 %v2177, %v2621
    %v2623 = vpop.f32.mrf.mxu0
    %v2624 = vadd.f32 %v2177, %v2623
    %2625 = vdwg.mxu0
    %2626 = vmatpush.bf16.msra.mxu0 %v2442
    %2627 = vmatpush.bf16.msra.mxu0 %v2434
    %2628 = vmatpush.bf16.msra.mxu0 %v2426
    %2629 = vmatpush.bf16.msra.mxu0 %v2418
    %2630 = vmatpush.bf16.msra.mxu0 %v2410
    %2631 = vmatpush.bf16.msra.mxu0 %v2402
    %2632 = vmatpush.bf16.msra.mxu0 %v2394
    %2633 = vmatpush.bf16.msra.mxu0 %v2386
    %2634 = vmatmul.bf16.gmra.mxu0 %v2104
    %v2635 = vpop.f32.mrf.mxu0
    %v2636 = vadd.f32 %v2178, %v2635
    %v2637 = vpop.f32.mrf.mxu0
    %v2638 = vadd.f32 %v2178, %v2637
    %2639 = vmatmul.bf16.gmra.mxu0 %v2105
    %v2640 = vpop.f32.mrf.mxu0
    %v2641 = vadd.f32 %v2178, %v2640
    %v2642 = vpop.f32.mrf.mxu0
    %v2643 = vadd.f32 %v2178, %v2642
    %2644 = vmatmul.bf16.gmra.mxu0 %v2106
    %v2645 = vpop.f32.mrf.mxu0
    %v2646 = vadd.f32 %v2178, %v2645
    %v2647 = vpop.f32.mrf.mxu0
    %v2648 = vadd.f32 %v2178, %v2647
    %2649 = vmatmul.bf16.gmra.mxu0 %v2107
    %v2650 = vpop.f32.mrf.mxu0
    %v2651 = vadd.f32 %v2178, %v2650
    %v2652 = vpop.f32.mrf.mxu0
    %v2653 = vadd.f32 %v2178, %v2652
    %2654 = vdwg.mxu0
    %2655 = vmatpush.bf16.msra.mxu0 %v2443
    %2656 = vmatpush.bf16.msra.mxu0 %v2435
    %2657 = vmatpush.bf16.msra.mxu0 %v2427
    %2658 = vmatpush.bf16.msra.mxu0 %v2419
    %2659 = vmatpush.bf16.msra.mxu0 %v2411
    %2660 = vmatpush.bf16.msra.mxu0 %v2403
    %2661 = vmatpush.bf16.msra.mxu0 %v2395
    %2662 = vmatpush.bf16.msra.mxu0 %v2387
    %2663 = vmatmul.bf16.gmra.mxu0 %v2104
    %v2664 = vpop.f32.mrf.mxu0
    %v2665 = vadd.f32 %v2179, %v2664
    %v2666 = vpop.f32.mrf.mxu0
    %v2667 = vadd.f32 %v2179, %v2666
    %2668 = vmatmul.bf16.gmra.mxu0 %v2105
    %v2669 = vpop.f32.mrf.mxu0
    %v2670 = vadd.f32 %v2179, %v2669
    %v2671 = vpop.f32.mrf.mxu0
    %v2672 = vadd.f32 %v2179, %v2671
    %2673 = vmatmul.bf16.gmra.mxu0 %v2106
    %v2674 = vpop.f32.mrf.mxu0
    %v2675 = vadd.f32 %v2179, %v2674
    %v2676 = vpop.f32.mrf.mxu0
    %v2677 = vadd.f32 %v2179, %v2676
    %2678 = vmatmul.bf16.gmra.mxu0 %v2107
    %v2679 = vpop.f32.mrf.mxu0
    %v2680 = vadd.f32 %v2179, %v2679
    %v2681 = vpop.f32.mrf.mxu0
    %v2682 = vadd.f32 %v2179, %v2681
    %2683 = vdwg.mxu0
    %2684 = vmatpush.bf16.msra.mxu0 %v2444
    %2685 = vmatpush.bf16.msra.mxu0 %v2436
    %2686 = vmatpush.bf16.msra.mxu0 %v2428
    %2687 = vmatpush.bf16.msra.mxu0 %v2420
    %2688 = vmatpush.bf16.msra.mxu0 %v2412
    %2689 = vmatpush.bf16.msra.mxu0 %v2404
    %2690 = vmatpush.bf16.msra.mxu0 %v2396
    %2691 = vmatpush.bf16.msra.mxu0 %v2388
    %2692 = vmatmul.bf16.gmra.mxu0 %v2104
    %v2693 = vpop.f32.mrf.mxu0
    %v2694 = vadd.f32 %v2180, %v2693
    %v2695 = vpop.f32.mrf.mxu0
    %v2696 = vadd.f32 %v2180, %v2695
    %2697 = vmatmul.bf16.gmra.mxu0 %v2105
    %v2698 = vpop.f32.mrf.mxu0
    %v2699 = vadd.f32 %v2180, %v2698
    %v2700 = vpop.f32.mrf.mxu0
    %v2701 = vadd.f32 %v2180, %v2700
    %2702 = vmatmul.bf16.gmra.mxu0 %v2106
    %v2703 = vpop.f32.mrf.mxu0
    %v2704 = vadd.f32 %v2180, %v2703
    %v2705 = vpop.f32.mrf.mxu0
    %v2706 = vadd.f32 %v2180, %v2705
    %2707 = vmatmul.bf16.gmra.mxu0 %v2107
    %v2708 = vpop.f32.mrf.mxu0
    %v2709 = vadd.f32 %v2180, %v2708
    %v2710 = vpop.f32.mrf.mxu0
    %v2711 = vadd.f32 %v2180, %v2710
    %2712 = vdwg.mxu0
    %2713 = vmatpush.bf16.msra.mxu0 %v2445
    %2714 = vmatpush.bf16.msra.mxu0 %v2437
    %2715 = vmatpush.bf16.msra.mxu0 %v2429
    %2716 = vmatpush.bf16.msra.mxu0 %v2421
    %2717 = vmatpush.bf16.msra.mxu0 %v2413
    %2718 = vmatpush.bf16.msra.mxu0 %v2405
    %2719 = vmatpush.bf16.msra.mxu0 %v2397
    %2720 = vmatpush.bf16.msra.mxu0 %v2389
    %2721 = vmatmul.bf16.gmra.mxu0 %v2104
    %v2722 = vpop.f32.mrf.mxu0
    %v2723 = vadd.f32 %v2181, %v2722
    %v2724 = vpop.f32.mrf.mxu0
    %v2725 = vadd.f32 %v2181, %v2724
    %2726 = vmatmul.bf16.gmra.mxu0 %v2105
    %v2727 = vpop.f32.mrf.mxu0
    %v2728 = vadd.f32 %v2181, %v2727
    %v2729 = vpop.f32.mrf.mxu0
    %v2730 = vadd.f32 %v2181, %v2729
    %2731 = vmatmul.bf16.gmra.mxu0 %v2106
    %v2732 = vpop.f32.mrf.mxu0
    %v2733 = vadd.f32 %v2181, %v2732
    %v2734 = vpop.f32.mrf.mxu0
    %v2735 = vadd.f32 %v2181, %v2734
    %2736 = vmatmul.bf16.gmra.mxu0 %v2107
    %v2737 = vpop.f32.mrf.mxu0
    %v2738 = vadd.f32 %v2181, %v2737
    %v2739 = vpop.f32.mrf.mxu0
    %v2740 = vadd.f32 %v2181, %v2739
    %2741 = vdwg.mxu0
    %v2742 = vmax.f32 %v2520, 0.0
    %v2743 = vmax.f32 %v2549, 0.0
    %v2744 = vmax.f32 %v2578, 0.0
    %v2745 = vmax.f32 %v2607, 0.0
    %v2746 = vmax.f32 %v2636, 0.0
    %v2747 = vmax.f32 %v2665, 0.0
    %v2748 = vmax.f32 %v2694, 0.0
    %v2749 = vmax.f32 %v2723, 0.0
    %v2750 = vmax.f32 %v2522, 0.0
    %v2751 = vmax.f32 %v2551, 0.0
    %v2752 = vmax.f32 %v2580, 0.0
    %v2753 = vmax.f32 %v2609, 0.0
    %v2754 = vmax.f32 %v2638, 0.0
    %v2755 = vmax.f32 %v2667, 0.0
    %v2756 = vmax.f32 %v2696, 0.0
    %v2757 = vmax.f32 %v2725, 0.0
    %v2758 = vmax.f32 %v2525, 0.0
    %v2759 = vmax.f32 %v2554, 0.0
    %v2760 = vmax.f32 %v2583, 0.0
    %v2761 = vmax.f32 %v2612, 0.0
    %v2762 = vmax.f32 %v2641, 0.0
    %v2763 = vmax.f32 %v2670, 0.0
    %v2764 = vmax.f32 %v2699, 0.0
    %v2765 = vmax.f32 %v2728, 0.0
    %v2766 = vmax.f32 %v2527, 0.0
    %v2767 = vmax.f32 %v2556, 0.0
    %v2768 = vmax.f32 %v2585, 0.0
    %v2769 = vmax.f32 %v2614, 0.0
    %v2770 = vmax.f32 %v2643, 0.0
    %v2771 = vmax.f32 %v2672, 0.0
    %v2772 = vmax.f32 %v2701, 0.0
    %v2773 = vmax.f32 %v2730, 0.0
    %v2774 = vmax.f32 %v2530, 0.0
    %v2775 = vmax.f32 %v2559, 0.0
    %v2776 = vmax.f32 %v2588, 0.0
    %v2777 = vmax.f32 %v2617, 0.0
    %v2778 = vmax.f32 %v2646, 0.0
    %v2779 = vmax.f32 %v2675, 0.0
    %v2780 = vmax.f32 %v2704, 0.0
    %v2781 = vmax.f32 %v2733, 0.0
    %v2782 = vmax.f32 %v2532, 0.0
    %v2783 = vmax.f32 %v2561, 0.0
    %v2784 = vmax.f32 %v2590, 0.0
    %v2785 = vmax.f32 %v2619, 0.0
    %v2786 = vmax.f32 %v2648, 0.0
    %v2787 = vmax.f32 %v2677, 0.0
    %v2788 = vmax.f32 %v2706, 0.0
    %v2789 = vmax.f32 %v2735, 0.0
    %v2790 = vmax.f32 %v2535, 0.0
    %v2791 = vmax.f32 %v2564, 0.0
    %v2792 = vmax.f32 %v2593, 0.0
    %v2793 = vmax.f32 %v2622, 0.0
    %v2794 = vmax.f32 %v2651, 0.0
    %v2795 = vmax.f32 %v2680, 0.0
    %v2796 = vmax.f32 %v2709, 0.0
    %v2797 = vmax.f32 %v2738, 0.0
    %v2798 = vmax.f32 %v2537, 0.0
    %v2799 = vmax.f32 %v2566, 0.0
    %v2800 = vmax.f32 %v2595, 0.0
    %v2801 = vmax.f32 %v2624, 0.0
    %v2802 = vmax.f32 %v2653, 0.0
    %v2803 = vmax.f32 %v2682, 0.0
    %v2804 = vmax.f32 %v2711, 0.0
    %v2805 = vmax.f32 %v2740, 0.0
    %v2806 = vpack.c.bf16 %v2750, %v2742
    %v2807 = vpack.c.bf16 %v2751, %v2743
    %v2808 = vpack.c.bf16 %v2752, %v2744
    %v2809 = vpack.c.bf16 %v2753, %v2745
    %v2810 = vpack.c.bf16 %v2754, %v2746
    %v2811 = vpack.c.bf16 %v2755, %v2747
    %v2812 = vpack.c.bf16 %v2756, %v2748
    %v2813 = vpack.c.bf16 %v2757, %v2749
    %v2814 = vpack.c.bf16 %v2766, %v2758
    %v2815 = vpack.c.bf16 %v2767, %v2759
    %v2816 = vpack.c.bf16 %v2768, %v2760
    %v2817 = vpack.c.bf16 %v2769, %v2761
    %v2818 = vpack.c.bf16 %v2770, %v2762
    %v2819 = vpack.c.bf16 %v2771, %v2763
    %v2820 = vpack.c.bf16 %v2772, %v2764
    %v2821 = vpack.c.bf16 %v2773, %v2765
    %v2822 = vpack.c.bf16 %v2782, %v2774
    %v2823 = vpack.c.bf16 %v2783, %v2775
    %v2824 = vpack.c.bf16 %v2784, %v2776
    %v2825 = vpack.c.bf16 %v2785, %v2777
    %v2826 = vpack.c.bf16 %v2786, %v2778
    %v2827 = vpack.c.bf16 %v2787, %v2779
    %v2828 = vpack.c.bf16 %v2788, %v2780
    %v2829 = vpack.c.bf16 %v2789, %v2781
    %v2830 = vpack.c.bf16 %v2798, %v2790
    %v2831 = vpack.c.bf16 %v2799, %v2791
    %v2832 = vpack.c.bf16 %v2800, %v2792
    %v2833 = vpack.c.bf16 %v2801, %v2793
    %v2834 = vpack.c.bf16 %v2802, %v2794
    %v2835 = vpack.c.bf16 %v2803, %v2795
    %v2836 = vpack.c.bf16 %v2804, %v2796
    %v2837 = vpack.c.bf16 %v2805, %v2797
    %v2838 = vld [vmem:[#allocation8] sm:$0xf]
    %v2839 = vld [vmem:[#allocation8 + $0x4] sm:$0xf]
    %v2840 = vld [vmem:[#allocation8 + $0x8] sm:$0xf]
    %v2841 = vld [vmem:[#allocation8 + $0xc] sm:$0xf]
    %v2842 = vld [vmem:[#allocation8 + $0x10] sm:$0xf]
    %v2843 = vld [vmem:[#allocation8 + $0x14] sm:$0xf]
    %v2844 = vld [vmem:[#allocation8 + $0x18] sm:$0xf]
    %v2845 = vld [vmem:[#allocation8 + $0x1c] sm:$0xf]
    %v2846 = vld [vmem:[#allocation8 + $0x20] sm:$0xf]
    %v2847 = vld [vmem:[#allocation8 + $0x24] sm:$0xf]
    %v2848 = vld [vmem:[#allocation8 + $0x28] sm:$0xf]
    %v2849 = vld [vmem:[#allocation8 + $0x2c] sm:$0xf]
    %v2850 = vld [vmem:[#allocation8 + $0x30] sm:$0xf]
    %v2851 = vld [vmem:[#allocation8 + $0x34] sm:$0xf]
    %v2852 = vld [vmem:[#allocation8 + $0x38] sm:$0xf]
    %v2853 = vld [vmem:[#allocation8 + $0x3c] sm:$0xf]
    %v2854 = vld [vmem:[#allocation8 + $0x40] sm:$0xf]
    %v2855 = vld [vmem:[#allocation8 + $0x44] sm:$0xf]
    %v2856 = vld [vmem:[#allocation8 + $0x48] sm:$0xf]
    %v2857 = vld [vmem:[#allocation8 + $0x4c] sm:$0xf]
    %v2858 = vld [vmem:[#allocation8 + $0x50] sm:$0xf]
    %v2859 = vld [vmem:[#allocation8 + $0x54] sm:$0xf]
    %v2860 = vld [vmem:[#allocation8 + $0x58] sm:$0xf]
    %v2861 = vld [vmem:[#allocation8 + $0x5c] sm:$0xf]
    %v2862 = vld [vmem:[#allocation8 + $0x60] sm:$0xf]
    %v2863 = vld [vmem:[#allocation8 + $0x64] sm:$0xf]
    %v2864 = vld [vmem:[#allocation8 + $0x68] sm:$0xf]
    %v2865 = vld [vmem:[#allocation8 + $0x6c] sm:$0xf]
    %v2866 = vld [vmem:[#allocation8 + $0x70] sm:$0xf]
    %v2867 = vld [vmem:[#allocation8 + $0x74] sm:$0xf]
    %v2868 = vld [vmem:[#allocation8 + $0x78] sm:$0xf]
    %v2869 = vld [vmem:[#allocation8 + $0x7c] sm:$0xf]
    %v2870 = vld [vmem:[#allocation8 + $0x80] sm:$0xf]
    %v2871 = vld [vmem:[#allocation8 + $0x84] sm:$0xf]
    %v2872 = vld [vmem:[#allocation8 + $0x88] sm:$0xf]
    %v2873 = vld [vmem:[#allocation8 + $0x8c] sm:$0xf]
    %v2874 = vld [vmem:[#allocation8 + $0x90] sm:$0xf]
    %v2875 = vld [vmem:[#allocation8 + $0x94] sm:$0xf]
    %v2876 = vld [vmem:[#allocation8 + $0x98] sm:$0xf]
    %v2877 = vld [vmem:[#allocation8 + $0x9c] sm:$0xf]
    %v2878 = vld [vmem:[#allocation8 + $0xa0] sm:$0xf]
    %v2879 = vld [vmem:[#allocation8 + $0xa4] sm:$0xf]
    %v2880 = vld [vmem:[#allocation8 + $0xa8] sm:$0xf]
    %v2881 = vld [vmem:[#allocation8 + $0xac] sm:$0xf]
    %v2882 = vld [vmem:[#allocation8 + $0xb0] sm:$0xf]
    %v2883 = vld [vmem:[#allocation8 + $0xb4] sm:$0xf]
    %v2884 = vld [vmem:[#allocation8 + $0xb8] sm:$0xf]
    %v2885 = vld [vmem:[#allocation8 + $0xbc] sm:$0xf]
    %v2886 = vld [vmem:[#allocation8 + $0xc0] sm:$0xf]
    %v2887 = vld [vmem:[#allocation8 + $0xc4] sm:$0xf]
    %v2888 = vld [vmem:[#allocation8 + $0xc8] sm:$0xf]
    %v2889 = vld [vmem:[#allocation8 + $0xcc] sm:$0xf]
    %v2890 = vld [vmem:[#allocation8 + $0xd0] sm:$0xf]
    %v2891 = vld [vmem:[#allocation8 + $0xd4] sm:$0xf]
    %v2892 = vld [vmem:[#allocation8 + $0xd8] sm:$0xf]
    %v2893 = vld [vmem:[#allocation8 + $0xdc] sm:$0xf]
    %v2894 = vld [vmem:[#allocation8 + $0xe0] sm:$0xf]
    %v2895 = vld [vmem:[#allocation8 + $0xe4] sm:$0xf]
    %v2896 = vld [vmem:[#allocation8 + $0xe8] sm:$0xf]
    %v2897 = vld [vmem:[#allocation8 + $0xec] sm:$0xf]
    %v2898 = vld [vmem:[#allocation8 + $0xf0] sm:$0xf]
    %v2899 = vld [vmem:[#allocation8 + $0xf4] sm:$0xf]
    %v2900 = vld [vmem:[#allocation8 + $0xf8] sm:$0xf]
    %v2901 = vld [vmem:[#allocation8 + $0xfc] sm:$0xf]
    %v2902 = vld [vmem:[#allocation8 + $0x100] sm:$0xf]
    %v2903 = vld [vmem:[#allocation8 + $0x104] sm:$0xf]
    %v2904 = vld [vmem:[#allocation8 + $0x108] sm:$0xf]
    %v2905 = vld [vmem:[#allocation8 + $0x10c] sm:$0xf]
    %v2906 = vld [vmem:[#allocation8 + $0x110] sm:$0xf]
    %v2907 = vld [vmem:[#allocation8 + $0x114] sm:$0xf]
    %v2908 = vld [vmem:[#allocation8 + $0x118] sm:$0xf]
    %v2909 = vld [vmem:[#allocation8 + $0x11c] sm:$0xf]
    %v2910 = vld [vmem:[#allocation8 + $0x120] sm:$0xf]
    %v2911 = vld [vmem:[#allocation8 + $0x124] sm:$0xf]
    %v2912 = vld [vmem:[#allocation8 + $0x128] sm:$0xf]
    %v2913 = vld [vmem:[#allocation8 + $0x12c] sm:$0xf]
    %v2914 = vld [vmem:[#allocation8 + $0x130] sm:$0xf]
    %v2915 = vld [vmem:[#allocation8 + $0x134] sm:$0xf]
    %v2916 = vld [vmem:[#allocation8 + $0x138] sm:$0xf]
    %v2917 = vld [vmem:[#allocation8 + $0x13c] sm:$0xf]
    %v2918 = vld [vmem:[#allocation8 + $0x140] sm:$0xf]
    %v2919 = vld [vmem:[#allocation8 + $0x144] sm:$0xf]
    %v2920 = vld [vmem:[#allocation8 + $0x148] sm:$0xf]
    %v2921 = vld [vmem:[#allocation8 + $0x14c] sm:$0xf]
    %v2922 = vld [vmem:[#allocation8 + $0x150] sm:$0xf]
    %v2923 = vld [vmem:[#allocation8 + $0x154] sm:$0xf]
    %v2924 = vld [vmem:[#allocation8 + $0x158] sm:$0xf]
    %v2925 = vld [vmem:[#allocation8 + $0x15c] sm:$0xf]
    %v2926 = vld [vmem:[#allocation8 + $0x160] sm:$0xf]
    %v2927 = vld [vmem:[#allocation8 + $0x164] sm:$0xf]
    %v2928 = vld [vmem:[#allocation8 + $0x168] sm:$0xf]
    %v2929 = vld [vmem:[#allocation8 + $0x16c] sm:$0xf]
    %v2930 = vld [vmem:[#allocation8 + $0x170] sm:$0xf]
    %v2931 = vld [vmem:[#allocation8 + $0x174] sm:$0xf]
    %v2932 = vld [vmem:[#allocation8 + $0x178] sm:$0xf]
    %v2933 = vld [vmem:[#allocation8 + $0x17c] sm:$0xf]
    %v2934 = vld [vmem:[#allocation8 + $0x180] sm:$0xf]
    %v2935 = vld [vmem:[#allocation8 + $0x184] sm:$0xf]
    %v2936 = vld [vmem:[#allocation8 + $0x188] sm:$0xf]
    %v2937 = vld [vmem:[#allocation8 + $0x18c] sm:$0xf]
    %v2938 = vld [vmem:[#allocation8 + $0x190] sm:$0xf]
    %v2939 = vld [vmem:[#allocation8 + $0x194] sm:$0xf]
    %v2940 = vld [vmem:[#allocation8 + $0x198] sm:$0xf]
    %v2941 = vld [vmem:[#allocation8 + $0x19c] sm:$0xf]
    %v2942 = vld [vmem:[#allocation8 + $0x1a0] sm:$0xf]
    %v2943 = vld [vmem:[#allocation8 + $0x1a4] sm:$0xf]
    %v2944 = vld [vmem:[#allocation8 + $0x1a8] sm:$0xf]
    %v2945 = vld [vmem:[#allocation8 + $0x1ac] sm:$0xf]
    %v2946 = vld [vmem:[#allocation8 + $0x1b0] sm:$0xf]
    %v2947 = vld [vmem:[#allocation8 + $0x1b4] sm:$0xf]
    %v2948 = vld [vmem:[#allocation8 + $0x1b8] sm:$0xf]
    %v2949 = vld [vmem:[#allocation8 + $0x1bc] sm:$0xf]
    %v2950 = vld [vmem:[#allocation8 + $0x1c0] sm:$0xf]
    %v2951 = vld [vmem:[#allocation8 + $0x1c4] sm:$0xf]
    %v2952 = vld [vmem:[#allocation8 + $0x1c8] sm:$0xf]
    %v2953 = vld [vmem:[#allocation8 + $0x1cc] sm:$0xf]
    %v2954 = vld [vmem:[#allocation8 + $0x1d0] sm:$0xf]
    %v2955 = vld [vmem:[#allocation8 + $0x1d4] sm:$0xf]
    %v2956 = vld [vmem:[#allocation8 + $0x1d8] sm:$0xf]
    %v2957 = vld [vmem:[#allocation8 + $0x1dc] sm:$0xf]
    %v2958 = vld [vmem:[#allocation8 + $0x1e0] sm:$0xf]
    %v2959 = vld [vmem:[#allocation8 + $0x1e4] sm:$0xf]
    %v2960 = vld [vmem:[#allocation8 + $0x1e8] sm:$0xf]
    %v2961 = vld [vmem:[#allocation8 + $0x1ec] sm:$0xf]
    %v2962 = vld [vmem:[#allocation8 + $0x1f0] sm:$0xf]
    %v2963 = vld [vmem:[#allocation8 + $0x1f4] sm:$0xf]
    %v2964 = vld [vmem:[#allocation8 + $0x1f8] sm:$0xf]
    %v2965 = vld [vmem:[#allocation8 + $0x1fc] sm:$0xf]
    %v2966 = vld [vmem:[%s10] sm:$0x1]
    %v2968 = vperm.slane %v2966, 0
    %v3098 = vunpack.c.l.b16 %v2838
    %v3099 = vunpack.c.l.b16 %v2839
    %v3100 = vunpack.c.l.b16 %v2840
    %v3101 = vunpack.c.l.b16 %v2841
    %v3102 = vunpack.c.l.b16 %v2842
    %v3103 = vunpack.c.l.b16 %v2843
    %v3104 = vunpack.c.l.b16 %v2844
    %v3105 = vunpack.c.l.b16 %v2845
    %v3106 = vunpack.c.l.b16 %v2846
    %v3107 = vunpack.c.l.b16 %v2847
    %v3108 = vunpack.c.l.b16 %v2848
    %v3109 = vunpack.c.l.b16 %v2849
    %v3110 = vunpack.c.l.b16 %v2850
    %v3111 = vunpack.c.l.b16 %v2851
    %v3112 = vunpack.c.l.b16 %v2852
    %v3113 = vunpack.c.l.b16 %v2853
    %v3114 = vunpack.c.l.b16 %v2854
    %v3115 = vunpack.c.l.b16 %v2855
    %v3116 = vunpack.c.l.b16 %v2856
    %v3117 = vunpack.c.l.b16 %v2857
    %v3118 = vunpack.c.l.b16 %v2858
    %v3119 = vunpack.c.l.b16 %v2859
    %v3120 = vunpack.c.l.b16 %v2860
    %v3121 = vunpack.c.l.b16 %v2861
    %v3122 = vunpack.c.l.b16 %v2862
    %v3123 = vunpack.c.l.b16 %v2863
    %v3124 = vunpack.c.l.b16 %v2864
    %v3125 = vunpack.c.l.b16 %v2865
    %v3126 = vunpack.c.l.b16 %v2866
    %v3127 = vunpack.c.l.b16 %v2867
    %v3128 = vunpack.c.l.b16 %v2868
    %v3129 = vunpack.c.l.b16 %v2869
    %v3130 = vunpack.c.l.b16 %v2870
    %v3131 = vunpack.c.l.b16 %v2871
    %v3132 = vunpack.c.l.b16 %v2872
    %v3133 = vunpack.c.l.b16 %v2873
    %v3134 = vunpack.c.l.b16 %v2874
    %v3135 = vunpack.c.l.b16 %v2875
    %v3136 = vunpack.c.l.b16 %v2876
    %v3137 = vunpack.c.l.b16 %v2877
    %v3138 = vunpack.c.l.b16 %v2878
    %v3139 = vunpack.c.l.b16 %v2879
    %v3140 = vunpack.c.l.b16 %v2880
    %v3141 = vunpack.c.l.b16 %v2881
    %v3142 = vunpack.c.l.b16 %v2882
    %v3143 = vunpack.c.l.b16 %v2883
    %v3144 = vunpack.c.l.b16 %v2884
    %v3145 = vunpack.c.l.b16 %v2885
    %v3146 = vunpack.c.l.b16 %v2886
    %v3147 = vunpack.c.l.b16 %v2887
    %v3148 = vunpack.c.l.b16 %v2888
    %v3149 = vunpack.c.l.b16 %v2889
    %v3150 = vunpack.c.l.b16 %v2890
    %v3151 = vunpack.c.l.b16 %v2891
    %v3152 = vunpack.c.l.b16 %v2892
    %v3153 = vunpack.c.l.b16 %v2893
    %v3154 = vunpack.c.l.b16 %v2894
    %v3155 = vunpack.c.l.b16 %v2895
    %v3156 = vunpack.c.l.b16 %v2896
    %v3157 = vunpack.c.l.b16 %v2897
    %v3158 = vunpack.c.l.b16 %v2898
    %v3159 = vunpack.c.l.b16 %v2899
    %v3160 = vunpack.c.l.b16 %v2900
    %v3161 = vunpack.c.l.b16 %v2901
    %v3162 = vunpack.c.l.b16 %v2902
    %v3163 = vunpack.c.l.b16 %v2903
    %v3164 = vunpack.c.l.b16 %v2904
    %v3165 = vunpack.c.l.b16 %v2905
    %v3166 = vunpack.c.l.b16 %v2906
    %v3167 = vunpack.c.l.b16 %v2907
    %v3168 = vunpack.c.l.b16 %v2908
    %v3169 = vunpack.c.l.b16 %v2909
    %v3170 = vunpack.c.l.b16 %v2910
    %v3171 = vunpack.c.l.b16 %v2911
    %v3172 = vunpack.c.l.b16 %v2912
    %v3173 = vunpack.c.l.b16 %v2913
    %v3174 = vunpack.c.l.b16 %v2914
    %v3175 = vunpack.c.l.b16 %v2915
    %v3176 = vunpack.c.l.b16 %v2916
    %v3177 = vunpack.c.l.b16 %v2917
    %v3178 = vunpack.c.l.b16 %v2918
    %v3179 = vunpack.c.l.b16 %v2919
    %v3180 = vunpack.c.l.b16 %v2920
    %v3181 = vunpack.c.l.b16 %v2921
    %v3182 = vunpack.c.l.b16 %v2922
    %v3183 = vunpack.c.l.b16 %v2923
    %v3184 = vunpack.c.l.b16 %v2924
    %v3185 = vunpack.c.l.b16 %v2925
    %v3186 = vunpack.c.l.b16 %v2926
    %v3187 = vunpack.c.l.b16 %v2927
    %v3188 = vunpack.c.l.b16 %v2928
    %v3189 = vunpack.c.l.b16 %v2929
    %v3190 = vunpack.c.l.b16 %v2930
    %v3191 = vunpack.c.l.b16 %v2931
    %v3192 = vunpack.c.l.b16 %v2932
    %v3193 = vunpack.c.l.b16 %v2933
    %v3194 = vunpack.c.l.b16 %v2934
    %v3195 = vunpack.c.l.b16 %v2935
    %v3196 = vunpack.c.l.b16 %v2936
    %v3197 = vunpack.c.l.b16 %v2937
    %v3198 = vunpack.c.l.b16 %v2938
    %v3199 = vunpack.c.l.b16 %v2939
    %v3200 = vunpack.c.l.b16 %v2940
    %v3201 = vunpack.c.l.b16 %v2941
    %v3202 = vunpack.c.l.b16 %v2942
    %v3203 = vunpack.c.l.b16 %v2943
    %v3204 = vunpack.c.l.b16 %v2944
    %v3205 = vunpack.c.l.b16 %v2945
    %v3206 = vunpack.c.l.b16 %v2946
    %v3207 = vunpack.c.l.b16 %v2947
    %v3208 = vunpack.c.l.b16 %v2948
    %v3209 = vunpack.c.l.b16 %v2949
    %v3210 = vunpack.c.l.b16 %v2950
    %v3211 = vunpack.c.l.b16 %v2951
    %v3212 = vunpack.c.l.b16 %v2952
    %v3213 = vunpack.c.l.b16 %v2953
    %v3214 = vunpack.c.l.b16 %v2954
    %v3215 = vunpack.c.l.b16 %v2955
    %v3216 = vunpack.c.l.b16 %v2956
    %v3217 = vunpack.c.l.b16 %v2957
    %v3218 = vunpack.c.l.b16 %v2958
    %v3219 = vunpack.c.l.b16 %v2959
    %v3220 = vunpack.c.l.b16 %v2960
    %v3221 = vunpack.c.l.b16 %v2961
    %v3222 = vunpack.c.l.b16 %v2962
    %v3223 = vunpack.c.l.b16 %v2963
    %v3224 = vunpack.c.l.b16 %v2964
    %v3225 = vunpack.c.l.b16 %v2965
    %v3226 = vpack.c.b16 %v3099, %v3098
    %v3227 = vpack.c.b16 %v3101, %v3100
    %v3228 = vpack.c.b16 %v3103, %v3102
    %v3229 = vpack.c.b16 %v3105, %v3104
    %v3230 = vpack.c.b16 %v3107, %v3106
    %v3231 = vpack.c.b16 %v3109, %v3108
    %v3232 = vpack.c.b16 %v3111, %v3110
    %v3233 = vpack.c.b16 %v3113, %v3112
    %v3234 = vpack.c.b16 %v3115, %v3114
    %v3235 = vpack.c.b16 %v3117, %v3116
    %v3236 = vpack.c.b16 %v3119, %v3118
    %v3237 = vpack.c.b16 %v3121, %v3120
    %v3238 = vpack.c.b16 %v3123, %v3122
    %v3239 = vpack.c.b16 %v3125, %v3124
    %v3240 = vpack.c.b16 %v3127, %v3126
    %v3241 = vpack.c.b16 %v3129, %v3128
    %v3242 = vpack.c.b16 %v3131, %v3130
    %v3243 = vpack.c.b16 %v3133, %v3132
    %v3244 = vpack.c.b16 %v3135, %v3134
    %v3245 = vpack.c.b16 %v3137, %v3136
    %v3246 = vpack.c.b16 %v3139, %v3138
    %v3247 = vpack.c.b16 %v3141, %v3140
    %v3248 = vpack.c.b16 %v3143, %v3142
    %v3249 = vpack.c.b16 %v3145, %v3144
    %v3250 = vpack.c.b16 %v3147, %v3146
    %v3251 = vpack.c.b16 %v3149, %v3148
    %v3252 = vpack.c.b16 %v3151, %v3150
    %v3253 = vpack.c.b16 %v3153, %v3152
    %v3254 = vpack.c.b16 %v3155, %v3154
    %v3255 = vpack.c.b16 %v3157, %v3156
    %v3256 = vpack.c.b16 %v3159, %v3158
    %v3257 = vpack.c.b16 %v3161, %v3160
    %v3258 = vpack.c.b16 %v3163, %v3162
    %v3259 = vpack.c.b16 %v3165, %v3164
    %v3260 = vpack.c.b16 %v3167, %v3166
    %v3261 = vpack.c.b16 %v3169, %v3168
    %v3262 = vpack.c.b16 %v3171, %v3170
    %v3263 = vpack.c.b16 %v3173, %v3172
    %v3264 = vpack.c.b16 %v3175, %v3174
    %v3265 = vpack.c.b16 %v3177, %v3176
    %v3266 = vpack.c.b16 %v3179, %v3178
    %v3267 = vpack.c.b16 %v3181, %v3180
    %v3268 = vpack.c.b16 %v3183, %v3182
    %v3269 = vpack.c.b16 %v3185, %v3184
    %v3270 = vpack.c.b16 %v3187, %v3186
    %v3271 = vpack.c.b16 %v3189, %v3188
    %v3272 = vpack.c.b16 %v3191, %v3190
    %v3273 = vpack.c.b16 %v3193, %v3192
    %v3274 = vpack.c.b16 %v3195, %v3194
    %v3275 = vpack.c.b16 %v3197, %v3196
    %v3276 = vpack.c.b16 %v3199, %v3198
    %v3277 = vpack.c.b16 %v3201, %v3200
    %v3278 = vpack.c.b16 %v3203, %v3202
    %v3279 = vpack.c.b16 %v3205, %v3204
    %v3280 = vpack.c.b16 %v3207, %v3206
    %v3281 = vpack.c.b16 %v3209, %v3208
    %v3282 = vpack.c.b16 %v3211, %v3210
    %v3283 = vpack.c.b16 %v3213, %v3212
    %v3284 = vpack.c.b16 %v3215, %v3214
    %v3285 = vpack.c.b16 %v3217, %v3216
    %v3286 = vpack.c.b16 %v3219, %v3218
    %v3287 = vpack.c.b16 %v3221, %v3220
    %v3288 = vpack.c.b16 %v3223, %v3222
    %v3289 = vpack.c.b16 %v3225, %v3224
    %3354 = vmatpush.bf16.msra.mxu0 %v3233
    %3355 = vmatpush.bf16.msra.mxu0 %v3232
    %3356 = vmatpush.bf16.msra.mxu0 %v3231
    %3357 = vmatpush.bf16.msra.mxu0 %v3230
    %3358 = vmatpush.bf16.msra.mxu0 %v3229
    %3359 = vmatpush.bf16.msra.mxu0 %v3228
    %3360 = vmatpush.bf16.msra.mxu0 %v3227
    %3361 = vmatpush.bf16.msra.mxu0 %v3226
    %3362 = vmatmul.bf16.gmra.mxu0 %v2806
    %v3363 = vpop.f32.mrf.mxu0
    %v3364 = vadd.f32 %v2968, %v3363
    %v3365 = vpop.f32.mrf.mxu0
    %v3366 = vadd.f32 %v2968, %v3365
    %3367 = vmatmul.bf16.gmra.mxu0 %v2814
    %v3368 = vpop.f32.mrf.mxu0
    %v3369 = vadd.f32 %v2968, %v3368
    %v3370 = vpop.f32.mrf.mxu0
    %v3371 = vadd.f32 %v2968, %v3370
    %3372 = vmatmul.bf16.gmra.mxu0 %v2822
    %v3373 = vpop.f32.mrf.mxu0
    %v3374 = vadd.f32 %v2968, %v3373
    %v3375 = vpop.f32.mrf.mxu0
    %v3376 = vadd.f32 %v2968, %v3375
    %3377 = vmatmul.bf16.gmra.mxu0 %v2830
    %v3378 = vpop.f32.mrf.mxu0
    %v3379 = vadd.f32 %v2968, %v3378
    %v3380 = vpop.f32.mrf.mxu0
    %v3381 = vadd.f32 %v2968, %v3380
    %3382 = vdwg.mxu0
    %3383 = vmatpush.bf16.msra.mxu0 %v3241
    %3384 = vmatpush.bf16.msra.mxu0 %v3240
    %3385 = vmatpush.bf16.msra.mxu0 %v3239
    %3386 = vmatpush.bf16.msra.mxu0 %v3238
    %3387 = vmatpush.bf16.msra.mxu0 %v3237
    %3388 = vmatpush.bf16.msra.mxu0 %v3236
    %3389 = vmatpush.bf16.msra.mxu0 %v3235
    %3390 = vmatpush.bf16.msra.mxu0 %v3234
    %3391 = vmatmul.bf16.gmra.mxu0 %v2807
    %v3392 = vpop.f32.mrf.mxu0
    %v3393 = vadd.f32 %v3364, %v3392
    %v3394 = vpop.f32.mrf.mxu0
    %v3395 = vadd.f32 %v3366, %v3394
    %3396 = vmatmul.bf16.gmra.mxu0 %v2815
    %v3397 = vpop.f32.mrf.mxu0
    %v3398 = vadd.f32 %v3369, %v3397
    %v3399 = vpop.f32.mrf.mxu0
    %v3400 = vadd.f32 %v3371, %v3399
    %3401 = vmatmul.bf16.gmra.mxu0 %v2823
    %v3402 = vpop.f32.mrf.mxu0
    %v3403 = vadd.f32 %v3374, %v3402
    %v3404 = vpop.f32.mrf.mxu0
    %v3405 = vadd.f32 %v3376, %v3404
    %3406 = vmatmul.bf16.gmra.mxu0 %v2831
    %v3407 = vpop.f32.mrf.mxu0
    %v3408 = vadd.f32 %v3379, %v3407
    %v3409 = vpop.f32.mrf.mxu0
    %v3410 = vadd.f32 %v3381, %v3409
    %3411 = vdwg.mxu0
    %3412 = vmatpush.bf16.msra.mxu0 %v3249
    %3413 = vmatpush.bf16.msra.mxu0 %v3248
    %3414 = vmatpush.bf16.msra.mxu0 %v3247
    %3415 = vmatpush.bf16.msra.mxu0 %v3246
    %3416 = vmatpush.bf16.msra.mxu0 %v3245
    %3417 = vmatpush.bf16.msra.mxu0 %v3244
    %3418 = vmatpush.bf16.msra.mxu0 %v3243
    %3419 = vmatpush.bf16.msra.mxu0 %v3242
    %3420 = vmatmul.bf16.gmra.mxu0 %v2808
    %v3421 = vpop.f32.mrf.mxu0
    %v3422 = vadd.f32 %v3393, %v3421
    %v3423 = vpop.f32.mrf.mxu0
    %v3424 = vadd.f32 %v3395, %v3423
    %3425 = vmatmul.bf16.gmra.mxu0 %v2816
    %v3426 = vpop.f32.mrf.mxu0
    %v3427 = vadd.f32 %v3398, %v3426
    %v3428 = vpop.f32.mrf.mxu0
    %v3429 = vadd.f32 %v3400, %v3428
    %3430 = vmatmul.bf16.gmra.mxu0 %v2824
    %v3431 = vpop.f32.mrf.mxu0
    %v3432 = vadd.f32 %v3403, %v3431
    %v3433 = vpop.f32.mrf.mxu0
    %v3434 = vadd.f32 %v3405, %v3433
    %3435 = vmatmul.bf16.gmra.mxu0 %v2832
    %v3436 = vpop.f32.mrf.mxu0
    %v3437 = vadd.f32 %v3408, %v3436
    %v3438 = vpop.f32.mrf.mxu0
    %v3439 = vadd.f32 %v3410, %v3438
    %3440 = vdwg.mxu0
    %3441 = vmatpush.bf16.msra.mxu0 %v3257
    %3442 = vmatpush.bf16.msra.mxu0 %v3256
    %3443 = vmatpush.bf16.msra.mxu0 %v3255
    %3444 = vmatpush.bf16.msra.mxu0 %v3254
    %3445 = vmatpush.bf16.msra.mxu0 %v3253
    %3446 = vmatpush.bf16.msra.mxu0 %v3252
    %3447 = vmatpush.bf16.msra.mxu0 %v3251
    %3448 = vmatpush.bf16.msra.mxu0 %v3250
    %3449 = vmatmul.bf16.gmra.mxu0 %v2809
    %v3450 = vpop.f32.mrf.mxu0
    %v3451 = vadd.f32 %v3422, %v3450
    %v3452 = vpop.f32.mrf.mxu0
    %v3453 = vadd.f32 %v3424, %v3452
    %3454 = vmatmul.bf16.gmra.mxu0 %v2817
    %v3455 = vpop.f32.mrf.mxu0
    %v3456 = vadd.f32 %v3427, %v3455
    %v3457 = vpop.f32.mrf.mxu0
    %v3458 = vadd.f32 %v3429, %v3457
    %3459 = vmatmul.bf16.gmra.mxu0 %v2825
    %v3460 = vpop.f32.mrf.mxu0
    %v3461 = vadd.f32 %v3432, %v3460
    %v3462 = vpop.f32.mrf.mxu0
    %v3463 = vadd.f32 %v3434, %v3462
    %3464 = vmatmul.bf16.gmra.mxu0 %v2833
    %v3465 = vpop.f32.mrf.mxu0
    %v3466 = vadd.f32 %v3437, %v3465
    %v3467 = vpop.f32.mrf.mxu0
    %v3468 = vadd.f32 %v3439, %v3467
    %3469 = vdwg.mxu0
    %3470 = vmatpush.bf16.msra.mxu0 %v3265
    %3471 = vmatpush.bf16.msra.mxu0 %v3264
    %3472 = vmatpush.bf16.msra.mxu0 %v3263
    %3473 = vmatpush.bf16.msra.mxu0 %v3262
    %3474 = vmatpush.bf16.msra.mxu0 %v3261
    %3475 = vmatpush.bf16.msra.mxu0 %v3260
    %3476 = vmatpush.bf16.msra.mxu0 %v3259
    %3477 = vmatpush.bf16.msra.mxu0 %v3258
    %3478 = vmatmul.bf16.gmra.mxu0 %v2810
    %v3479 = vpop.f32.mrf.mxu0
    %v3480 = vadd.f32 %v3451, %v3479
    %v3481 = vpop.f32.mrf.mxu0
    %v3482 = vadd.f32 %v3453, %v3481
    %3483 = vmatmul.bf16.gmra.mxu0 %v2818
    %v3484 = vpop.f32.mrf.mxu0
    %v3485 = vadd.f32 %v3456, %v3484
    %v3486 = vpop.f32.mrf.mxu0
    %v3487 = vadd.f32 %v3458, %v3486
    %3488 = vmatmul.bf16.gmra.mxu0 %v2826
    %v3489 = vpop.f32.mrf.mxu0
    %v3490 = vadd.f32 %v3461, %v3489
    %v3491 = vpop.f32.mrf.mxu0
    %v3492 = vadd.f32 %v3463, %v3491
    %3493 = vmatmul.bf16.gmra.mxu0 %v2834
    %v3494 = vpop.f32.mrf.mxu0
    %v3495 = vadd.f32 %v3466, %v3494
    %v3496 = vpop.f32.mrf.mxu0
    %v3497 = vadd.f32 %v3468, %v3496
    %3498 = vdwg.mxu0
    %3499 = vmatpush.bf16.msra.mxu0 %v3273
    %3500 = vmatpush.bf16.msra.mxu0 %v3272
    %3501 = vmatpush.bf16.msra.mxu0 %v3271
    %3502 = vmatpush.bf16.msra.mxu0 %v3270
    %3503 = vmatpush.bf16.msra.mxu0 %v3269
    %3504 = vmatpush.bf16.msra.mxu0 %v3268
    %3505 = vmatpush.bf16.msra.mxu0 %v3267
    %3506 = vmatpush.bf16.msra.mxu0 %v3266
    %3507 = vmatmul.bf16.gmra.mxu0 %v2811
    %v3508 = vpop.f32.mrf.mxu0
    %v3509 = vadd.f32 %v3480, %v3508
    %v3510 = vpop.f32.mrf.mxu0
    %v3511 = vadd.f32 %v3482, %v3510
    %3512 = vmatmul.bf16.gmra.mxu0 %v2819
    %v3513 = vpop.f32.mrf.mxu0
    %v3514 = vadd.f32 %v3485, %v3513
    %v3515 = vpop.f32.mrf.mxu0
    %v3516 = vadd.f32 %v3487, %v3515
    %3517 = vmatmul.bf16.gmra.mxu0 %v2827
    %v3518 = vpop.f32.mrf.mxu0
    %v3519 = vadd.f32 %v3490, %v3518
    %v3520 = vpop.f32.mrf.mxu0
    %v3521 = vadd.f32 %v3492, %v3520
    %3522 = vmatmul.bf16.gmra.mxu0 %v2835
    %v3523 = vpop.f32.mrf.mxu0
    %v3524 = vadd.f32 %v3495, %v3523
    %v3525 = vpop.f32.mrf.mxu0
    %v3526 = vadd.f32 %v3497, %v3525
    %3527 = vdwg.mxu0
    %3528 = vmatpush.bf16.msra.mxu0 %v3281
    %3529 = vmatpush.bf16.msra.mxu0 %v3280
    %3530 = vmatpush.bf16.msra.mxu0 %v3279
    %3531 = vmatpush.bf16.msra.mxu0 %v3278
    %3532 = vmatpush.bf16.msra.mxu0 %v3277
    %3533 = vmatpush.bf16.msra.mxu0 %v3276
    %3534 = vmatpush.bf16.msra.mxu0 %v3275
    %3535 = vmatpush.bf16.msra.mxu0 %v3274
    %3536 = vmatmul.bf16.gmra.mxu0 %v2812
    %v3537 = vpop.f32.mrf.mxu0
    %v3538 = vadd.f32 %v3509, %v3537
    %v3539 = vpop.f32.mrf.mxu0
    %v3540 = vadd.f32 %v3511, %v3539
    %3541 = vmatmul.bf16.gmra.mxu0 %v2820
    %v3542 = vpop.f32.mrf.mxu0
    %v3543 = vadd.f32 %v3514, %v3542
    %v3544 = vpop.f32.mrf.mxu0
    %v3545 = vadd.f32 %v3516, %v3544
    %3546 = vmatmul.bf16.gmra.mxu0 %v2828
    %v3547 = vpop.f32.mrf.mxu0
    %v3548 = vadd.f32 %v3519, %v3547
    %v3549 = vpop.f32.mrf.mxu0
    %v3550 = vadd.f32 %v3521, %v3549
    %3551 = vmatmul.bf16.gmra.mxu0 %v2836
    %v3552 = vpop.f32.mrf.mxu0
    %v3553 = vadd.f32 %v3524, %v3552
    %v3554 = vpop.f32.mrf.mxu0
    %v3555 = vadd.f32 %v3526, %v3554
    %3556 = vdwg.mxu0
    %3557 = vmatpush.bf16.msra.mxu0 %v3289
    %3558 = vmatpush.bf16.msra.mxu0 %v3288
    %3559 = vmatpush.bf16.msra.mxu0 %v3287
    %3560 = vmatpush.bf16.msra.mxu0 %v3286
    %3561 = vmatpush.bf16.msra.mxu0 %v3285
    %3562 = vmatpush.bf16.msra.mxu0 %v3284
    %3563 = vmatpush.bf16.msra.mxu0 %v3283
    %3564 = vmatpush.bf16.msra.mxu0 %v3282
    %3565 = vmatmul.bf16.gmra.mxu0 %v2813
    %v3566 = vpop.f32.mrf.mxu0
    %v3567 = vadd.f32 %v3538, %v3566
    %v3568 = vpop.f32.mrf.mxu0
    %v3569 = vadd.f32 %v3540, %v3568
    %3570 = vmatmul.bf16.gmra.mxu0 %v2821
    %v3571 = vpop.f32.mrf.mxu0
    %v3572 = vadd.f32 %v3543, %v3571
    %v3573 = vpop.f32.mrf.mxu0
    %v3574 = vadd.f32 %v3545, %v3573
    %3575 = vmatmul.bf16.gmra.mxu0 %v2829
    %v3576 = vpop.f32.mrf.mxu0
    %v3577 = vadd.f32 %v3548, %v3576
    %v3578 = vpop.f32.mrf.mxu0
    %v3579 = vadd.f32 %v3550, %v3578
    %3580 = vmatmul.bf16.gmra.mxu0 %v2837
    %v3581 = vpop.f32.mrf.mxu0
    %v3582 = vadd.f32 %v3553, %v3581
    %v3583 = vpop.f32.mrf.mxu0
    %v3584 = vadd.f32 %v3555, %v3583
    %3585 = vdwg.mxu0
    %v3586 = vadd.f32 %v1904, %v3567
    %v3587 = vadd.f32 %v1905, %v3569
    %v3588 = vadd.f32 %v1906, %v3572
    %v3589 = vadd.f32 %v1907, %v3574
    %v3590 = vadd.f32 %v1908, %v3577
    %v3591 = vadd.f32 %v1909, %v3579
    %v3592 = vadd.f32 %v1910, %v3582
    %v3593 = vadd.f32 %v1911, %v3584
    %3594 = vst [vmem:[#allocation10] sm:$0xff] %v3586
    %3595 = vst [vmem:[#allocation10 + $0x8] sm:$0xff] %v3587
    %3596 = vst [vmem:[#allocation10 + $0x10] sm:$0xff] %v3588
    %3597 = vst [vmem:[#allocation10 + $0x18] sm:$0xff] %v3589
    %3598 = vst [vmem:[#allocation10 + $0x20] sm:$0xff] %v3590
    %3599 = vst [vmem:[#allocation10 + $0x28] sm:$0xff] %v3591
    %3600 = vst [vmem:[#allocation10 + $0x30] sm:$0xff] %v3592
    %3601 = vst [vmem:[#allocation10 + $0x38] sm:$0xff] %v3593
    // Predicated region
    $region62: #{blocks_forward.1} parent=1 // pred_check
      _
    $region63: #{blocks_forward.1} parent=1 // pred_check_branch
      %3603 = sbr.rel (0) target = $region65
    $region64: #{blocks_forward.1} parent=1 // pred_region
      %3605 = vsyncadd [#allocation4], 0
      %s3606 = sshll.u32 [#allocation10], 4
      %s3607 = int_to_ptr.vmem [resolvable:$true] %s3606
      %s3608 = sshll.u32 %s11, 4
      %s3609 = int_to_ptr.hbm [resolvable:$true] %s3608
      %3614 = dma.vmem_to_hbm [thread:$0]  %s3607, 1024, %s3609, [#allocation4], 128, 128, 8
    $region65: #{blocks_forward.1} parent=1 // pred_fallthru
      _
    // Predicated region
    $region66: #{blocks_forward.1} parent=1 // pred_check
      _
    $region67: #{blocks_forward.1} parent=1 // pred_check_branch
      %3616 = sbr.rel (0) target = $region69
    $region68: #{blocks_forward.1} parent=1 // pred_region
      %3618 = dma.done [#allocation4], 1024
    $region69: #{blocks_forward.1} parent=1 // pred_fallthru
      _
    %3619 = vsyncpa [#allocation3], 1
    %3620 = vsyncpa [#allocation6], 1
    %3621 = vsyncpa [#allocation9], 1
    %3622 = vsyncpa [#allocation4], 1

</llo_original>
